<compile_context>
chip_gen: v6e
topology: v6e:2x2x1
jax: 0.10.0
libtpu: 0.0.40
codegen_flags: <defaults>
</compile_context>

<pallas_src>
import math

import jax
import jax.numpy as jnp
from jax.experimental import pallas as pl
from jax.experimental.pallas import tpu as pltpu


def _round_up(x, m):
    return (x + m - 1) // m * m


# -----------------------------------------------------------------------------
# Fused kernel: all layers + FC head, time loop in-kernel.
# -----------------------------------------------------------------------------
def _make_fused_kernel(num_layers, seq_len, hidden_size):
    H = hidden_size

    def kernel(*refs):
        # refs = x, (w_ih, w_hh, bias) * L, w_fc, b_fc, preds, h_n, c_n
        x_ref = refs[0]
        layer_refs = [tuple(refs[1 + 3 * l: 4 + 3 * l]) for l in range(num_layers)]
        w_fc_ref = refs[1 + 3 * num_layers]
        b_fc_ref = refs[2 + 3 * num_layers]
        preds_ref, hn_ref, cn_ref = refs[3 + 3 * num_layers:]

        B_pad = x_ref.shape[1]
        O_pad = w_fc_ref.shape[1]

        # Hoist all weight loads and bias broadcasts out of the time loop.
        weights = [
            (w_ih[...], w_hh[...], jnp.broadcast_to(b[...], (B_pad, 4 * H)))
            for (w_ih, w_hh, b) in layer_refs
        ]
        w_fc = w_fc_ref[...]
        b_fc = jnp.broadcast_to(b_fc_ref[...], (B_pad, O_pad))

        zeros = jnp.zeros((B_pad, H), jnp.float32)
        init_h = tuple(zeros for _ in range(num_layers))
        init_c = tuple(zeros for _ in range(num_layers))

        def step(t, carry):
            hs, cs = carry
            inp = x_ref[t]                           # (B_pad, In)
            new_hs, new_cs = [], []
            for l in range(num_layers):              # static, unrolled
                w_ih, w_hh, bias = weights[l]
                # One lane-dense fused gate matmul -> (B_pad, 4H).
                gates = (jnp.dot(inp, w_ih, preferred_element_type=jnp.float32)
                         + jnp.dot(hs[l], w_hh, preferred_element_type=jnp.float32)
                         + bias)
                i_g = jax.nn.sigmoid(gates[:, 0 * H:1 * H])
                f_g = jax.nn.sigmoid(gates[:, 1 * H:2 * H])
                g_g = jnp.tanh(gates[:, 2 * H:3 * H])
                o_g = jax.nn.sigmoid(gates[:, 3 * H:4 * H])
                c_new = f_g * cs[l] + i_g * g_g
                h_new = o_g * jnp.tanh(c_new)
                new_hs.append(h_new)
                new_cs.append(c_new)
                inp = h_new
            # FC head fused into the per-timestep epilogue; lane-dense store.
            preds_ref[t] = (jnp.dot(inp, w_fc, preferred_element_type=jnp.float32)
                            + b_fc)
            return tuple(new_hs), tuple(new_cs)

        if seq_len <= 16:
            # Fully unrolled at trace time (gives the LLO scheduler full view).
            carry = (init_h, init_c)
            for t in range(seq_len):
                carry = step(t, carry)
            hs, cs = carry
        else:
            hs, cs = jax.lax.fori_loop(0, seq_len, step, (init_h, init_c),
                                       unroll=8)

        # Final states written once at the end.
        for l in range(num_layers):
            hn_ref[l] = hs[l]
            cn_ref[l] = cs[l]

    return kernel


# -----------------------------------------------------------------------------
# Wrapper (matches LSTMDragPredictor.forward): returns (preds, (h_n, c_n))
# -----------------------------------------------------------------------------
@jax.jit
def lstm_drag_predictor(x, params):
    S, B, _ = x.shape
    lstm_params = params["lstm"]
    num_layers = len(lstm_params)
    H = lstm_params[0][1].shape[0]            # w_hh: (H, 4H)
    w_fc, b_fc = params["fc"]
    O = w_fc.shape[1]

    B_pad = _round_up(max(B, 8), 8)           # 8-sublane tile
    O_pad = _round_up(max(O, 128), 128)       # lane-dense output slab

    x_pad = jnp.pad(x.astype(jnp.float32), ((0, 0), (0, B_pad - B), (0, 0)))
    w_fc_pad = jnp.pad(w_fc, ((0, 0), (0, O_pad - O)))
    b_fc_pad = jnp.pad(b_fc, ((0, 0), (0, O_pad - O)))

    inputs = [x_pad]
    for (w_ih, w_hh, bias) in lstm_params:
        inputs += [w_ih, w_hh, bias]
    inputs += [w_fc_pad, b_fc_pad]

    kernel = _make_fused_kernel(num_layers, S, H)
    preds_p, hn_p, cn_p = pl.pallas_call(
        kernel,
        out_shape=(
            jax.ShapeDtypeStruct((S, B_pad, O_pad), jnp.float32),
            jax.ShapeDtypeStruct((num_layers, B_pad, H), jnp.float32),
            jax.ShapeDtypeStruct((num_layers, B_pad, H), jnp.float32),
        ),
        in_specs=[pl.BlockSpec(memory_space=pltpu.MemorySpace.VMEM)
                  for _ in inputs],
        out_specs=(pl.BlockSpec(memory_space=pltpu.MemorySpace.VMEM),
                   pl.BlockSpec(memory_space=pltpu.MemorySpace.VMEM),
                   pl.BlockSpec(memory_space=pltpu.MemorySpace.VMEM)),
    )(*inputs)

    preds = preds_p[:, :B, :O]
    h_n = hn_p[:, :B, :]
    c_n = cn_p[:, :B, :]
    return preds, (h_n, c_n)


# -----------------------------------------------------------------------------
# Parameter init (PyTorch-style uniform(-1/sqrt(H), 1/sqrt(H)), fused layout:
#   w_ih (In, 4H), w_hh (H, 4H), bias (1, 4H) = b_ih + b_hh, gate order i,f,g,o)
# -----------------------------------------------------------------------------
def init_params(key, input_size, hidden_size, num_layers, output_size):
    k = 1.0 / math.sqrt(hidden_size)
    params = {"lstm": [], "fc": None}
    for layer in range(num_layers):
        in_sz = input_size if layer == 0 else hidden_size
        key, k1, k2, k3, k4 = jax.random.split(key, 5)
        w_ih = jax.random.uniform(k1, (in_sz, 4 * hidden_size), jnp.float32, -k, k)
        w_hh = jax.random.uniform(k2, (hidden_size, 4 * hidden_size), jnp.float32, -k, k)
        b_ih = jax.random.uniform(k3, (1, 4 * hidden_size), jnp.float32, -k, k)
        b_hh = jax.random.uniform(k4, (1, 4 * hidden_size), jnp.float32, -k, k)
        params["lstm"].append((w_ih, w_hh, b_ih + b_hh))
    key, k5, k6 = jax.random.split(key, 3)
    w_fc = jax.random.uniform(k5, (hidden_size, output_size), jnp.float32, -k, k)
    b_fc = jax.random.uniform(k6, (1, output_size), jnp.float32, -k, k)
    params["fc"] = (w_fc, b_fc)
    return params


# -----------------------------------------------------------------------------
# Pure-JAX reference for a sanity check
# -----------------------------------------------------------------------------
def reference_forward(x, params):
    layer_in = x
    h_ns, c_ns = [], []
    for (w_ih, w_hh, bias) in params["lstm"]:
        S, B, _ = layer_in.shape
        H = w_hh.shape[0]
        h = jnp.zeros((B, H), jnp.float32)
        c = jnp.zeros((B, H), jnp.float32)
        ys = []
        for t in range(S):
            gates = layer_in[t] @ w_ih + h @ w_hh + bias[0]
            i_g = jax.nn.sigmoid(gates[:, 0 * H:1 * H])
            f_g = jax.nn.sigmoid(gates[:, 1 * H:2 * H])
            g_g = jnp.tanh(gates[:, 2 * H:3 * H])
            o_g = jax.nn.sigmoid(gates[:, 3 * H:4 * H])
            c = f_g * c + i_g * g_g
            h = o_g * jnp.tanh(c)
            ys.append(h)
        layer_in = jnp.stack(ys, axis=0)
        h_ns.append(h)
        c_ns.append(c)
    w_fc, b_fc = params["fc"]
    preds = layer_in @ w_fc + b_fc[0]
    return preds, (jnp.stack(h_ns), jnp.stack(c_ns))


if __name__ == "__main__":
    # Small shapes: seq=8, batch=2, input_size=32, hidden=32, layers=2, output=1
    seq_len, batch, input_size = 8, 2, 32
    hidden_size, num_layers, output_size = 32, 2, 1

    key = jax.random.PRNGKey(0)
    key, kx, kp = jax.random.split(key, 3)
    x = jax.random.normal(kx, (seq_len, batch, input_size), jnp.float32)
    params = init_params(kp, input_size, hidden_size, num_layers, output_size)

    preds, (h_n, c_n) = lstm_drag_predictor(x, params)
    jax.block_until_ready(preds)
    jax.block_until_ready(h_n)
    jax.block_until_ready(c_n)

    assert preds.shape == (seq_len, batch, output_size)
    assert h_n.shape == (num_layers, batch, hidden_size)
    assert c_n.shape == (num_layers, batch, hidden_size)

    # Numerical check against a pure-JAX reference (MXU f32 rounding tolerance).
    ref_preds, (ref_h, ref_c) = reference_forward(x, params)
    assert jnp.allclose(preds, ref_preds, atol=1e-2, rtol=1e-2)
    assert jnp.allclose(h_n, ref_h, atol=1e-2, rtol=1e-2)
    assert jnp.allclose(c_n, ref_c, atol=1e-2, rtol=1e-2)

    print("KERNEL_OK")
</pallas_src>

<mosaic_0001>
module attributes {stable_mosaic.version = 11 : i64} {
  func.func @kernel(%arg0: memref<8x8x32xf32, #tpu.memory_space<vmem>>, %arg1: memref<32x128xf32, #tpu.memory_space<vmem>>, %arg2: memref<32x128xf32, #tpu.memory_space<vmem>>, %arg3: memref<1x128xf32, #tpu.memory_space<vmem>>, %arg4: memref<32x128xf32, #tpu.memory_space<vmem>>, %arg5: memref<32x128xf32, #tpu.memory_space<vmem>>, %arg6: memref<1x128xf32, #tpu.memory_space<vmem>>, %arg7: memref<32x128xf32, #tpu.memory_space<vmem>>, %arg8: memref<1x128xf32, #tpu.memory_space<vmem>>, %arg9: memref<8x8x128xf32, #tpu.memory_space<vmem>>, %arg10: memref<2x8x32xf32, #tpu.memory_space<vmem>>, %arg11: memref<2x8x32xf32, #tpu.memory_space<vmem>>) attributes {dimension_semantics = [], scalar_prefetch = 0 : i64, scratch_operands = 0 : i64, tpu.core_type = #tpu.core_type<tc>} {
    %c0 = arith.constant 0 : index
    %c0_0 = arith.constant 0 : index
    %0 = vector.load %arg1[%c0, %c0_0] : memref<32x128xf32, #tpu.memory_space<vmem>>, vector<32x128xf32>
    %c0_1 = arith.constant 0 : index
    %c0_2 = arith.constant 0 : index
    %1 = vector.load %arg2[%c0_1, %c0_2] : memref<32x128xf32, #tpu.memory_space<vmem>>, vector<32x128xf32>
    %c0_3 = arith.constant 0 : index
    %c0_4 = arith.constant 0 : index
    %2 = vector.load %arg3[%c0_3, %c0_4] : memref<1x128xf32, #tpu.memory_space<vmem>>, vector<1x128xf32>
    %3 = vector.shape_cast %2 : vector<1x128xf32> to vector<1x128xf32>
    %4 = vector.broadcast %3 : vector<1x128xf32> to vector<8x128xf32>
    %c0_5 = arith.constant 0 : index
    %c0_6 = arith.constant 0 : index
    %5 = vector.load %arg4[%c0_5, %c0_6] : memref<32x128xf32, #tpu.memory_space<vmem>>, vector<32x128xf32>
    %c0_7 = arith.constant 0 : index
    %c0_8 = arith.constant 0 : index
    %6 = vector.load %arg5[%c0_7, %c0_8] : memref<32x128xf32, #tpu.memory_space<vmem>>, vector<32x128xf32>
    %c0_9 = arith.constant 0 : index
    %c0_10 = arith.constant 0 : index
    %7 = vector.load %arg6[%c0_9, %c0_10] : memref<1x128xf32, #tpu.memory_space<vmem>>, vector<1x128xf32>
    %8 = vector.shape_cast %7 : vector<1x128xf32> to vector<1x128xf32>
    %9 = vector.broadcast %8 : vector<1x128xf32> to vector<8x128xf32>
    %c0_11 = arith.constant 0 : index
    %c0_12 = arith.constant 0 : index
    %10 = vector.load %arg7[%c0_11, %c0_12] : memref<32x128xf32, #tpu.memory_space<vmem>>, vector<32x128xf32>
    %c0_13 = arith.constant 0 : index
    %c0_14 = arith.constant 0 : index
    %11 = vector.load %arg8[%c0_13, %c0_14] : memref<1x128xf32, #tpu.memory_space<vmem>>, vector<1x128xf32>
    %12 = vector.shape_cast %11 : vector<1x128xf32> to vector<1x128xf32>
    %13 = vector.broadcast %12 : vector<1x128xf32> to vector<8x128xf32>
    %cst = arith.constant 0.000000e+00 : f32
    %14 = vector.broadcast %cst : f32 to vector<8x32xf32>
    %c0_15 = arith.constant 0 : index
    %c0_16 = arith.constant 0 : index
    %c0_17 = arith.constant 0 : index
    %15 = vector.load %arg0[%c0_15, %c0_16, %c0_17] : memref<8x8x32xf32, #tpu.memory_space<vmem>>, vector<1x8x32xf32>
    %16 = vector.shape_cast %15 : vector<1x8x32xf32> to vector<8x32xf32>
    %cst_18 = arith.constant dense<0.000000e+00> : vector<8x128xf32>
    %17 = tpu.matmul %16, %0, %cst_18 {dimension_numbers = #tpu.dot_dimension_numbers<[1], [0], [0], [1], [0, 0, 1, 1], [], []>} : vector<8x32xf32>, vector<32x128xf32>, vector<8x128xf32> -> vector<8x128xf32>
    %cst_19 = arith.constant dense<0.000000e+00> : vector<8x128xf32>
    %18 = tpu.matmul %14, %1, %cst_19 {dimension_numbers = #tpu.dot_dimension_numbers<[1], [0], [0], [1], [0, 0, 1, 1], [], []>} : vector<8x32xf32>, vector<32x128xf32>, vector<8x128xf32> -> vector<8x128xf32>
    %19 = arith.addf %17, %18 : vector<8x128xf32>
    %20 = arith.addf %19, %4 : vector<8x128xf32>
    %21 = vector.extract_strided_slice %20 {offsets = [0, 0], sizes = [8, 32], strides = [1, 1]} : vector<8x128xf32> to vector<8x32xf32>
    %22 = arith.negf %21 : vector<8x32xf32>
    %23 = math.exp %22 : vector<8x32xf32>
    %cst_20 = arith.constant 1.000000e+00 : f32
    %24 = vector.broadcast %cst_20 : f32 to vector<8x32xf32>
    %25 = arith.addf %24, %23 : vector<8x32xf32>
    %26 = arith.divf %24, %25 : vector<8x32xf32>
    %27 = vector.extract_strided_slice %20 {offsets = [0, 32], sizes = [8, 32], strides = [1, 1]} : vector<8x128xf32> to vector<8x32xf32>
    %28 = arith.negf %27 : vector<8x32xf32>
    %29 = math.exp %28 : vector<8x32xf32>
    %cst_21 = arith.constant 1.000000e+00 : f32
    %30 = vector.broadcast %cst_21 : f32 to vector<8x32xf32>
    %31 = arith.addf %30, %29 : vector<8x32xf32>
    %32 = arith.divf %30, %31 : vector<8x32xf32>
    %33 = vector.extract_strided_slice %20 {offsets = [0, 64], sizes = [8, 32], strides = [1, 1]} : vector<8x128xf32> to vector<8x32xf32>
    %34 = math.tanh %33 : vector<8x32xf32>
    %35 = vector.extract_strided_slice %20 {offsets = [0, 96], sizes = [8, 32], strides = [1, 1]} : vector<8x128xf32> to vector<8x32xf32>
    %36 = arith.negf %35 : vector<8x32xf32>
    %37 = math.exp %36 : vector<8x32xf32>
    %cst_22 = arith.constant 1.000000e+00 : f32
    %38 = vector.broadcast %cst_22 : f32 to vector<8x32xf32>
    %39 = arith.addf %38, %37 : vector<8x32xf32>
    %40 = arith.divf %38, %39 : vector<8x32xf32>
    %41 = arith.mulf %32, %14 : vector<8x32xf32>
    %42 = arith.mulf %26, %34 : vector<8x32xf32>
    %43 = arith.addf %41, %42 : vector<8x32xf32>
    %44 = math.tanh %43 : vector<8x32xf32>
    %45 = arith.mulf %40, %44 : vector<8x32xf32>
    %cst_23 = arith.constant dense<0.000000e+00> : vector<8x128xf32>
    %46 = tpu.matmul %45, %5, %cst_23 {dimension_numbers = #tpu.dot_dimension_numbers<[1], [0], [0], [1], [0, 0, 1, 1], [], []>} : vector<8x32xf32>, vector<32x128xf32>, vector<8x128xf32> -> vector<8x128xf32>
    %cst_24 = arith.constant dense<0.000000e+00> : vector<8x128xf32>
    %47 = tpu.matmul %14, %6, %cst_24 {dimension_numbers = #tpu.dot_dimension_numbers<[1], [0], [0], [1], [0, 0, 1, 1], [], []>} : vector<8x32xf32>, vector<32x128xf32>, vector<8x128xf32> -> vector<8x128xf32>
    %48 = arith.addf %46, %47 : vector<8x128xf32>
    %49 = arith.addf %48, %9 : vector<8x128xf32>
    %50 = vector.extract_strided_slice %49 {offsets = [0, 0], sizes = [8, 32], strides = [1, 1]} : vector<8x128xf32> to vector<8x32xf32>
    %51 = arith.negf %50 : vector<8x32xf32>
    %52 = math.exp %51 : vector<8x32xf32>
    %cst_25 = arith.constant 1.000000e+00 : f32
    %53 = vector.broadcast %cst_25 : f32 to vector<8x32xf32>
    %54 = arith.addf %53, %52 : vector<8x32xf32>
    %55 = arith.divf %53, %54 : vector<8x32xf32>
    %56 = vector.extract_strided_slice %49 {offsets = [0, 32], sizes = [8, 32], strides = [1, 1]} : vector<8x128xf32> to vector<8x32xf32>
    %57 = arith.negf %56 : vector<8x32xf32>
    %58 = math.exp %57 : vector<8x32xf32>
    %cst_26 = arith.constant 1.000000e+00 : f32
    %59 = vector.broadcast %cst_26 : f32 to vector<8x32xf32>
    %60 = arith.addf %59, %58 : vector<8x32xf32>
    %61 = arith.divf %59, %60 : vector<8x32xf32>
    %62 = vector.extract_strided_slice %49 {offsets = [0, 64], sizes = [8, 32], strides = [1, 1]} : vector<8x128xf32> to vector<8x32xf32>
    %63 = math.tanh %62 : vector<8x32xf32>
    %64 = vector.extract_strided_slice %49 {offsets = [0, 96], sizes = [8, 32], strides = [1, 1]} : vector<8x128xf32> to vector<8x32xf32>
    %65 = arith.negf %64 : vector<8x32xf32>
    %66 = math.exp %65 : vector<8x32xf32>
    %cst_27 = arith.constant 1.000000e+00 : f32
    %67 = vector.broadcast %cst_27 : f32 to vector<8x32xf32>
    %68 = arith.addf %67, %66 : vector<8x32xf32>
    %69 = arith.divf %67, %68 : vector<8x32xf32>
    %70 = arith.mulf %61, %14 : vector<8x32xf32>
    %71 = arith.mulf %55, %63 : vector<8x32xf32>
    %72 = arith.addf %70, %71 : vector<8x32xf32>
    %73 = math.tanh %72 : vector<8x32xf32>
    %74 = arith.mulf %69, %73 : vector<8x32xf32>
    %cst_28 = arith.constant dense<0.000000e+00> : vector<8x128xf32>
    %75 = tpu.matmul %74, %10, %cst_28 {dimension_numbers = #tpu.dot_dimension_numbers<[1], [0], [0], [1], [0, 0, 1, 1], [], []>} : vector<8x32xf32>, vector<32x128xf32>, vector<8x128xf32> -> vector<8x128xf32>
    %76 = arith.addf %75, %13 : vector<8x128xf32>
    %c0_29 = arith.constant 0 : index
    %c0_30 = arith.constant 0 : index
    %c0_31 = arith.constant 0 : index
    %77 = vector.load %arg9[%c0_29, %c0_30, %c0_31] : memref<8x8x128xf32, #tpu.memory_space<vmem>>, vector<1x8x128xf32>
    %78 = vector.shape_cast %77 : vector<1x8x128xf32> to vector<8x128xf32>
    %79 = vector.shape_cast %76 : vector<8x128xf32> to vector<1x8x128xf32>
    tpu.vector_store %arg9[%c0_29, %c0_30, %c0_31], %79 {strides = array<i32>} : memref<8x8x128xf32, #tpu.memory_space<vmem>>, vector<1x8x128xf32>,
    %c1 = arith.constant 1 : index
    %c0_32 = arith.constant 0 : index
    %c0_33 = arith.constant 0 : index
    %80 = vector.load %arg0[%c1, %c0_32, %c0_33] : memref<8x8x32xf32, #tpu.memory_space<vmem>>, vector<1x8x32xf32>
    %81 = vector.shape_cast %80 : vector<1x8x32xf32> to vector<8x32xf32>
    %cst_34 = arith.constant dense<0.000000e+00> : vector<8x128xf32>
    %82 = tpu.matmul %81, %0, %cst_34 {dimension_numbers = #tpu.dot_dimension_numbers<[1], [0], [0], [1], [0, 0, 1, 1], [], []>} : vector<8x32xf32>, vector<32x128xf32>, vector<8x128xf32> -> vector<8x128xf32>
    %cst_35 = arith.constant dense<0.000000e+00> : vector<8x128xf32>
    %83 = tpu.matmul %45, %1, %cst_35 {dimension_numbers = #tpu.dot_dimension_numbers<[1], [0], [0], [1], [0, 0, 1, 1], [], []>} : vector<8x32xf32>, vector<32x128xf32>, vector<8x128xf32> -> vector<8x128xf32>
    %84 = arith.addf %82, %83 : vector<8x128xf32>
    %85 = arith.addf %84, %4 : vector<8x128xf32>
    %86 = vector.extract_strided_slice %85 {offsets = [0, 0], sizes = [8, 32], strides = [1, 1]} : vector<8x128xf32> to vector<8x32xf32>
    %87 = arith.negf %86 : vector<8x32xf32>
    %88 = math.exp %87 : vector<8x32xf32>
    %cst_36 = arith.constant 1.000000e+00 : f32
    %89 = vector.broadcast %cst_36 : f32 to vector<8x32xf32>
    %90 = arith.addf %89, %88 : vector<8x32xf32>
    %91 = arith.divf %89, %90 : vector<8x32xf32>
    %92 = vector.extract_strided_slice %85 {offsets = [0, 32], sizes = [8, 32], strides = [1, 1]} : vector<8x128xf32> to vector<8x32xf32>
    %93 = arith.negf %92 : vector<8x32xf32>
    %94 = math.exp %93 : vector<8x32xf32>
    %cst_37 = arith.constant 1.000000e+00 : f32
    %95 = vector.broadcast %cst_37 : f32 to vector<8x32xf32>
    %96 = arith.addf %95, %94 : vector<8x32xf32>
    %97 = arith.divf %95, %96 : vector<8x32xf32>
    %98 = vector.extract_strided_slice %85 {offsets = [0, 64], sizes = [8, 32], strides = [1, 1]} : vector<8x128xf32> to vector<8x32xf32>
    %99 = math.tanh %98 : vector<8x32xf32>
    %100 = vector.extract_strided_slice %85 {offsets = [0, 96], sizes = [8, 32], strides = [1, 1]} : vector<8x128xf32> to vector<8x32xf32>
    %101 = arith.negf %100 : vector<8x32xf32>
    %102 = math.exp %101 : vector<8x32xf32>
    %cst_38 = arith.constant 1.000000e+00 : f32
    %103 = vector.broadcast %cst_38 : f32 to vector<8x32xf32>
    %104 = arith.addf %103, %102 : vector<8x32xf32>
    %105 = arith.divf %103, %104 : vector<8x32xf32>
    %106 = arith.mulf %97, %43 : vector<8x32xf32>
    %107 = arith.mulf %91, %99 : vector<8x32xf32>
    %108 = arith.addf %106, %107 : vector<8x32xf32>
    %109 = math.tanh %108 : vector<8x32xf32>
    %110 = arith.mulf %105, %109 : vector<8x32xf32>
    %cst_39 = arith.constant dense<0.000000e+00> : vector<8x128xf32>
    %111 = tpu.matmul %110, %5, %cst_39 {dimension_numbers = #tpu.dot_dimension_numbers<[1], [0], [0], [1], [0, 0, 1, 1], [], []>} : vector<8x32xf32>, vector<32x128xf32>, vector<8x128xf32> -> vector<8x128xf32>
    %cst_40 = arith.constant dense<0.000000e+00> : vector<8x128xf32>
    %112 = tpu.matmul %74, %6, %cst_40 {dimension_numbers = #tpu.dot_dimension_numbers<[1], [0], [0], [1], [0, 0, 1, 1], [], []>} : vector<8x32xf32>, vector<32x128xf32>, vector<8x128xf32> -> vector<8x128xf32>
    %113 = arith.addf %111, %112 : vector<8x128xf32>
    %114 = arith.addf %113, %9 : vector<8x128xf32>
    %115 = vector.extract_strided_slice %114 {offsets = [0, 0], sizes = [8, 32], strides = [1, 1]} : vector<8x128xf32> to vector<8x32xf32>
    %116 = arith.negf %115 : vector<8x32xf32>
    %117 = math.exp %116 : vector<8x32xf32>
    %cst_41 = arith.constant 1.000000e+00 : f32
    %118 = vector.broadcast %cst_41 : f32 to vector<8x32xf32>
    %119 = arith.addf %118, %117 : vector<8x32xf32>
    %120 = arith.divf %118, %119 : vector<8x32xf32>
    %121 = vector.extract_strided_slice %114 {offsets = [0, 32], sizes = [8, 32], strides = [1, 1]} : vector<8x128xf32> to vector<8x32xf32>
    %122 = arith.negf %121 : vector<8x32xf32>
    %123 = math.exp %122 : vector<8x32xf32>
    %cst_42 = arith.constant 1.000000e+00 : f32
    %124 = vector.broadcast %cst_42 : f32 to vector<8x32xf32>
    %125 = arith.addf %124, %123 : vector<8x32xf32>
    %126 = arith.divf %124, %125 : vector<8x32xf32>
    %127 = vector.extract_strided_slice %114 {offsets = [0, 64], sizes = [8, 32], strides = [1, 1]} : vector<8x128xf32> to vector<8x32xf32>
    %128 = math.tanh %127 : vector<8x32xf32>
    %129 = vector.extract_strided_slice %114 {offsets = [0, 96], sizes = [8, 32], strides = [1, 1]} : vector<8x128xf32> to vector<8x32xf32>
    %130 = arith.negf %129 : vector<8x32xf32>
    %131 = math.exp %130 : vector<8x32xf32>
    %cst_43 = arith.constant 1.000000e+00 : f32
    %132 = vector.broadcast %cst_43 : f32 to vector<8x32xf32>
    %133 = arith.addf %132, %131 : vector<8x32xf32>
    %134 = arith.divf %132, %133 : vector<8x32xf32>
    %135 = arith.mulf %126, %72 : vector<8x32xf32>
    %136 = arith.mulf %120, %128 : vector<8x32xf32>
    %137 = arith.addf %135, %136 : vector<8x32xf32>
    %138 = math.tanh %137 : vector<8x32xf32>
    %139 = arith.mulf %134, %138 : vector<8x32xf32>
    %cst_44 = arith.constant dense<0.000000e+00> : vector<8x128xf32>
    %140 = tpu.matmul %139, %10, %cst_44 {dimension_numbers = #tpu.dot_dimension_numbers<[1], [0], [0], [1], [0, 0, 1, 1], [], []>} : vector<8x32xf32>, vector<32x128xf32>, vector<8x128xf32> -> vector<8x128xf32>
    %141 = arith.addf %140, %13 : vector<8x128xf32>
    %c1_45 = arith.constant 1 : index
    %c0_46 = arith.constant 0 : index
    %c0_47 = arith.constant 0 : index
    %142 = vector.load %arg9[%c1_45, %c0_46, %c0_47] : memref<8x8x128xf32, #tpu.memory_space<vmem>>, vector<1x8x128xf32>
    %143 = vector.shape_cast %142 : vector<1x8x128xf32> to vector<8x128xf32>
    %144 = vector.shape_cast %141 : vector<8x128xf32> to vector<1x8x128xf32>
    tpu.vector_store %arg9[%c1_45, %c0_46, %c0_47], %144 {strides = array<i32>} : memref<8x8x128xf32, #tpu.memory_space<vmem>>, vector<1x8x128xf32>,
    %c2 = arith.constant 2 : index
    %c0_48 = arith.constant 0 : index
    %c0_49 = arith.constant 0 : index
    %145 = vector.load %arg0[%c2, %c0_48, %c0_49] : memref<8x8x32xf32, #tpu.memory_space<vmem>>, vector<1x8x32xf32>
    %146 = vector.shape_cast %145 : vector<1x8x32xf32> to vector<8x32xf32>
    %cst_50 = arith.constant dense<0.000000e+00> : vector<8x128xf32>
    %147 = tpu.matmul %146, %0, %cst_50 {dimension_numbers = #tpu.dot_dimension_numbers<[1], [0], [0], [1], [0, 0, 1, 1], [], []>} : vector<8x32xf32>, vector<32x128xf32>, vector<8x128xf32> -> vector<8x128xf32>
    %cst_51 = arith.constant dense<0.000000e+00> : vector<8x128xf32>
    %148 = tpu.matmul %110, %1, %cst_51 {dimension_numbers = #tpu.dot_dimension_numbers<[1], [0], [0], [1], [0, 0, 1, 1], [], []>} : vector<8x32xf32>, vector<32x128xf32>, vector<8x128xf32> -> vector<8x128xf32>
    %149 = arith.addf %147, %148 : vector<8x128xf32>
    %150 = arith.addf %149, %4 : vector<8x128xf32>
    %151 = vector.extract_strided_slice %150 {offsets = [0, 0], sizes = [8, 32], strides = [1, 1]} : vector<8x128xf32> to vector<8x32xf32>
    %152 = arith.negf %151 : vector<8x32xf32>
    %153 = math.exp %152 : vector<8x32xf32>
    %cst_52 = arith.constant 1.000000e+00 : f32
    %154 = vector.broadcast %cst_52 : f32 to vector<8x32xf32>
    %155 = arith.addf %154, %153 : vector<8x32xf32>
    %156 = arith.divf %154, %155 : vector<8x32xf32>
    %157 = vector.extract_strided_slice %150 {offsets = [0, 32], sizes = [8, 32], strides = [1, 1]} : vector<8x128xf32> to vector<8x32xf32>
    %158 = arith.negf %157 : vector<8x32xf32>
    %159 = math.exp %158 : vector<8x32xf32>
    %cst_53 = arith.constant 1.000000e+00 : f32
    %160 = vector.broadcast %cst_53 : f32 to vector<8x32xf32>
    %161 = arith.addf %160, %159 : vector<8x32xf32>
    %162 = arith.divf %160, %161 : vector<8x32xf32>
    %163 = vector.extract_strided_slice %150 {offsets = [0, 64], sizes = [8, 32], strides = [1, 1]} : vector<8x128xf32> to vector<8x32xf32>
    %164 = math.tanh %163 : vector<8x32xf32>
    %165 = vector.extract_strided_slice %150 {offsets = [0, 96], sizes = [8, 32], strides = [1, 1]} : vector<8x128xf32> to vector<8x32xf32>
    %166 = arith.negf %165 : vector<8x32xf32>
    %167 = math.exp %166 : vector<8x32xf32>
    %cst_54 = arith.constant 1.000000e+00 : f32
    %168 = vector.broadcast %cst_54 : f32 to vector<8x32xf32>
    %169 = arith.addf %168, %167 : vector<8x32xf32>
    %170 = arith.divf %168, %169 : vector<8x32xf32>
    %171 = arith.mulf %162, %108 : vector<8x32xf32>
    %172 = arith.mulf %156, %164 : vector<8x32xf32>
    %173 = arith.addf %171, %172 : vector<8x32xf32>
    %174 = math.tanh %173 : vector<8x32xf32>
    %175 = arith.mulf %170, %174 : vector<8x32xf32>
    %cst_55 = arith.constant dense<0.000000e+00> : vector<8x128xf32>
    %176 = tpu.matmul %175, %5, %cst_55 {dimension_numbers = #tpu.dot_dimension_numbers<[1], [0], [0], [1], [0, 0, 1, 1], [], []>} : vector<8x32xf32>, vector<32x128xf32>, vector<8x128xf32> -> vector<8x128xf32>
    %cst_56 = arith.constant dense<0.000000e+00> : vector<8x128xf32>
    %177 = tpu.matmul %139, %6, %cst_56 {dimension_numbers = #tpu.dot_dimension_numbers<[1], [0], [0], [1], [0, 0, 1, 1], [], []>} : vector<8x32xf32>, vector<32x128xf32>, vector<8x128xf32> -> vector<8x128xf32>
    %178 = arith.addf %176, %177 : vector<8x128xf32>
    %179 = arith.addf %178, %9 : vector<8x128xf32>
    %180 = vector.extract_strided_slice %179 {offsets = [0, 0], sizes = [8, 32], strides = [1, 1]} : vector<8x128xf32> to vector<8x32xf32>
    %181 = arith.negf %180 : vector<8x32xf32>
    %182 = math.exp %181 : vector<8x32xf32>
    %cst_57 = arith.constant 1.000000e+00 : f32
    %183 = vector.broadcast %cst_57 : f32 to vector<8x32xf32>
    %184 = arith.addf %183, %182 : vector<8x32xf32>
    %185 = arith.divf %183, %184 : vector<8x32xf32>
    %186 = vector.extract_strided_slice %179 {offsets = [0, 32], sizes = [8, 32], strides = [1, 1]} : vector<8x128xf32> to vector<8x32xf32>
    %187 = arith.negf %186 : vector<8x32xf32>
    %188 = math.exp %187 : vector<8x32xf32>
    %cst_58 = arith.constant 1.000000e+00 : f32
    %189 = vector.broadcast %cst_58 : f32 to vector<8x32xf32>
    %190 = arith.addf %189, %188 : vector<8x32xf32>
    %191 = arith.divf %189, %190 : vector<8x32xf32>
    %192 = vector.extract_strided_slice %179 {offsets = [0, 64], sizes = [8, 32], strides = [1, 1]} : vector<8x128xf32> to vector<8x32xf32>
    %193 = math.tanh %192 : vector<8x32xf32>
    %194 = vector.extract_strided_slice %179 {offsets = [0, 96], sizes = [8, 32], strides = [1, 1]} : vector<8x128xf32> to vector<8x32xf32>
    %195 = arith.negf %194 : vector<8x32xf32>
    %196 = math.exp %195 : vector<8x32xf32>
    %cst_59 = arith.constant 1.000000e+00 : f32
    %197 = vector.broadcast %cst_59 : f32 to vector<8x32xf32>
    %198 = arith.addf %197, %196 : vector<8x32xf32>
    %199 = arith.divf %197, %198 : vector<8x32xf32>
    %200 = arith.mulf %191, %137 : vector<8x32xf32>
    %201 = arith.mulf %185, %193 : vector<8x32xf32>
    %202 = arith.addf %200, %201 : vector<8x32xf32>
    %203 = math.tanh %202 : vector<8x32xf32>
    %204 = arith.mulf %199, %203 : vector<8x32xf32>
    %cst_60 = arith.constant dense<0.000000e+00> : vector<8x128xf32>
    %205 = tpu.matmul %204, %10, %cst_60 {dimension_numbers = #tpu.dot_dimension_numbers<[1], [0], [0], [1], [0, 0, 1, 1], [], []>} : vector<8x32xf32>, vector<32x128xf32>, vector<8x128xf32> -> vector<8x128xf32>
    %206 = arith.addf %205, %13 : vector<8x128xf32>
    %c2_61 = arith.constant 2 : index
    %c0_62 = arith.constant 0 : index
    %c0_63 = arith.constant 0 : index
    %207 = vector.load %arg9[%c2_61, %c0_62, %c0_63] : memref<8x8x128xf32, #tpu.memory_space<vmem>>, vector<1x8x128xf32>
    %208 = vector.shape_cast %207 : vector<1x8x128xf32> to vector<8x128xf32>
    %209 = vector.shape_cast %206 : vector<8x128xf32> to vector<1x8x128xf32>
    tpu.vector_store %arg9[%c2_61, %c0_62, %c0_63], %209 {strides = array<i32>} : memref<8x8x128xf32, #tpu.memory_space<vmem>>, vector<1x8x128xf32>,
    %c3 = arith.constant 3 : index
    %c0_64 = arith.constant 0 : index
    %c0_65 = arith.constant 0 : index
    %210 = vector.load %arg0[%c3, %c0_64, %c0_65] : memref<8x8x32xf32, #tpu.memory_space<vmem>>, vector<1x8x32xf32>
    %211 = vector.shape_cast %210 : vector<1x8x32xf32> to vector<8x32xf32>
    %cst_66 = arith.constant dense<0.000000e+00> : vector<8x128xf32>
    %212 = tpu.matmul %211, %0, %cst_66 {dimension_numbers = #tpu.dot_dimension_numbers<[1], [0], [0], [1], [0, 0, 1, 1], [], []>} : vector<8x32xf32>, vector<32x128xf32>, vector<8x128xf32> -> vector<8x128xf32>
    %cst_67 = arith.constant dense<0.000000e+00> : vector<8x128xf32>
    %213 = tpu.matmul %175, %1, %cst_67 {dimension_numbers = #tpu.dot_dimension_numbers<[1], [0], [0], [1], [0, 0, 1, 1], [], []>} : vector<8x32xf32>, vector<32x128xf32>, vector<8x128xf32> -> vector<8x128xf32>
    %214 = arith.addf %212, %213 : vector<8x128xf32>
    %215 = arith.addf %214, %4 : vector<8x128xf32>
    %216 = vector.extract_strided_slice %215 {offsets = [0, 0], sizes = [8, 32], strides = [1, 1]} : vector<8x128xf32> to vector<8x32xf32>
    %217 = arith.negf %216 : vector<8x32xf32>
    %218 = math.exp %217 : vector<8x32xf32>
    %cst_68 = arith.constant 1.000000e+00 : f32
    %219 = vector.broadcast %cst_68 : f32 to vector<8x32xf32>
    %220 = arith.addf %219, %218 : vector<8x32xf32>
    %221 = arith.divf %219, %220 : vector<8x32xf32>
    %222 = vector.extract_strided_slice %215 {offsets = [0, 32], sizes = [8, 32], strides = [1, 1]} : vector<8x128xf32> to vector<8x32xf32>
    %223 = arith.negf %222 : vector<8x32xf32>
    %224 = math.exp %223 : vector<8x32xf32>
    %cst_69 = arith.constant 1.000000e+00 : f32
    %225 = vector.broadcast %cst_69 : f32 to vector<8x32xf32>
    %226 = arith.addf %225, %224 : vector<8x32xf32>
    %227 = arith.divf %225, %226 : vector<8x32xf32>
    %228 = vector.extract_strided_slice %215 {offsets = [0, 64], sizes = [8, 32], strides = [1, 1]} : vector<8x128xf32> to vector<8x32xf32>
    %229 = math.tanh %228 : vector<8x32xf32>
    %230 = vector.extract_strided_slice %215 {offsets = [0, 96], sizes = [8, 32], strides = [1, 1]} : vector<8x128xf32> to vector<8x32xf32>
    %231 = arith.negf %230 : vector<8x32xf32>
    %232 = math.exp %231 : vector<8x32xf32>
    %cst_70 = arith.constant 1.000000e+00 : f32
    %233 = vector.broadcast %cst_70 : f32 to vector<8x32xf32>
    %234 = arith.addf %233, %232 : vector<8x32xf32>
    %235 = arith.divf %233, %234 : vector<8x32xf32>
    %236 = arith.mulf %227, %173 : vector<8x32xf32>
    %237 = arith.mulf %221, %229 : vector<8x32xf32>
    %238 = arith.addf %236, %237 : vector<8x32xf32>
    %239 = math.tanh %238 : vector<8x32xf32>
    %240 = arith.mulf %235, %239 : vector<8x32xf32>
    %cst_71 = arith.constant dense<0.000000e+00> : vector<8x128xf32>
    %241 = tpu.matmul %240, %5, %cst_71 {dimension_numbers = #tpu.dot_dimension_numbers<[1], [0], [0], [1], [0, 0, 1, 1], [], []>} : vector<8x32xf32>, vector<32x128xf32>, vector<8x128xf32> -> vector<8x128xf32>
    %cst_72 = arith.constant dense<0.000000e+00> : vector<8x128xf32>
    %242 = tpu.matmul %204, %6, %cst_72 {dimension_numbers = #tpu.dot_dimension_numbers<[1], [0], [0], [1], [0, 0, 1, 1], [], []>} : vector<8x32xf32>, vector<32x128xf32>, vector<8x128xf32> -> vector<8x128xf32>
    %243 = arith.addf %241, %242 : vector<8x128xf32>
    %244 = arith.addf %243, %9 : vector<8x128xf32>
    %245 = vector.extract_strided_slice %244 {offsets = [0, 0], sizes = [8, 32], strides = [1, 1]} : vector<8x128xf32> to vector<8x32xf32>
    %246 = arith.negf %245 : vector<8x32xf32>
    %247 = math.exp %246 : vector<8x32xf32>
    %cst_73 = arith.constant 1.000000e+00 : f32
    %248 = vector.broadcast %cst_73 : f32 to vector<8x32xf32>
    %249 = arith.addf %248, %247 : vector<8x32xf32>
    %250 = arith.divf %248, %249 : vector<8x32xf32>
    %251 = vector.extract_strided_slice %244 {offsets = [0, 32], sizes = [8, 32], strides = [1, 1]} : vector<8x128xf32> to vector<8x32xf32>
    %252 = arith.negf %251 : vector<8x32xf32>
    %253 = math.exp %252 : vector<8x32xf32>
    %cst_74 = arith.constant 1.000000e+00 : f32
    %254 = vector.broadcast %cst_74 : f32 to vector<8x32xf32>
    %255 = arith.addf %254, %253 : vector<8x32xf32>
    %256 = arith.divf %254, %255 : vector<8x32xf32>
    %257 = vector.extract_strided_slice %244 {offsets = [0, 64], sizes = [8, 32], strides = [1, 1]} : vector<8x128xf32> to vector<8x32xf32>
    %258 = math.tanh %257 : vector<8x32xf32>
    %259 = vector.extract_strided_slice %244 {offsets = [0, 96], sizes = [8, 32], strides = [1, 1]} : vector<8x128xf32> to vector<8x32xf32>
    %260 = arith.negf %259 : vector<8x32xf32>
    %261 = math.exp %260 : vector<8x32xf32>
    %cst_75 = arith.constant 1.000000e+00 : f32
    %262 = vector.broadcast %cst_75 : f32 to vector<8x32xf32>
    %263 = arith.addf %262, %261 : vector<8x32xf32>
    %264 = arith.divf %262, %263 : vector<8x32xf32>
    %265 = arith.mulf %256, %202 : vector<8x32xf32>
    %266 = arith.mulf %250, %258 : vector<8x32xf32>
    %267 = arith.addf %265, %266 : vector<8x32xf32>
    %268 = math.tanh %267 : vector<8x32xf32>
    %269 = arith.mulf %264, %268 : vector<8x32xf32>
    %cst_76 = arith.constant dense<0.000000e+00> : vector<8x128xf32>
    %270 = tpu.matmul %269, %10, %cst_76 {dimension_numbers = #tpu.dot_dimension_numbers<[1], [0], [0], [1], [0, 0, 1, 1], [], []>} : vector<8x32xf32>, vector<32x128xf32>, vector<8x128xf32> -> vector<8x128xf32>
    %271 = arith.addf %270, %13 : vector<8x128xf32>
    %c3_77 = arith.constant 3 : index
    %c0_78 = arith.constant 0 : index
    %c0_79 = arith.constant 0 : index
    %272 = vector.load %arg9[%c3_77, %c0_78, %c0_79] : memref<8x8x128xf32, #tpu.memory_space<vmem>>, vector<1x8x128xf32>
    %273 = vector.shape_cast %272 : vector<1x8x128xf32> to vector<8x128xf32>
    %274 = vector.shape_cast %271 : vector<8x128xf32> to vector<1x8x128xf32>
    tpu.vector_store %arg9[%c3_77, %c0_78, %c0_79], %274 {strides = array<i32>} : memref<8x8x128xf32, #tpu.memory_space<vmem>>, vector<1x8x128xf32>,
    %c4 = arith.constant 4 : index
    %c0_80 = arith.constant 0 : index
    %c0_81 = arith.constant 0 : index
    %275 = vector.load %arg0[%c4, %c0_80, %c0_81] : memref<8x8x32xf32, #tpu.memory_space<vmem>>, vector<1x8x32xf32>
    %276 = vector.shape_cast %275 : vector<1x8x32xf32> to vector<8x32xf32>
    %cst_82 = arith.constant dense<0.000000e+00> : vector<8x128xf32>
    %277 = tpu.matmul %276, %0, %cst_82 {dimension_numbers = #tpu.dot_dimension_numbers<[1], [0], [0], [1], [0, 0, 1, 1], [], []>} : vector<8x32xf32>, vector<32x128xf32>, vector<8x128xf32> -> vector<8x128xf32>
    %cst_83 = arith.constant dense<0.000000e+00> : vector<8x128xf32>
    %278 = tpu.matmul %240, %1, %cst_83 {dimension_numbers = #tpu.dot_dimension_numbers<[1], [0], [0], [1], [0, 0, 1, 1], [], []>} : vector<8x32xf32>, vector<32x128xf32>, vector<8x128xf32> -> vector<8x128xf32>
    %279 = arith.addf %277, %278 : vector<8x128xf32>
    %280 = arith.addf %279, %4 : vector<8x128xf32>
    %281 = vector.extract_strided_slice %280 {offsets = [0, 0], sizes = [8, 32], strides = [1, 1]} : vector<8x128xf32> to vector<8x32xf32>
    %282 = arith.negf %281 : vector<8x32xf32>
    %283 = math.exp %282 : vector<8x32xf32>
    %cst_84 = arith.constant 1.000000e+00 : f32
    %284 = vector.broadcast %cst_84 : f32 to vector<8x32xf32>
    %285 = arith.addf %284, %283 : vector<8x32xf32>
    %286 = arith.divf %284, %285 : vector<8x32xf32>
    %287 = vector.extract_strided_slice %280 {offsets = [0, 32], sizes = [8, 32], strides = [1, 1]} : vector<8x128xf32> to vector<8x32xf32>
    %288 = arith.negf %287 : vector<8x32xf32>
    %289 = math.exp %288 : vector<8x32xf32>
    %cst_85 = arith.constant 1.000000e+00 : f32
    %290 = vector.broadcast %cst_85 : f32 to vector<8x32xf32>
    %291 = arith.addf %290, %289 : vector<8x32xf32>
    %292 = arith.divf %290, %291 : vector<8x32xf32>
    %293 = vector.extract_strided_slice %280 {offsets = [0, 64], sizes = [8, 32], strides = [1, 1]} : vector<8x128xf32> to vector<8x32xf32>
    %294 = math.tanh %293 : vector<8x32xf32>
    %295 = vector.extract_strided_slice %280 {offsets = [0, 96], sizes = [8, 32], strides = [1, 1]} : vector<8x128xf32> to vector<8x32xf32>
    %296 = arith.negf %295 : vector<8x32xf32>
    %297 = math.exp %296 : vector<8x32xf32>
    %cst_86 = arith.constant 1.000000e+00 : f32
    %298 = vector.broadcast %cst_86 : f32 to vector<8x32xf32>
    %299 = arith.addf %298, %297 : vector<8x32xf32>
    %300 = arith.divf %298, %299 : vector<8x32xf32>
    %301 = arith.mulf %292, %238 : vector<8x32xf32>
    %302 = arith.mulf %286, %294 : vector<8x32xf32>
    %303 = arith.addf %301, %302 : vector<8x32xf32>
    %304 = math.tanh %303 : vector<8x32xf32>
    %305 = arith.mulf %300, %304 : vector<8x32xf32>
    %cst_87 = arith.constant dense<0.000000e+00> : vector<8x128xf32>
    %306 = tpu.matmul %305, %5, %cst_87 {dimension_numbers = #tpu.dot_dimension_numbers<[1], [0], [0], [1], [0, 0, 1, 1], [], []>} : vector<8x32xf32>, vector<32x128xf32>, vector<8x128xf32> -> vector<8x128xf32>
    %cst_88 = arith.constant dense<0.000000e+00> : vector<8x128xf32>
    %307 = tpu.matmul %269, %6, %cst_88 {dimension_numbers = #tpu.dot_dimension_numbers<[1], [0], [0], [1], [0, 0, 1, 1], [], []>} : vector<8x32xf32>, vector<32x128xf32>, vector<8x128xf32> -> vector<8x128xf32>
    %308 = arith.addf %306, %307 : vector<8x128xf32>
    %309 = arith.addf %308, %9 : vector<8x128xf32>
    %310 = vector.extract_strided_slice %309 {offsets = [0, 0], sizes = [8, 32], strides = [1, 1]} : vector<8x128xf32> to vector<8x32xf32>
    %311 = arith.negf %310 : vector<8x32xf32>
    %312 = math.exp %311 : vector<8x32xf32>
    %cst_89 = arith.constant 1.000000e+00 : f32
    %313 = vector.broadcast %cst_89 : f32 to vector<8x32xf32>
    %314 = arith.addf %313, %312 : vector<8x32xf32>
    %315 = arith.divf %313, %314 : vector<8x32xf32>
    %316 = vector.extract_strided_slice %309 {offsets = [0, 32], sizes = [8, 32], strides = [1, 1]} : vector<8x128xf32> to vector<8x32xf32>
    %317 = arith.negf %316 : vector<8x32xf32>
    %318 = math.exp %317 : vector<8x32xf32>
    %cst_90 = arith.constant 1.000000e+00 : f32
    %319 = vector.broadcast %cst_90 : f32 to vector<8x32xf32>
    %320 = arith.addf %319, %318 : vector<8x32xf32>
    %321 = arith.divf %319, %320 : vector<8x32xf32>
    %322 = vector.extract_strided_slice %309 {offsets = [0, 64], sizes = [8, 32], strides = [1, 1]} : vector<8x128xf32> to vector<8x32xf32>
    %323 = math.tanh %322 : vector<8x32xf32>
    %324 = vector.extract_strided_slice %309 {offsets = [0, 96], sizes = [8, 32], strides = [1, 1]} : vector<8x128xf32> to vector<8x32xf32>
    %325 = arith.negf %324 : vector<8x32xf32>
    %326 = math.exp %325 : vector<8x32xf32>
    %cst_91 = arith.constant 1.000000e+00 : f32
    %327 = vector.broadcast %cst_91 : f32 to vector<8x32xf32>
    %328 = arith.addf %327, %326 : vector<8x32xf32>
    %329 = arith.divf %327, %328 : vector<8x32xf32>
    %330 = arith.mulf %321, %267 : vector<8x32xf32>
    %331 = arith.mulf %315, %323 : vector<8x32xf32>
    %332 = arith.addf %330, %331 : vector<8x32xf32>
    %333 = math.tanh %332 : vector<8x32xf32>
    %334 = arith.mulf %329, %333 : vector<8x32xf32>
    %cst_92 = arith.constant dense<0.000000e+00> : vector<8x128xf32>
    %335 = tpu.matmul %334, %10, %cst_92 {dimension_numbers = #tpu.dot_dimension_numbers<[1], [0], [0], [1], [0, 0, 1, 1], [], []>} : vector<8x32xf32>, vector<32x128xf32>, vector<8x128xf32> -> vector<8x128xf32>
    %336 = arith.addf %335, %13 : vector<8x128xf32>
    %c4_93 = arith.constant 4 : index
    %c0_94 = arith.constant 0 : index
    %c0_95 = arith.constant 0 : index
    %337 = vector.load %arg9[%c4_93, %c0_94, %c0_95] : memref<8x8x128xf32, #tpu.memory_space<vmem>>, vector<1x8x128xf32>
    %338 = vector.shape_cast %337 : vector<1x8x128xf32> to vector<8x128xf32>
    %339 = vector.shape_cast %336 : vector<8x128xf32> to vector<1x8x128xf32>
    tpu.vector_store %arg9[%c4_93, %c0_94, %c0_95], %339 {strides = array<i32>} : memref<8x8x128xf32, #tpu.memory_space<vmem>>, vector<1x8x128xf32>,
    %c5 = arith.constant 5 : index
    %c0_96 = arith.constant 0 : index
    %c0_97 = arith.constant 0 : index
    %340 = vector.load %arg0[%c5, %c0_96, %c0_97] : memref<8x8x32xf32, #tpu.memory_space<vmem>>, vector<1x8x32xf32>
    %341 = vector.shape_cast %340 : vector<1x8x32xf32> to vector<8x32xf32>
    %cst_98 = arith.constant dense<0.000000e+00> : vector<8x128xf32>
    %342 = tpu.matmul %341, %0, %cst_98 {dimension_numbers = #tpu.dot_dimension_numbers<[1], [0], [0], [1], [0, 0, 1, 1], [], []>} : vector<8x32xf32>, vector<32x128xf32>, vector<8x128xf32> -> vector<8x128xf32>
    %cst_99 = arith.constant dense<0.000000e+00> : vector<8x128xf32>
    %343 = tpu.matmul %305, %1, %cst_99 {dimension_numbers = #tpu.dot_dimension_numbers<[1], [0], [0], [1], [0, 0, 1, 1], [], []>} : vector<8x32xf32>, vector<32x128xf32>, vector<8x128xf32> -> vector<8x128xf32>
    %344 = arith.addf %342, %343 : vector<8x128xf32>
    %345 = arith.addf %344, %4 : vector<8x128xf32>
    %346 = vector.extract_strided_slice %345 {offsets = [0, 0], sizes = [8, 32], strides = [1, 1]} : vector<8x128xf32> to vector<8x32xf32>
    %347 = arith.negf %346 : vector<8x32xf32>
    %348 = math.exp %347 : vector<8x32xf32>
    %cst_100 = arith.constant 1.000000e+00 : f32
    %349 = vector.broadcast %cst_100 : f32 to vector<8x32xf32>
    %350 = arith.addf %349, %348 : vector<8x32xf32>
    %351 = arith.divf %349, %350 : vector<8x32xf32>
    %352 = vector.extract_strided_slice %345 {offsets = [0, 32], sizes = [8, 32], strides = [1, 1]} : vector<8x128xf32> to vector<8x32xf32>
    %353 = arith.negf %352 : vector<8x32xf32>
    %354 = math.exp %353 : vector<8x32xf32>
    %cst_101 = arith.constant 1.000000e+00 : f32
    %355 = vector.broadcast %cst_101 : f32 to vector<8x32xf32>
    %356 = arith.addf %355, %354 : vector<8x32xf32>
    %357 = arith.divf %355, %356 : vector<8x32xf32>
    %358 = vector.extract_strided_slice %345 {offsets = [0, 64], sizes = [8, 32], strides = [1, 1]} : vector<8x128xf32> to vector<8x32xf32>
    %359 = math.tanh %358 : vector<8x32xf32>
    %360 = vector.extract_strided_slice %345 {offsets = [0, 96], sizes = [8, 32], strides = [1, 1]} : vector<8x128xf32> to vector<8x32xf32>
    %361 = arith.negf %360 : vector<8x32xf32>
    %362 = math.exp %361 : vector<8x32xf32>
    %cst_102 = arith.constant 1.000000e+00 : f32
    %363 = vector.broadcast %cst_102 : f32 to vector<8x32xf32>
    %364 = arith.addf %363, %362 : vector<8x32xf32>
    %365 = arith.divf %363, %364 : vector<8x32xf32>
    %366 = arith.mulf %357, %303 : vector<8x32xf32>
    %367 = arith.mulf %351, %359 : vector<8x32xf32>
    %368 = arith.addf %366, %367 : vector<8x32xf32>
    %369 = math.tanh %368 : vector<8x32xf32>
    %370 = arith.mulf %365, %369 : vector<8x32xf32>
    %cst_103 = arith.constant dense<0.000000e+00> : vector<8x128xf32>
    %371 = tpu.matmul %370, %5, %cst_103 {dimension_numbers = #tpu.dot_dimension_numbers<[1], [0], [0], [1], [0, 0, 1, 1], [], []>} : vector<8x32xf32>, vector<32x128xf32>, vector<8x128xf32> -> vector<8x128xf32>
    %cst_104 = arith.constant dense<0.000000e+00> : vector<8x128xf32>
    %372 = tpu.matmul %334, %6, %cst_104 {dimension_numbers = #tpu.dot_dimension_numbers<[1], [0], [0], [1], [0, 0, 1, 1], [], []>} : vector<8x32xf32>, vector<32x128xf32>, vector<8x128xf32> -> vector<8x128xf32>
    %373 = arith.addf %371, %372 : vector<8x128xf32>
    %374 = arith.addf %373, %9 : vector<8x128xf32>
    %375 = vector.extract_strided_slice %374 {offsets = [0, 0], sizes = [8, 32], strides = [1, 1]} : vector<8x128xf32> to vector<8x32xf32>
    %376 = arith.negf %375 : vector<8x32xf32>
    %377 = math.exp %376 : vector<8x32xf32>
    %cst_105 = arith.constant 1.000000e+00 : f32
    %378 = vector.broadcast %cst_105 : f32 to vector<8x32xf32>
    %379 = arith.addf %378, %377 : vector<8x32xf32>
    %380 = arith.divf %378, %379 : vector<8x32xf32>
    %381 = vector.extract_strided_slice %374 {offsets = [0, 32], sizes = [8, 32], strides = [1, 1]} : vector<8x128xf32> to vector<8x32xf32>
    %382 = arith.negf %381 : vector<8x32xf32>
    %383 = math.exp %382 : vector<8x32xf32>
    %cst_106 = arith.constant 1.000000e+00 : f32
    %384 = vector.broadcast %cst_106 : f32 to vector<8x32xf32>
    %385 = arith.addf %384, %383 : vector<8x32xf32>
    %386 = arith.divf %384, %385 : vector<8x32xf32>
    %387 = vector.extract_strided_slice %374 {offsets = [0, 64], sizes = [8, 32], strides = [1, 1]} : vector<8x128xf32> to vector<8x32xf32>
    %388 = math.tanh %387 : vector<8x32xf32>
    %389 = vector.extract_strided_slice %374 {offsets = [0, 96], sizes = [8, 32], strides = [1, 1]} : vector<8x128xf32> to vector<8x32xf32>
    %390 = arith.negf %389 : vector<8x32xf32>
    %391 = math.exp %390 : vector<8x32xf32>
    %cst_107 = arith.constant 1.000000e+00 : f32
    %392 = vector.broadcast %cst_107 : f32 to vector<8x32xf32>
    %393 = arith.addf %392, %391 : vector<8x32xf32>
    %394 = arith.divf %392, %393 : vector<8x32xf32>
    %395 = arith.mulf %386, %332 : vector<8x32xf32>
    %396 = arith.mulf %380, %388 : vector<8x32xf32>
    %397 = arith.addf %395, %396 : vector<8x32xf32>
    %398 = math.tanh %397 : vector<8x32xf32>
    %399 = arith.mulf %394, %398 : vector<8x32xf32>
    %cst_108 = arith.constant dense<0.000000e+00> : vector<8x128xf32>
    %400 = tpu.matmul %399, %10, %cst_108 {dimension_numbers = #tpu.dot_dimension_numbers<[1], [0], [0], [1], [0, 0, 1, 1], [], []>} : vector<8x32xf32>, vector<32x128xf32>, vector<8x128xf32> -> vector<8x128xf32>
    %401 = arith.addf %400, %13 : vector<8x128xf32>
    %c5_109 = arith.constant 5 : index
    %c0_110 = arith.constant 0 : index
    %c0_111 = arith.constant 0 : index
    %402 = vector.load %arg9[%c5_109, %c0_110, %c0_111] : memref<8x8x128xf32, #tpu.memory_space<vmem>>, vector<1x8x128xf32>
    %403 = vector.shape_cast %402 : vector<1x8x128xf32> to vector<8x128xf32>
    %404 = vector.shape_cast %401 : vector<8x128xf32> to vector<1x8x128xf32>
    tpu.vector_store %arg9[%c5_109, %c0_110, %c0_111], %404 {strides = array<i32>} : memref<8x8x128xf32, #tpu.memory_space<vmem>>, vector<1x8x128xf32>,
    %c6 = arith.constant 6 : index
    %c0_112 = arith.constant 0 : index
    %c0_113 = arith.constant 0 : index
    %405 = vector.load %arg0[%c6, %c0_112, %c0_113] : memref<8x8x32xf32, #tpu.memory_space<vmem>>, vector<1x8x32xf32>
    %406 = vector.shape_cast %405 : vector<1x8x32xf32> to vector<8x32xf32>
    %cst_114 = arith.constant dense<0.000000e+00> : vector<8x128xf32>
    %407 = tpu.matmul %406, %0, %cst_114 {dimension_numbers = #tpu.dot_dimension_numbers<[1], [0], [0], [1], [0, 0, 1, 1], [], []>} : vector<8x32xf32>, vector<32x128xf32>, vector<8x128xf32> -> vector<8x128xf32>
    %cst_115 = arith.constant dense<0.000000e+00> : vector<8x128xf32>
    %408 = tpu.matmul %370, %1, %cst_115 {dimension_numbers = #tpu.dot_dimension_numbers<[1], [0], [0], [1], [0, 0, 1, 1], [], []>} : vector<8x32xf32>, vector<32x128xf32>, vector<8x128xf32> -> vector<8x128xf32>
    %409 = arith.addf %407, %408 : vector<8x128xf32>
    %410 = arith.addf %409, %4 : vector<8x128xf32>
    %411 = vector.extract_strided_slice %410 {offsets = [0, 0], sizes = [8, 32], strides = [1, 1]} : vector<8x128xf32> to vector<8x32xf32>
    %412 = arith.negf %411 : vector<8x32xf32>
    %413 = math.exp %412 : vector<8x32xf32>
    %cst_116 = arith.constant 1.000000e+00 : f32
    %414 = vector.broadcast %cst_116 : f32 to vector<8x32xf32>
    %415 = arith.addf %414, %413 : vector<8x32xf32>
    %416 = arith.divf %414, %415 : vector<8x32xf32>
    %417 = vector.extract_strided_slice %410 {offsets = [0, 32], sizes = [8, 32], strides = [1, 1]} : vector<8x128xf32> to vector<8x32xf32>
    %418 = arith.negf %417 : vector<8x32xf32>
    %419 = math.exp %418 : vector<8x32xf32>
    %cst_117 = arith.constant 1.000000e+00 : f32
    %420 = vector.broadcast %cst_117 : f32 to vector<8x32xf32>
    %421 = arith.addf %420, %419 : vector<8x32xf32>
    %422 = arith.divf %420, %421 : vector<8x32xf32>
    %423 = vector.extract_strided_slice %410 {offsets = [0, 64], sizes = [8, 32], strides = [1, 1]} : vector<8x128xf32> to vector<8x32xf32>
    %424 = math.tanh %423 : vector<8x32xf32>
    %425 = vector.extract_strided_slice %410 {offsets = [0, 96], sizes = [8, 32], strides = [1, 1]} : vector<8x128xf32> to vector<8x32xf32>
    %426 = arith.negf %425 : vector<8x32xf32>
    %427 = math.exp %426 : vector<8x32xf32>
    %cst_118 = arith.constant 1.000000e+00 : f32
    %428 = vector.broadcast %cst_118 : f32 to vector<8x32xf32>
    %429 = arith.addf %428, %427 : vector<8x32xf32>
    %430 = arith.divf %428, %429 : vector<8x32xf32>
    %431 = arith.mulf %422, %368 : vector<8x32xf32>
    %432 = arith.mulf %416, %424 : vector<8x32xf32>
    %433 = arith.addf %431, %432 : vector<8x32xf32>
    %434 = math.tanh %433 : vector<8x32xf32>
    %435 = arith.mulf %430, %434 : vector<8x32xf32>
    %cst_119 = arith.constant dense<0.000000e+00> : vector<8x128xf32>
    %436 = tpu.matmul %435, %5, %cst_119 {dimension_numbers = #tpu.dot_dimension_numbers<[1], [0], [0], [1], [0, 0, 1, 1], [], []>} : vector<8x32xf32>, vector<32x128xf32>, vector<8x128xf32> -> vector<8x128xf32>
    %cst_120 = arith.constant dense<0.000000e+00> : vector<8x128xf32>
    %437 = tpu.matmul %399, %6, %cst_120 {dimension_numbers = #tpu.dot_dimension_numbers<[1], [0], [0], [1], [0, 0, 1, 1], [], []>} : vector<8x32xf32>, vector<32x128xf32>, vector<8x128xf32> -> vector<8x128xf32>
    %438 = arith.addf %436, %437 : vector<8x128xf32>
    %439 = arith.addf %438, %9 : vector<8x128xf32>
    %440 = vector.extract_strided_slice %439 {offsets = [0, 0], sizes = [8, 32], strides = [1, 1]} : vector<8x128xf32> to vector<8x32xf32>
    %441 = arith.negf %440 : vector<8x32xf32>
    %442 = math.exp %441 : vector<8x32xf32>
    %cst_121 = arith.constant 1.000000e+00 : f32
    %443 = vector.broadcast %cst_121 : f32 to vector<8x32xf32>
    %444 = arith.addf %443, %442 : vector<8x32xf32>
    %445 = arith.divf %443, %444 : vector<8x32xf32>
    %446 = vector.extract_strided_slice %439 {offsets = [0, 32], sizes = [8, 32], strides = [1, 1]} : vector<8x128xf32> to vector<8x32xf32>
    %447 = arith.negf %446 : vector<8x32xf32>
    %448 = math.exp %447 : vector<8x32xf32>
    %cst_122 = arith.constant 1.000000e+00 : f32
    %449 = vector.broadcast %cst_122 : f32 to vector<8x32xf32>
    %450 = arith.addf %449, %448 : vector<8x32xf32>
    %451 = arith.divf %449, %450 : vector<8x32xf32>
    %452 = vector.extract_strided_slice %439 {offsets = [0, 64], sizes = [8, 32], strides = [1, 1]} : vector<8x128xf32> to vector<8x32xf32>
    %453 = math.tanh %452 : vector<8x32xf32>
    %454 = vector.extract_strided_slice %439 {offsets = [0, 96], sizes = [8, 32], strides = [1, 1]} : vector<8x128xf32> to vector<8x32xf32>
    %455 = arith.negf %454 : vector<8x32xf32>
    %456 = math.exp %455 : vector<8x32xf32>
    %cst_123 = arith.constant 1.000000e+00 : f32
    %457 = vector.broadcast %cst_123 : f32 to vector<8x32xf32>
    %458 = arith.addf %457, %456 : vector<8x32xf32>
    %459 = arith.divf %457, %458 : vector<8x32xf32>
    %460 = arith.mulf %451, %397 : vector<8x32xf32>
    %461 = arith.mulf %445, %453 : vector<8x32xf32>
    %462 = arith.addf %460, %461 : vector<8x32xf32>
    %463 = math.tanh %462 : vector<8x32xf32>
    %464 = arith.mulf %459, %463 : vector<8x32xf32>
    %cst_124 = arith.constant dense<0.000000e+00> : vector<8x128xf32>
    %465 = tpu.matmul %464, %10, %cst_124 {dimension_numbers = #tpu.dot_dimension_numbers<[1], [0], [0], [1], [0, 0, 1, 1], [], []>} : vector<8x32xf32>, vector<32x128xf32>, vector<8x128xf32> -> vector<8x128xf32>
    %466 = arith.addf %465, %13 : vector<8x128xf32>
    %c6_125 = arith.constant 6 : index
    %c0_126 = arith.constant 0 : index
    %c0_127 = arith.constant 0 : index
    %467 = vector.load %arg9[%c6_125, %c0_126, %c0_127] : memref<8x8x128xf32, #tpu.memory_space<vmem>>, vector<1x8x128xf32>
    %468 = vector.shape_cast %467 : vector<1x8x128xf32> to vector<8x128xf32>
    %469 = vector.shape_cast %466 : vector<8x128xf32> to vector<1x8x128xf32>
    tpu.vector_store %arg9[%c6_125, %c0_126, %c0_127], %469 {strides = array<i32>} : memref<8x8x128xf32, #tpu.memory_space<vmem>>, vector<1x8x128xf32>,
    %c7 = arith.constant 7 : index
    %c0_128 = arith.constant 0 : index
    %c0_129 = arith.constant 0 : index
    %470 = vector.load %arg0[%c7, %c0_128, %c0_129] : memref<8x8x32xf32, #tpu.memory_space<vmem>>, vector<1x8x32xf32>
    %471 = vector.shape_cast %470 : vector<1x8x32xf32> to vector<8x32xf32>
    %cst_130 = arith.constant dense<0.000000e+00> : vector<8x128xf32>
    %472 = tpu.matmul %471, %0, %cst_130 {dimension_numbers = #tpu.dot_dimension_numbers<[1], [0], [0], [1], [0, 0, 1, 1], [], []>} : vector<8x32xf32>, vector<32x128xf32>, vector<8x128xf32> -> vector<8x128xf32>
    %cst_131 = arith.constant dense<0.000000e+00> : vector<8x128xf32>
    %473 = tpu.matmul %435, %1, %cst_131 {dimension_numbers = #tpu.dot_dimension_numbers<[1], [0], [0], [1], [0, 0, 1, 1], [], []>} : vector<8x32xf32>, vector<32x128xf32>, vector<8x128xf32> -> vector<8x128xf32>
    %474 = arith.addf %472, %473 : vector<8x128xf32>
    %475 = arith.addf %474, %4 : vector<8x128xf32>
    %476 = vector.extract_strided_slice %475 {offsets = [0, 0], sizes = [8, 32], strides = [1, 1]} : vector<8x128xf32> to vector<8x32xf32>
    %477 = arith.negf %476 : vector<8x32xf32>
    %478 = math.exp %477 : vector<8x32xf32>
    %cst_132 = arith.constant 1.000000e+00 : f32
    %479 = vector.broadcast %cst_132 : f32 to vector<8x32xf32>
    %480 = arith.addf %479, %478 : vector<8x32xf32>
    %481 = arith.divf %479, %480 : vector<8x32xf32>
    %482 = vector.extract_strided_slice %475 {offsets = [0, 32], sizes = [8, 32], strides = [1, 1]} : vector<8x128xf32> to vector<8x32xf32>
    %483 = arith.negf %482 : vector<8x32xf32>
    %484 = math.exp %483 : vector<8x32xf32>
    %cst_133 = arith.constant 1.000000e+00 : f32
    %485 = vector.broadcast %cst_133 : f32 to vector<8x32xf32>
    %486 = arith.addf %485, %484 : vector<8x32xf32>
    %487 = arith.divf %485, %486 : vector<8x32xf32>
    %488 = vector.extract_strided_slice %475 {offsets = [0, 64], sizes = [8, 32], strides = [1, 1]} : vector<8x128xf32> to vector<8x32xf32>
    %489 = math.tanh %488 : vector<8x32xf32>
    %490 = vector.extract_strided_slice %475 {offsets = [0, 96], sizes = [8, 32], strides = [1, 1]} : vector<8x128xf32> to vector<8x32xf32>
    %491 = arith.negf %490 : vector<8x32xf32>
    %492 = math.exp %491 : vector<8x32xf32>
    %cst_134 = arith.constant 1.000000e+00 : f32
    %493 = vector.broadcast %cst_134 : f32 to vector<8x32xf32>
    %494 = arith.addf %493, %492 : vector<8x32xf32>
    %495 = arith.divf %493, %494 : vector<8x32xf32>
    %496 = arith.mulf %487, %433 : vector<8x32xf32>
    %497 = arith.mulf %481, %489 : vector<8x32xf32>
    %498 = arith.addf %496, %497 : vector<8x32xf32>
    %499 = math.tanh %498 : vector<8x32xf32>
    %500 = arith.mulf %495, %499 : vector<8x32xf32>
    %cst_135 = arith.constant dense<0.000000e+00> : vector<8x128xf32>
    %501 = tpu.matmul %500, %5, %cst_135 {dimension_numbers = #tpu.dot_dimension_numbers<[1], [0], [0], [1], [0, 0, 1, 1], [], []>} : vector<8x32xf32>, vector<32x128xf32>, vector<8x128xf32> -> vector<8x128xf32>
    %cst_136 = arith.constant dense<0.000000e+00> : vector<8x128xf32>
    %502 = tpu.matmul %464, %6, %cst_136 {dimension_numbers = #tpu.dot_dimension_numbers<[1], [0], [0], [1], [0, 0, 1, 1], [], []>} : vector<8x32xf32>, vector<32x128xf32>, vector<8x128xf32> -> vector<8x128xf32>
    %503 = arith.addf %501, %502 : vector<8x128xf32>
    %504 = arith.addf %503, %9 : vector<8x128xf32>
    %505 = vector.extract_strided_slice %504 {offsets = [0, 0], sizes = [8, 32], strides = [1, 1]} : vector<8x128xf32> to vector<8x32xf32>
    %506 = arith.negf %505 : vector<8x32xf32>
    %507 = math.exp %506 : vector<8x32xf32>
    %cst_137 = arith.constant 1.000000e+00 : f32
    %508 = vector.broadcast %cst_137 : f32 to vector<8x32xf32>
    %509 = arith.addf %508, %507 : vector<8x32xf32>
    %510 = arith.divf %508, %509 : vector<8x32xf32>
    %511 = vector.extract_strided_slice %504 {offsets = [0, 32], sizes = [8, 32], strides = [1, 1]} : vector<8x128xf32> to vector<8x32xf32>
    %512 = arith.negf %511 : vector<8x32xf32>
    %513 = math.exp %512 : vector<8x32xf32>
    %cst_138 = arith.constant 1.000000e+00 : f32
    %514 = vector.broadcast %cst_138 : f32 to vector<8x32xf32>
    %515 = arith.addf %514, %513 : vector<8x32xf32>
    %516 = arith.divf %514, %515 : vector<8x32xf32>
    %517 = vector.extract_strided_slice %504 {offsets = [0, 64], sizes = [8, 32], strides = [1, 1]} : vector<8x128xf32> to vector<8x32xf32>
    %518 = math.tanh %517 : vector<8x32xf32>
    %519 = vector.extract_strided_slice %504 {offsets = [0, 96], sizes = [8, 32], strides = [1, 1]} : vector<8x128xf32> to vector<8x32xf32>
    %520 = arith.negf %519 : vector<8x32xf32>
    %521 = math.exp %520 : vector<8x32xf32>
    %cst_139 = arith.constant 1.000000e+00 : f32
    %522 = vector.broadcast %cst_139 : f32 to vector<8x32xf32>
    %523 = arith.addf %522, %521 : vector<8x32xf32>
    %524 = arith.divf %522, %523 : vector<8x32xf32>
    %525 = arith.mulf %516, %462 : vector<8x32xf32>
    %526 = arith.mulf %510, %518 : vector<8x32xf32>
    %527 = arith.addf %525, %526 : vector<8x32xf32>
    %528 = math.tanh %527 : vector<8x32xf32>
    %529 = arith.mulf %524, %528 : vector<8x32xf32>
    %cst_140 = arith.constant dense<0.000000e+00> : vector<8x128xf32>
    %530 = tpu.matmul %529, %10, %cst_140 {dimension_numbers = #tpu.dot_dimension_numbers<[1], [0], [0], [1], [0, 0, 1, 1], [], []>} : vector<8x32xf32>, vector<32x128xf32>, vector<8x128xf32> -> vector<8x128xf32>
    %531 = arith.addf %530, %13 : vector<8x128xf32>
    %c7_141 = arith.constant 7 : index
    %c0_142 = arith.constant 0 : index
    %c0_143 = arith.constant 0 : index
    %532 = vector.load %arg9[%c7_141, %c0_142, %c0_143] : memref<8x8x128xf32, #tpu.memory_space<vmem>>, vector<1x8x128xf32>
    %533 = vector.shape_cast %532 : vector<1x8x128xf32> to vector<8x128xf32>
    %534 = vector.shape_cast %531 : vector<8x128xf32> to vector<1x8x128xf32>
    tpu.vector_store %arg9[%c7_141, %c0_142, %c0_143], %534 {strides = array<i32>} : memref<8x8x128xf32, #tpu.memory_space<vmem>>, vector<1x8x128xf32>,
    %c0_144 = arith.constant 0 : index
    %c0_145 = arith.constant 0 : index
    %c0_146 = arith.constant 0 : index
    %535 = vector.load %arg10[%c0_144, %c0_145, %c0_146] : memref<2x8x32xf32, #tpu.memory_space<vmem>>, vector<1x8x32xf32>
    %536 = vector.shape_cast %535 : vector<1x8x32xf32> to vector<8x32xf32>
    %537 = vector.shape_cast %500 : vector<8x32xf32> to vector<1x8x32xf32>
    tpu.vector_store %arg10[%c0_144, %c0_145, %c0_146], %537 {strides = array<i32>} : memref<2x8x32xf32, #tpu.memory_space<vmem>>, vector<1x8x32xf32>,
    %c0_147 = arith.constant 0 : index
    %c0_148 = arith.constant 0 : index
    %c0_149 = arith.constant 0 : index
    %538 = vector.load %arg11[%c0_147, %c0_148, %c0_149] : memref<2x8x32xf32, #tpu.memory_space<vmem>>, vector<1x8x32xf32>
    %539 = vector.shape_cast %538 : vector<1x8x32xf32> to vector<8x32xf32>
    %540 = vector.shape_cast %498 : vector<8x32xf32> to vector<1x8x32xf32>
    tpu.vector_store %arg11[%c0_147, %c0_148, %c0_149], %540 {strides = array<i32>} : memref<2x8x32xf32, #tpu.memory_space<vmem>>, vector<1x8x32xf32>,
    %c1_150 = arith.constant 1 : index
    %c0_151 = arith.constant 0 : index
    %c0_152 = arith.constant 0 : index
    %541 = vector.load %arg10[%c1_150, %c0_151, %c0_152] : memref<2x8x32xf32, #tpu.memory_space<vmem>>, vector<1x8x32xf32>
    %542 = vector.shape_cast %541 : vector<1x8x32xf32> to vector<8x32xf32>
    %543 = vector.shape_cast %529 : vector<8x32xf32> to vector<1x8x32xf32>
    tpu.vector_store %arg10[%c1_150, %c0_151, %c0_152], %543 {strides = array<i32>} : memref<2x8x32xf32, #tpu.memory_space<vmem>>, vector<1x8x32xf32>,
    %c1_153 = arith.constant 1 : index
    %c0_154 = arith.constant 0 : index
    %c0_155 = arith.constant 0 : index
    %544 = vector.load %arg11[%c1_153, %c0_154, %c0_155] : memref<2x8x32xf32, #tpu.memory_space<vmem>>, vector<1x8x32xf32>
    %545 = vector.shape_cast %544 : vector<1x8x32xf32> to vector<8x32xf32>
    %546 = vector.shape_cast %527 : vector<8x32xf32> to vector<1x8x32xf32>
    tpu.vector_store %arg11[%c1_153, %c0_154, %c0_155], %546 {strides = array<i32>} : memref<2x8x32xf32, #tpu.memory_space<vmem>>, vector<1x8x32xf32>,
    return
  }
}

</mosaic_0001>

<llo_original>
// kernel: lstm_drag_predictor.1
$region0: #{lstm_drag_predictor.1}
  #allocation0 [shape = 'u32[]', space=smem, size = 0x4, offset = 0x4, fixed_abs, tag = 'smem constant byte address 0x4 - core index']
  #allocation1 [shape = 'u32[144,128]{1,0:T(1,128)}', space=vmem, size = 0x12000, scoped, tag = 'internal scratch']
  %s0 = inlined_call_operand.vmem [shape: f32[8,8,32], index: 0, kind: input, shape index: {}]
  %s1 = inlined_call_operand.vmem [shape: f32[32,128], index: 1, kind: input, shape index: {}]
  %s2 = inlined_call_operand.vmem [shape: f32[32,128], index: 2, kind: input, shape index: {}]
  %s3 = inlined_call_operand.vmem [shape: f32[1,128], index: 3, kind: input, shape index: {}]
  %s4 = inlined_call_operand.vmem [shape: f32[32,128], index: 4, kind: input, shape index: {}]
  %s5 = inlined_call_operand.vmem [shape: f32[32,128], index: 5, kind: input, shape index: {}]
  %s6 = inlined_call_operand.vmem [shape: f32[1,128], index: 6, kind: input, shape index: {}]
  %s7 = inlined_call_operand.vmem [shape: f32[32,128], index: 7, kind: input, shape index: {}]
  %s8 = inlined_call_operand.vmem [shape: f32[1,128], index: 8, kind: input, shape index: {}]
  %s9 = inlined_call_operand.vmem [shape: f32[8,8,128], index: 9, kind: output, shape index: {0}]
  %s10 = inlined_call_operand.vmem [shape: f32[2,8,32], index: 10, kind: output, shape index: {1}]
  %s11 = inlined_call_operand.vmem [shape: f32[2,8,32], index: 11, kind: output, shape index: {2}]
  %12 = xla_tuple %s9, %s10, %s11
  %s13 = sld [smem:[#allocation0]]
  $region62: #{lstm_drag_predictor.1} parent=0
    _
  %s15 = ssub.s32 1, %s13
  %s16 = scalar_select 0, %s15, %s13
  // Predicated region
  $region2: #{lstm_drag_predictor.1} parent=0 // pred_check
    _
  $region3: #{lstm_drag_predictor.1} parent=0 // pred_check_branch
    %18 = sbr.rel (0) target = $region5
  $region4: #{lstm_drag_predictor.1} parent=0 // pred_region
    _
  $region5: #{lstm_drag_predictor.1} parent=0 // pred_fallthru
    _
  // Predicated region
  $region6: #{lstm_drag_predictor.1} parent=0 // pred_check
    _
  $region7: #{lstm_drag_predictor.1} parent=0 // pred_check_branch
    %20 = sbr.rel (0) target = $region9
  $region8: #{lstm_drag_predictor.1} parent=0 // pred_region
    _
  $region9: #{lstm_drag_predictor.1} parent=0 // pred_fallthru
    _
  // Predicated region
  $region10: #{lstm_drag_predictor.1} parent=0 // pred_check
    _
  $region11: #{lstm_drag_predictor.1} parent=0 // pred_check_branch
    %22 = sbr.rel (0) target = $region13
  $region12: #{lstm_drag_predictor.1} parent=0 // pred_region
    _
  $region13: #{lstm_drag_predictor.1} parent=0 // pred_fallthru
    _
  // Predicated region
  $region14: #{lstm_drag_predictor.1} parent=0 // pred_check
    _
  $region15: #{lstm_drag_predictor.1} parent=0 // pred_check_branch
    %24 = sbr.rel (0) target = $region17
  $region16: #{lstm_drag_predictor.1} parent=0 // pred_region
    _
  $region17: #{lstm_drag_predictor.1} parent=0 // pred_fallthru
    _
  // Predicated region
  $region18: #{lstm_drag_predictor.1} parent=0 // pred_check
    _
  $region19: #{lstm_drag_predictor.1} parent=0 // pred_check_branch
    %26 = sbr.rel (0) target = $region21
  $region20: #{lstm_drag_predictor.1} parent=0 // pred_region
    _
  $region21: #{lstm_drag_predictor.1} parent=0 // pred_fallthru
    _
  // Predicated region
  $region22: #{lstm_drag_predictor.1} parent=0 // pred_check
    _
  $region23: #{lstm_drag_predictor.1} parent=0 // pred_check_branch
    %28 = sbr.rel (0) target = $region25
  $region24: #{lstm_drag_predictor.1} parent=0 // pred_region
    _
  $region25: #{lstm_drag_predictor.1} parent=0 // pred_fallthru
    _
  // Predicated region
  $region26: #{lstm_drag_predictor.1} parent=0 // pred_check
    _
  $region27: #{lstm_drag_predictor.1} parent=0 // pred_check_branch
    %30 = sbr.rel (0) target = $region29
  $region28: #{lstm_drag_predictor.1} parent=0 // pred_region
    _
  $region29: #{lstm_drag_predictor.1} parent=0 // pred_fallthru
    _
  // Predicated region
  $region30: #{lstm_drag_predictor.1} parent=0 // pred_check
    _
  $region31: #{lstm_drag_predictor.1} parent=0 // pred_check_branch
    %32 = sbr.rel (0) target = $region33
  $region32: #{lstm_drag_predictor.1} parent=0 // pred_region
    _
  $region33: #{lstm_drag_predictor.1} parent=0 // pred_fallthru
    _
  // Predicated region
  $region34: #{lstm_drag_predictor.1} parent=0 // pred_check
    _
  $region35: #{lstm_drag_predictor.1} parent=0 // pred_check_branch
    %34 = sbr.rel (0) target = $region37
  $region36: #{lstm_drag_predictor.1} parent=0 // pred_region
    _
  $region37: #{lstm_drag_predictor.1} parent=0 // pred_fallthru
    _
  %v35 = vld [vmem:[%s1] sm:$0xff]
  %v36 = vld [vmem:[%s1 + $0x8] sm:$0xff]
  %v37 = vld [vmem:[%s1 + $0x10] sm:$0xff]
  %v38 = vld [vmem:[%s1 + $0x18] sm:$0xff]
  %v39 = vld [vmem:[%s2] sm:$0xff]
  %v40 = vld [vmem:[%s2 + $0x8] sm:$0xff]
  %v41 = vld [vmem:[%s2 + $0x10] sm:$0xff]
  %v42 = vld [vmem:[%s2 + $0x18] sm:$0xff]
  %v43 = vld [vmem:[%s3] sm:$0x1]
  %v45 = vlaneseq
  %v46 = vshrl.u32 %v45, 7
  %v47 = vsub.s32 0, %v46
  %v48 = vrot.slane %v43, %v47
  %v50 = vld [vmem:[%s4] sm:$0xff]
  %v51 = vld [vmem:[%s4 + $0x8] sm:$0xff]
  %v52 = vld [vmem:[%s4 + $0x10] sm:$0xff]
  %v53 = vld [vmem:[%s4 + $0x18] sm:$0xff]
  %v54 = vld [vmem:[%s5] sm:$0xff]
  %v55 = vld [vmem:[%s5 + $0x8] sm:$0xff]
  %v56 = vld [vmem:[%s5 + $0x10] sm:$0xff]
  %v57 = vld [vmem:[%s5 + $0x18] sm:$0xff]
  %v58 = vld [vmem:[%s6] sm:$0x1]
  %v60 = vlaneseq
  %v61 = vshrl.u32 %v60, 7
  %v62 = vsub.s32 0, %v61
  %v63 = vrot.slane %v58, %v62
  %v65 = vld [vmem:[%s7] sm:$0xff]
  %v66 = vld [vmem:[%s7 + $0x8] sm:$0xff]
  %v67 = vld [vmem:[%s7 + $0x10] sm:$0xff]
  %v68 = vld [vmem:[%s7 + $0x18] sm:$0xff]
  %v69 = vld [vmem:[%s8] sm:$0x1]
  %v71 = vlaneseq
  %v72 = vshrl.u32 %v71, 7
  %v73 = vsub.s32 0, %v72
  %v74 = vrot.slane %v69, %v73
  %v76 = vld [vmem:[%s0] sm:$0xff]
  %vm77 = vcmask 261120
  %v79 = vsel %vm77, 0.0, 0
  %81 = vmatprep.subr.mxu0 0.0
  %82 = vmatpush1.msra.mxu0 0.0
  %83 = vmatprep.subr.mxu0 0.0
  %84 = vmatpush1.msra.mxu0 0.0
  %85 = vmatprep.subr.mxu0 0.0
  %86 = vmatpush1.msra.mxu0 0.0
  %87 = vmatprep.subr.mxu0 0.0
  %88 = vmatpush1.msra.mxu0 0.0
  %89 = vmatprep.subr.mxu0 0.0
  %90 = vmatpush1.msra.mxu0 0.0
  %91 = vmatprep.subr.mxu0 0.0
  %92 = vmatpush1.msra.mxu0 0.0
  %93 = vmatprep.subr.mxu0 0.0
  %94 = vmatpush1.msra.mxu0 0.0
  %95 = vmatprep.subr.mxu0 0.0
  %96 = vmatpush1.msra.mxu0 0.0
  %97 = vmatprep.subr.mxu0 0.0
  %98 = vmatpush1.msra.mxu0 0.0
  %99 = vmatprep.subr.mxu0 0.0
  %100 = vmatpush1.msra.mxu0 0.0
  %101 = vmatprep.subr.mxu0 0.0
  %102 = vmatpush1.msra.mxu0 0.0
  %103 = vmatprep.subr.mxu0 0.0
  %104 = vmatpush1.msra.mxu0 0.0
  %105 = vmatprep.subr.mxu0 0.0
  %106 = vmatpush1.msra.mxu0 %v42
  %107 = vmatprep.subr.mxu0 0.0
  %108 = vmatpush1.msra.mxu0 %v41
  %109 = vmatprep.subr.mxu0 0.0
  %110 = vmatpush1.msra.mxu0 %v40
  %111 = vmatprep.subr.mxu0 0.0
  %112 = vmatpush1.msra.mxu0 %v39
  %113 = vmatprep.subr.mxu0 0.0
  %114 = vmatpush2.msra.mxu0 0.0
  %115 = vmatprep.subr.mxu0 0.0
  %116 = vmatpush2.msra.mxu0 0.0
  %117 = vmatprep.subr.mxu0 0.0
  %118 = vmatpush2.msra.mxu0 0.0
  %119 = vmatprep.subr.mxu0 0.0
  %120 = vmatpush2.msra.mxu0 0.0
  %121 = vmatprep.subr.mxu0 0.0
  %122 = vmatpush2.msra.mxu0 0.0
  %123 = vmatprep.subr.mxu0 0.0
  %124 = vmatpush2.msra.mxu0 0.0
  %125 = vmatprep.subr.mxu0 0.0
  %126 = vmatpush2.msra.mxu0 0.0
  %127 = vmatprep.subr.mxu0 0.0
  %128 = vmatpush2.msra.mxu0 0.0
  %129 = vmatprep.subr.mxu0 0.0
  %130 = vmatpush2.msra.mxu0 0.0
  %131 = vmatprep.subr.mxu0 0.0
  %132 = vmatpush2.msra.mxu0 0.0
  %133 = vmatprep.subr.mxu0 0.0
  %134 = vmatpush2.msra.mxu0 0.0
  %135 = vmatprep.subr.mxu0 0.0
  %136 = vmatpush2.msra.mxu0 0.0
  %137 = vmatprep.subr.mxu0 0.0
  %138 = vmatpush2.msra.mxu0 0.0
  %139 = vmatprep.subr.mxu0 0.0
  %140 = vmatpush2.msra.mxu0 0.0
  %141 = vmatprep.subr.mxu0 0.0
  %142 = vmatpush2.msra.mxu0 0.0
  %143 = vmatprep.subr.mxu0 0.0
  %144 = vmatpush2.msra.mxu0 0.0
  %145 = vmatprep.mubr.f32.mxu0 0.0
  %146 = vmatmul.mubr.f32.gmra.mxu0 %v79
  %v147 = vpop.f32.mrf.mxu0
  %v148 = vadd.f32 0.0, %v147
  %v149 = vpop.f32.mrf.mxu0
  %150 = vdwg.mxu0
  %v152 = vsel %vm77, %v76, 0
  %154 = vmatprep.subr.mxu0 0.0
  %155 = vmatpush1.msra.mxu0 0.0
  %156 = vmatprep.subr.mxu0 0.0
  %157 = vmatpush1.msra.mxu0 0.0
  %158 = vmatprep.subr.mxu0 0.0
  %159 = vmatpush1.msra.mxu0 0.0
  %160 = vmatprep.subr.mxu0 0.0
  %161 = vmatpush1.msra.mxu0 0.0
  %162 = vmatprep.subr.mxu0 0.0
  %163 = vmatpush1.msra.mxu0 0.0
  %164 = vmatprep.subr.mxu0 0.0
  %165 = vmatpush1.msra.mxu0 0.0
  %166 = vmatprep.subr.mxu0 0.0
  %167 = vmatpush1.msra.mxu0 0.0
  %168 = vmatprep.subr.mxu0 0.0
  %169 = vmatpush1.msra.mxu0 0.0
  %170 = vmatprep.subr.mxu0 0.0
  %171 = vmatpush1.msra.mxu0 0.0
  %172 = vmatprep.subr.mxu0 0.0
  %173 = vmatpush1.msra.mxu0 0.0
  %174 = vmatprep.subr.mxu0 0.0
  %175 = vmatpush1.msra.mxu0 0.0
  %176 = vmatprep.subr.mxu0 0.0
  %177 = vmatpush1.msra.mxu0 0.0
  %178 = vmatprep.subr.mxu0 0.0
  %179 = vmatpush1.msra.mxu0 %v38
  %180 = vmatprep.subr.mxu0 0.0
  %181 = vmatpush1.msra.mxu0 %v37
  %182 = vmatprep.subr.mxu0 0.0
  %183 = vmatpush1.msra.mxu0 %v36
  %184 = vmatprep.subr.mxu0 0.0
  %185 = vmatpush1.msra.mxu0 %v35
  %186 = vmatprep.subr.mxu0 0.0
  %187 = vmatpush2.msra.mxu0 0.0
  %188 = vmatprep.subr.mxu0 0.0
  %189 = vmatpush2.msra.mxu0 0.0
  %190 = vmatprep.subr.mxu0 0.0
  %191 = vmatpush2.msra.mxu0 0.0
  %192 = vmatprep.subr.mxu0 0.0
  %193 = vmatpush2.msra.mxu0 0.0
  %194 = vmatprep.subr.mxu0 0.0
  %195 = vmatpush2.msra.mxu0 0.0
  %196 = vmatprep.subr.mxu0 0.0
  %197 = vmatpush2.msra.mxu0 0.0
  %198 = vmatprep.subr.mxu0 0.0
  %199 = vmatpush2.msra.mxu0 0.0
  %200 = vmatprep.subr.mxu0 0.0
  %201 = vmatpush2.msra.mxu0 0.0
  %202 = vmatprep.subr.mxu0 0.0
  %203 = vmatpush2.msra.mxu0 0.0
  %204 = vmatprep.subr.mxu0 0.0
  %205 = vmatpush2.msra.mxu0 0.0
  %206 = vmatprep.subr.mxu0 0.0
  %207 = vmatpush2.msra.mxu0 0.0
  %208 = vmatprep.subr.mxu0 0.0
  %209 = vmatpush2.msra.mxu0 0.0
  %210 = vmatprep.subr.mxu0 0.0
  %211 = vmatpush2.msra.mxu0 0.0
  %212 = vmatprep.subr.mxu0 0.0
  %213 = vmatpush2.msra.mxu0 0.0
  %214 = vmatprep.subr.mxu0 0.0
  %215 = vmatpush2.msra.mxu0 0.0
  %216 = vmatprep.subr.mxu0 0.0
  %217 = vmatpush2.msra.mxu0 0.0
  %218 = vmatprep.mubr.f32.mxu0 0.0
  %219 = vmatmul.mubr.f32.gmra.mxu0 %v152
  %v220 = vpop.f32.mrf.mxu0
  %v221 = vadd.f32 %v148, %v220
  %v222 = vpop.f32.mrf.mxu0
  %223 = vdwg.mxu0
  %v224 = vadd.f32 %v221, %v48
  %v225 = vxor.u32 %v224, 2147483648
  %v226 = vmul.f32 %v225, 1.442695
  %v227 = vpow.pop %v226
  %v228 = vadd.f32 %v227, 1.0
  %v229 = vrcp.pop %v228
  %v230 = vmul.f32 1.0, %v229
  %v231 = vtanh.pop %v224
  %v232 = vmul.f32 %v230, 0.0
  %234 = vrot.lane.b32.xlu0 %v231, 64
  %v235 = vpop.permute.xlu0 %234
  %v237 = vmul.f32 %v230, %v235
  %239 = vrot.lane.b32.xlu0 %v237, 32
  %v240 = vpop.permute.xlu0 %239
  %v242 = vadd.f32 %v232, %v240
  %v243 = vtanh.pop %v242
  %245 = vrot.lane.b32.xlu0 %v243, 64
  %v246 = vpop.permute.xlu0 %245
  %v248 = vmul.f32 %v230, %v246
  %249 = vmatprep.subr.mxu0 0.0
  %250 = vmatpush1.msra.mxu0 0.0
  %251 = vmatprep.subr.mxu0 0.0
  %252 = vmatpush1.msra.mxu0 0.0
  %253 = vmatprep.subr.mxu0 0.0
  %254 = vmatpush1.msra.mxu0 0.0
  %255 = vmatprep.subr.mxu0 0.0
  %256 = vmatpush1.msra.mxu0 0.0
  %257 = vmatprep.subr.mxu0 0.0
  %258 = vmatpush1.msra.mxu0 0.0
  %259 = vmatprep.subr.mxu0 0.0
  %260 = vmatpush1.msra.mxu0 0.0
  %261 = vmatprep.subr.mxu0 0.0
  %262 = vmatpush1.msra.mxu0 0.0
  %263 = vmatprep.subr.mxu0 0.0
  %264 = vmatpush1.msra.mxu0 0.0
  %265 = vmatprep.subr.mxu0 0.0
  %266 = vmatpush1.msra.mxu0 0.0
  %267 = vmatprep.subr.mxu0 0.0
  %268 = vmatpush1.msra.mxu0 0.0
  %269 = vmatprep.subr.mxu0 0.0
  %270 = vmatpush1.msra.mxu0 0.0
  %271 = vmatprep.subr.mxu0 0.0
  %272 = vmatpush1.msra.mxu0 0.0
  %273 = vmatprep.subr.mxu0 0.0
  %274 = vmatpush1.msra.mxu0 %v57
  %275 = vmatprep.subr.mxu0 0.0
  %276 = vmatpush1.msra.mxu0 %v56
  %277 = vmatprep.subr.mxu0 0.0
  %278 = vmatpush1.msra.mxu0 %v55
  %279 = vmatprep.subr.mxu0 0.0
  %280 = vmatpush1.msra.mxu0 %v54
  %281 = vmatprep.subr.mxu0 0.0
  %282 = vmatpush2.msra.mxu0 0.0
  %283 = vmatprep.subr.mxu0 0.0
  %284 = vmatpush2.msra.mxu0 0.0
  %285 = vmatprep.subr.mxu0 0.0
  %286 = vmatpush2.msra.mxu0 0.0
  %287 = vmatprep.subr.mxu0 0.0
  %288 = vmatpush2.msra.mxu0 0.0
  %289 = vmatprep.subr.mxu0 0.0
  %290 = vmatpush2.msra.mxu0 0.0
  %291 = vmatprep.subr.mxu0 0.0
  %292 = vmatpush2.msra.mxu0 0.0
  %293 = vmatprep.subr.mxu0 0.0
  %294 = vmatpush2.msra.mxu0 0.0
  %295 = vmatprep.subr.mxu0 0.0
  %296 = vmatpush2.msra.mxu0 0.0
  %297 = vmatprep.subr.mxu0 0.0
  %298 = vmatpush2.msra.mxu0 0.0
  %299 = vmatprep.subr.mxu0 0.0
  %300 = vmatpush2.msra.mxu0 0.0
  %301 = vmatprep.subr.mxu0 0.0
  %302 = vmatpush2.msra.mxu0 0.0
  %303 = vmatprep.subr.mxu0 0.0
  %304 = vmatpush2.msra.mxu0 0.0
  %305 = vmatprep.subr.mxu0 0.0
  %306 = vmatpush2.msra.mxu0 0.0
  %307 = vmatprep.subr.mxu0 0.0
  %308 = vmatpush2.msra.mxu0 0.0
  %309 = vmatprep.subr.mxu0 0.0
  %310 = vmatpush2.msra.mxu0 0.0
  %311 = vmatprep.subr.mxu0 0.0
  %312 = vmatpush2.msra.mxu0 0.0
  %313 = vmatprep.mubr.f32.mxu0 0.0
  %314 = vmatmul.mubr.f32.gmra.mxu0 %v79
  %v315 = vpop.f32.mrf.mxu0
  %v316 = vadd.f32 0.0, %v315
  %v317 = vpop.f32.mrf.mxu0
  %318 = vdwg.mxu0
  %320 = vrot.lane.b32.xlu0 %v248, 32
  %v321 = vpop.permute.xlu0 %320
  %v322 = vsel %vm77, %v321, 0
  %324 = vmatprep.subr.mxu0 0.0
  %325 = vmatpush1.msra.mxu0 0.0
  %326 = vmatprep.subr.mxu0 0.0
  %327 = vmatpush1.msra.mxu0 0.0
  %328 = vmatprep.subr.mxu0 0.0
  %329 = vmatpush1.msra.mxu0 0.0
  %330 = vmatprep.subr.mxu0 0.0
  %331 = vmatpush1.msra.mxu0 0.0
  %332 = vmatprep.subr.mxu0 0.0
  %333 = vmatpush1.msra.mxu0 0.0
  %334 = vmatprep.subr.mxu0 0.0
  %335 = vmatpush1.msra.mxu0 0.0
  %336 = vmatprep.subr.mxu0 0.0
  %337 = vmatpush1.msra.mxu0 0.0
  %338 = vmatprep.subr.mxu0 0.0
  %339 = vmatpush1.msra.mxu0 0.0
  %340 = vmatprep.subr.mxu0 0.0
  %341 = vmatpush1.msra.mxu0 0.0
  %342 = vmatprep.subr.mxu0 0.0
  %343 = vmatpush1.msra.mxu0 0.0
  %344 = vmatprep.subr.mxu0 0.0
  %345 = vmatpush1.msra.mxu0 0.0
  %346 = vmatprep.subr.mxu0 0.0
  %347 = vmatpush1.msra.mxu0 0.0
  %348 = vmatprep.subr.mxu0 0.0
  %349 = vmatpush1.msra.mxu0 %v53
  %350 = vmatprep.subr.mxu0 0.0
  %351 = vmatpush1.msra.mxu0 %v52
  %352 = vmatprep.subr.mxu0 0.0
  %353 = vmatpush1.msra.mxu0 %v51
  %354 = vmatprep.subr.mxu0 0.0
  %355 = vmatpush1.msra.mxu0 %v50
  %356 = vmatprep.subr.mxu0 0.0
  %357 = vmatpush2.msra.mxu0 0.0
  %358 = vmatprep.subr.mxu0 0.0
  %359 = vmatpush2.msra.mxu0 0.0
  %360 = vmatprep.subr.mxu0 0.0
  %361 = vmatpush2.msra.mxu0 0.0
  %362 = vmatprep.subr.mxu0 0.0
  %363 = vmatpush2.msra.mxu0 0.0
  %364 = vmatprep.subr.mxu0 0.0
  %365 = vmatpush2.msra.mxu0 0.0
  %366 = vmatprep.subr.mxu0 0.0
  %367 = vmatpush2.msra.mxu0 0.0
  %368 = vmatprep.subr.mxu0 0.0
  %369 = vmatpush2.msra.mxu0 0.0
  %370 = vmatprep.subr.mxu0 0.0
  %371 = vmatpush2.msra.mxu0 0.0
  %372 = vmatprep.subr.mxu0 0.0
  %373 = vmatpush2.msra.mxu0 0.0
  %374 = vmatprep.subr.mxu0 0.0
  %375 = vmatpush2.msra.mxu0 0.0
  %376 = vmatprep.subr.mxu0 0.0
  %377 = vmatpush2.msra.mxu0 0.0
  %378 = vmatprep.subr.mxu0 0.0
  %379 = vmatpush2.msra.mxu0 0.0
  %380 = vmatprep.subr.mxu0 0.0
  %381 = vmatpush2.msra.mxu0 0.0
  %382 = vmatprep.subr.mxu0 0.0
  %383 = vmatpush2.msra.mxu0 0.0
  %384 = vmatprep.subr.mxu0 0.0
  %385 = vmatpush2.msra.mxu0 0.0
  %386 = vmatprep.subr.mxu0 0.0
  %387 = vmatpush2.msra.mxu0 0.0
  %388 = vmatprep.mubr.f32.mxu0 0.0
  %389 = vmatmul.mubr.f32.gmra.mxu0 %v322
  %v390 = vpop.f32.mrf.mxu0
  %v391 = vadd.f32 %v316, %v390
  %v392 = vpop.f32.mrf.mxu0
  %393 = vdwg.mxu0
  %v394 = vadd.f32 %v391, %v63
  %v395 = vxor.u32 %v394, 2147483648
  %v396 = vmul.f32 %v395, 1.442695
  %v397 = vpow.pop %v396
  %v398 = vadd.f32 %v397, 1.0
  %v399 = vrcp.pop %v398
  %v400 = vmul.f32 1.0, %v399
  %v401 = vtanh.pop %v394
  %v402 = vmul.f32 %v400, 0.0
  %404 = vrot.lane.b32.xlu0 %v401, 64
  %v405 = vpop.permute.xlu0 %404
  %v407 = vmul.f32 %v400, %v405
  %409 = vrot.lane.b32.xlu0 %v407, 32
  %v410 = vpop.permute.xlu0 %409
  %v412 = vadd.f32 %v402, %v410
  %v413 = vtanh.pop %v412
  %415 = vrot.lane.b32.xlu0 %v413, 64
  %v416 = vpop.permute.xlu0 %415
  %v418 = vmul.f32 %v400, %v416
  %420 = vrot.lane.b32.xlu0 %v418, 32
  %v421 = vpop.permute.xlu0 %420
  %v422 = vsel %vm77, %v421, 0
  %424 = vmatprep.subr.mxu0 0.0
  %425 = vmatpush1.msra.mxu0 0.0
  %426 = vmatprep.subr.mxu0 0.0
  %427 = vmatpush1.msra.mxu0 0.0
  %428 = vmatprep.subr.mxu0 0.0
  %429 = vmatpush1.msra.mxu0 0.0
  %430 = vmatprep.subr.mxu0 0.0
  %431 = vmatpush1.msra.mxu0 0.0
  %432 = vmatprep.subr.mxu0 0.0
  %433 = vmatpush1.msra.mxu0 0.0
  %434 = vmatprep.subr.mxu0 0.0
  %435 = vmatpush1.msra.mxu0 0.0
  %436 = vmatprep.subr.mxu0 0.0
  %437 = vmatpush1.msra.mxu0 0.0
  %438 = vmatprep.subr.mxu0 0.0
  %439 = vmatpush1.msra.mxu0 0.0
  %440 = vmatprep.subr.mxu0 0.0
  %441 = vmatpush1.msra.mxu0 0.0
  %442 = vmatprep.subr.mxu0 0.0
  %443 = vmatpush1.msra.mxu0 0.0
  %444 = vmatprep.subr.mxu0 0.0
  %445 = vmatpush1.msra.mxu0 0.0
  %446 = vmatprep.subr.mxu0 0.0
  %447 = vmatpush1.msra.mxu0 0.0
  %448 = vmatprep.subr.mxu0 0.0
  %449 = vmatpush1.msra.mxu0 %v68
  %450 = vmatprep.subr.mxu0 0.0
  %451 = vmatpush1.msra.mxu0 %v67
  %452 = vmatprep.subr.mxu0 0.0
  %453 = vmatpush1.msra.mxu0 %v66
  %454 = vmatprep.subr.mxu0 0.0
  %455 = vmatpush1.msra.mxu0 %v65
  %456 = vmatprep.subr.mxu0 0.0
  %457 = vmatpush2.msra.mxu0 0.0
  %458 = vmatprep.subr.mxu0 0.0
  %459 = vmatpush2.msra.mxu0 0.0
  %460 = vmatprep.subr.mxu0 0.0
  %461 = vmatpush2.msra.mxu0 0.0
  %462 = vmatprep.subr.mxu0 0.0
  %463 = vmatpush2.msra.mxu0 0.0
  %464 = vmatprep.subr.mxu0 0.0
  %465 = vmatpush2.msra.mxu0 0.0
  %466 = vmatprep.subr.mxu0 0.0
  %467 = vmatpush2.msra.mxu0 0.0
  %468 = vmatprep.subr.mxu0 0.0
  %469 = vmatpush2.msra.mxu0 0.0
  %470 = vmatprep.subr.mxu0 0.0
  %471 = vmatpush2.msra.mxu0 0.0
  %472 = vmatprep.subr.mxu0 0.0
  %473 = vmatpush2.msra.mxu0 0.0
  %474 = vmatprep.subr.mxu0 0.0
  %475 = vmatpush2.msra.mxu0 0.0
  %476 = vmatprep.subr.mxu0 0.0
  %477 = vmatpush2.msra.mxu0 0.0
  %478 = vmatprep.subr.mxu0 0.0
  %479 = vmatpush2.msra.mxu0 0.0
  %480 = vmatprep.subr.mxu0 0.0
  %481 = vmatpush2.msra.mxu0 0.0
  %482 = vmatprep.subr.mxu0 0.0
  %483 = vmatpush2.msra.mxu0 0.0
  %484 = vmatprep.subr.mxu0 0.0
  %485 = vmatpush2.msra.mxu0 0.0
  %486 = vmatprep.subr.mxu0 0.0
  %487 = vmatpush2.msra.mxu0 0.0
  %488 = vmatprep.mubr.f32.mxu0 0.0
  %489 = vmatmul.mubr.f32.gmra.mxu0 %v422
  %v490 = vpop.f32.mrf.mxu0
  %v491 = vadd.f32 %v74, %v490
  %v492 = vpop.f32.mrf.mxu0
  %493 = vdwg.mxu0
  %494 = vst [vmem:[%s9] sm:$0xff] %v491
  %s495 = scalar_lea.vmem %s0, 8
  %v496 = vld [vmem:[%s495] sm:$0xff]
  %497 = vmatprep.subr.mxu0 0.0
  %498 = vmatpush1.msra.mxu0 0.0
  %499 = vmatprep.subr.mxu0 0.0
  %500 = vmatpush1.msra.mxu0 0.0
  %501 = vmatprep.subr.mxu0 0.0
  %502 = vmatpush1.msra.mxu0 0.0
  %503 = vmatprep.subr.mxu0 0.0
  %504 = vmatpush1.msra.mxu0 0.0
  %505 = vmatprep.subr.mxu0 0.0
  %506 = vmatpush1.msra.mxu0 0.0
  %507 = vmatprep.subr.mxu0 0.0
  %508 = vmatpush1.msra.mxu0 0.0
  %509 = vmatprep.subr.mxu0 0.0
  %510 = vmatpush1.msra.mxu0 0.0
  %511 = vmatprep.subr.mxu0 0.0
  %512 = vmatpush1.msra.mxu0 0.0
  %513 = vmatprep.subr.mxu0 0.0
  %514 = vmatpush1.msra.mxu0 0.0
  %515 = vmatprep.subr.mxu0 0.0
  %516 = vmatpush1.msra.mxu0 0.0
  %517 = vmatprep.subr.mxu0 0.0
  %518 = vmatpush1.msra.mxu0 0.0
  %519 = vmatprep.subr.mxu0 0.0
  %520 = vmatpush1.msra.mxu0 0.0
  %521 = vmatprep.subr.mxu0 0.0
  %522 = vmatpush1.msra.mxu0 %v42
  %523 = vmatprep.subr.mxu0 0.0
  %524 = vmatpush1.msra.mxu0 %v41
  %525 = vmatprep.subr.mxu0 0.0
  %526 = vmatpush1.msra.mxu0 %v40
  %527 = vmatprep.subr.mxu0 0.0
  %528 = vmatpush1.msra.mxu0 %v39
  %529 = vmatprep.subr.mxu0 0.0
  %530 = vmatpush2.msra.mxu0 0.0
  %531 = vmatprep.subr.mxu0 0.0
  %532 = vmatpush2.msra.mxu0 0.0
  %533 = vmatprep.subr.mxu0 0.0
  %534 = vmatpush2.msra.mxu0 0.0
  %535 = vmatprep.subr.mxu0 0.0
  %536 = vmatpush2.msra.mxu0 0.0
  %537 = vmatprep.subr.mxu0 0.0
  %538 = vmatpush2.msra.mxu0 0.0
  %539 = vmatprep.subr.mxu0 0.0
  %540 = vmatpush2.msra.mxu0 0.0
  %541 = vmatprep.subr.mxu0 0.0
  %542 = vmatpush2.msra.mxu0 0.0
  %543 = vmatprep.subr.mxu0 0.0
  %544 = vmatpush2.msra.mxu0 0.0
  %545 = vmatprep.subr.mxu0 0.0
  %546 = vmatpush2.msra.mxu0 0.0
  %547 = vmatprep.subr.mxu0 0.0
  %548 = vmatpush2.msra.mxu0 0.0
  %549 = vmatprep.subr.mxu0 0.0
  %550 = vmatpush2.msra.mxu0 0.0
  %551 = vmatprep.subr.mxu0 0.0
  %552 = vmatpush2.msra.mxu0 0.0
  %553 = vmatprep.subr.mxu0 0.0
  %554 = vmatpush2.msra.mxu0 0.0
  %555 = vmatprep.subr.mxu0 0.0
  %556 = vmatpush2.msra.mxu0 0.0
  %557 = vmatprep.subr.mxu0 0.0
  %558 = vmatpush2.msra.mxu0 0.0
  %559 = vmatprep.subr.mxu0 0.0
  %560 = vmatpush2.msra.mxu0 0.0
  %561 = vmatprep.mubr.f32.mxu0 0.0
  %562 = vmatmul.mubr.f32.gmra.mxu0 %v322
  %v563 = vpop.f32.mrf.mxu0
  %v564 = vadd.f32 0.0, %v563
  %v565 = vpop.f32.mrf.mxu0
  %566 = vdwg.mxu0
  %v568 = vsel %vm77, %v496, 0
  %570 = vmatprep.subr.mxu0 0.0
  %571 = vmatpush1.msra.mxu0 0.0
  %572 = vmatprep.subr.mxu0 0.0
  %573 = vmatpush1.msra.mxu0 0.0
  %574 = vmatprep.subr.mxu0 0.0
  %575 = vmatpush1.msra.mxu0 0.0
  %576 = vmatprep.subr.mxu0 0.0
  %577 = vmatpush1.msra.mxu0 0.0
  %578 = vmatprep.subr.mxu0 0.0
  %579 = vmatpush1.msra.mxu0 0.0
  %580 = vmatprep.subr.mxu0 0.0
  %581 = vmatpush1.msra.mxu0 0.0
  %582 = vmatprep.subr.mxu0 0.0
  %583 = vmatpush1.msra.mxu0 0.0
  %584 = vmatprep.subr.mxu0 0.0
  %585 = vmatpush1.msra.mxu0 0.0
  %586 = vmatprep.subr.mxu0 0.0
  %587 = vmatpush1.msra.mxu0 0.0
  %588 = vmatprep.subr.mxu0 0.0
  %589 = vmatpush1.msra.mxu0 0.0
  %590 = vmatprep.subr.mxu0 0.0
  %591 = vmatpush1.msra.mxu0 0.0
  %592 = vmatprep.subr.mxu0 0.0
  %593 = vmatpush1.msra.mxu0 0.0
  %594 = vmatprep.subr.mxu0 0.0
  %595 = vmatpush1.msra.mxu0 %v38
  %596 = vmatprep.subr.mxu0 0.0
  %597 = vmatpush1.msra.mxu0 %v37
  %598 = vmatprep.subr.mxu0 0.0
  %599 = vmatpush1.msra.mxu0 %v36
  %600 = vmatprep.subr.mxu0 0.0
  %601 = vmatpush1.msra.mxu0 %v35
  %602 = vmatprep.subr.mxu0 0.0
  %603 = vmatpush2.msra.mxu0 0.0
  %604 = vmatprep.subr.mxu0 0.0
  %605 = vmatpush2.msra.mxu0 0.0
  %606 = vmatprep.subr.mxu0 0.0
  %607 = vmatpush2.msra.mxu0 0.0
  %608 = vmatprep.subr.mxu0 0.0
  %609 = vmatpush2.msra.mxu0 0.0
  %610 = vmatprep.subr.mxu0 0.0
  %611 = vmatpush2.msra.mxu0 0.0
  %612 = vmatprep.subr.mxu0 0.0
  %613 = vmatpush2.msra.mxu0 0.0
  %614 = vmatprep.subr.mxu0 0.0
  %615 = vmatpush2.msra.mxu0 0.0
  %616 = vmatprep.subr.mxu0 0.0
  %617 = vmatpush2.msra.mxu0 0.0
  %618 = vmatprep.subr.mxu0 0.0
  %619 = vmatpush2.msra.mxu0 0.0
  %620 = vmatprep.subr.mxu0 0.0
  %621 = vmatpush2.msra.mxu0 0.0
  %622 = vmatprep.subr.mxu0 0.0
  %623 = vmatpush2.msra.mxu0 0.0
  %624 = vmatprep.subr.mxu0 0.0
  %625 = vmatpush2.msra.mxu0 0.0
  %626 = vmatprep.subr.mxu0 0.0
  %627 = vmatpush2.msra.mxu0 0.0
  %628 = vmatprep.subr.mxu0 0.0
  %629 = vmatpush2.msra.mxu0 0.0
  %630 = vmatprep.subr.mxu0 0.0
  %631 = vmatpush2.msra.mxu0 0.0
  %632 = vmatprep.subr.mxu0 0.0
  %633 = vmatpush2.msra.mxu0 0.0
  %634 = vmatprep.mubr.f32.mxu0 0.0
  %635 = vmatmul.mubr.f32.gmra.mxu0 %v568
  %v636 = vpop.f32.mrf.mxu0
  %v637 = vadd.f32 %v564, %v636
  %v638 = vpop.f32.mrf.mxu0
  %639 = vdwg.mxu0
  %v640 = vadd.f32 %v637, %v48
  %v641 = vxor.u32 %v640, 2147483648
  %v642 = vmul.f32 %v641, 1.442695
  %v643 = vpow.pop %v642
  %v644 = vadd.f32 %v643, 1.0
  %v645 = vrcp.pop %v644
  %v646 = vmul.f32 1.0, %v645
  %v647 = vtanh.pop %v640
  %v648 = vmul.f32 %v646, %v242
  %650 = vrot.lane.b32.xlu0 %v647, 64
  %v651 = vpop.permute.xlu0 %650
  %v653 = vmul.f32 %v646, %v651
  %655 = vrot.lane.b32.xlu0 %v653, 32
  %v656 = vpop.permute.xlu0 %655
  %v658 = vadd.f32 %v648, %v656
  %v659 = vtanh.pop %v658
  %661 = vrot.lane.b32.xlu0 %v659, 64
  %v662 = vpop.permute.xlu0 %661
  %v664 = vmul.f32 %v646, %v662
  %665 = vmatprep.subr.mxu0 0.0
  %666 = vmatpush1.msra.mxu0 0.0
  %667 = vmatprep.subr.mxu0 0.0
  %668 = vmatpush1.msra.mxu0 0.0
  %669 = vmatprep.subr.mxu0 0.0
  %670 = vmatpush1.msra.mxu0 0.0
  %671 = vmatprep.subr.mxu0 0.0
  %672 = vmatpush1.msra.mxu0 0.0
  %673 = vmatprep.subr.mxu0 0.0
  %674 = vmatpush1.msra.mxu0 0.0
  %675 = vmatprep.subr.mxu0 0.0
  %676 = vmatpush1.msra.mxu0 0.0
  %677 = vmatprep.subr.mxu0 0.0
  %678 = vmatpush1.msra.mxu0 0.0
  %679 = vmatprep.subr.mxu0 0.0
  %680 = vmatpush1.msra.mxu0 0.0
  %681 = vmatprep.subr.mxu0 0.0
  %682 = vmatpush1.msra.mxu0 0.0
  %683 = vmatprep.subr.mxu0 0.0
  %684 = vmatpush1.msra.mxu0 0.0
  %685 = vmatprep.subr.mxu0 0.0
  %686 = vmatpush1.msra.mxu0 0.0
  %687 = vmatprep.subr.mxu0 0.0
  %688 = vmatpush1.msra.mxu0 0.0
  %689 = vmatprep.subr.mxu0 0.0
  %690 = vmatpush1.msra.mxu0 %v57
  %691 = vmatprep.subr.mxu0 0.0
  %692 = vmatpush1.msra.mxu0 %v56
  %693 = vmatprep.subr.mxu0 0.0
  %694 = vmatpush1.msra.mxu0 %v55
  %695 = vmatprep.subr.mxu0 0.0
  %696 = vmatpush1.msra.mxu0 %v54
  %697 = vmatprep.subr.mxu0 0.0
  %698 = vmatpush2.msra.mxu0 0.0
  %699 = vmatprep.subr.mxu0 0.0
  %700 = vmatpush2.msra.mxu0 0.0
  %701 = vmatprep.subr.mxu0 0.0
  %702 = vmatpush2.msra.mxu0 0.0
  %703 = vmatprep.subr.mxu0 0.0
  %704 = vmatpush2.msra.mxu0 0.0
  %705 = vmatprep.subr.mxu0 0.0
  %706 = vmatpush2.msra.mxu0 0.0
  %707 = vmatprep.subr.mxu0 0.0
  %708 = vmatpush2.msra.mxu0 0.0
  %709 = vmatprep.subr.mxu0 0.0
  %710 = vmatpush2.msra.mxu0 0.0
  %711 = vmatprep.subr.mxu0 0.0
  %712 = vmatpush2.msra.mxu0 0.0
  %713 = vmatprep.subr.mxu0 0.0
  %714 = vmatpush2.msra.mxu0 0.0
  %715 = vmatprep.subr.mxu0 0.0
  %716 = vmatpush2.msra.mxu0 0.0
  %717 = vmatprep.subr.mxu0 0.0
  %718 = vmatpush2.msra.mxu0 0.0
  %719 = vmatprep.subr.mxu0 0.0
  %720 = vmatpush2.msra.mxu0 0.0
  %721 = vmatprep.subr.mxu0 0.0
  %722 = vmatpush2.msra.mxu0 0.0
  %723 = vmatprep.subr.mxu0 0.0
  %724 = vmatpush2.msra.mxu0 0.0
  %725 = vmatprep.subr.mxu0 0.0
  %726 = vmatpush2.msra.mxu0 0.0
  %727 = vmatprep.subr.mxu0 0.0
  %728 = vmatpush2.msra.mxu0 0.0
  %729 = vmatprep.mubr.f32.mxu0 0.0
  %730 = vmatmul.mubr.f32.gmra.mxu0 %v422
  %v731 = vpop.f32.mrf.mxu0
  %v732 = vadd.f32 0.0, %v731
  %v733 = vpop.f32.mrf.mxu0
  %734 = vdwg.mxu0
  %736 = vrot.lane.b32.xlu0 %v664, 32
  %v737 = vpop.permute.xlu0 %736
  %v738 = vsel %vm77, %v737, 0
  %740 = vmatprep.subr.mxu0 0.0
  %741 = vmatpush1.msra.mxu0 0.0
  %742 = vmatprep.subr.mxu0 0.0
  %743 = vmatpush1.msra.mxu0 0.0
  %744 = vmatprep.subr.mxu0 0.0
  %745 = vmatpush1.msra.mxu0 0.0
  %746 = vmatprep.subr.mxu0 0.0
  %747 = vmatpush1.msra.mxu0 0.0
  %748 = vmatprep.subr.mxu0 0.0
  %749 = vmatpush1.msra.mxu0 0.0
  %750 = vmatprep.subr.mxu0 0.0
  %751 = vmatpush1.msra.mxu0 0.0
  %752 = vmatprep.subr.mxu0 0.0
  %753 = vmatpush1.msra.mxu0 0.0
  %754 = vmatprep.subr.mxu0 0.0
  %755 = vmatpush1.msra.mxu0 0.0
  %756 = vmatprep.subr.mxu0 0.0
  %757 = vmatpush1.msra.mxu0 0.0
  %758 = vmatprep.subr.mxu0 0.0
  %759 = vmatpush1.msra.mxu0 0.0
  %760 = vmatprep.subr.mxu0 0.0
  %761 = vmatpush1.msra.mxu0 0.0
  %762 = vmatprep.subr.mxu0 0.0
  %763 = vmatpush1.msra.mxu0 0.0
  %764 = vmatprep.subr.mxu0 0.0
  %765 = vmatpush1.msra.mxu0 %v53
  %766 = vmatprep.subr.mxu0 0.0
  %767 = vmatpush1.msra.mxu0 %v52
  %768 = vmatprep.subr.mxu0 0.0
  %769 = vmatpush1.msra.mxu0 %v51
  %770 = vmatprep.subr.mxu0 0.0
  %771 = vmatpush1.msra.mxu0 %v50
  %772 = vmatprep.subr.mxu0 0.0
  %773 = vmatpush2.msra.mxu0 0.0
  %774 = vmatprep.subr.mxu0 0.0
  %775 = vmatpush2.msra.mxu0 0.0
  %776 = vmatprep.subr.mxu0 0.0
  %777 = vmatpush2.msra.mxu0 0.0
  %778 = vmatprep.subr.mxu0 0.0
  %779 = vmatpush2.msra.mxu0 0.0
  %780 = vmatprep.subr.mxu0 0.0
  %781 = vmatpush2.msra.mxu0 0.0
  %782 = vmatprep.subr.mxu0 0.0
  %783 = vmatpush2.msra.mxu0 0.0
  %784 = vmatprep.subr.mxu0 0.0
  %785 = vmatpush2.msra.mxu0 0.0
  %786 = vmatprep.subr.mxu0 0.0
  %787 = vmatpush2.msra.mxu0 0.0
  %788 = vmatprep.subr.mxu0 0.0
  %789 = vmatpush2.msra.mxu0 0.0
  %790 = vmatprep.subr.mxu0 0.0
  %791 = vmatpush2.msra.mxu0 0.0
  %792 = vmatprep.subr.mxu0 0.0
  %793 = vmatpush2.msra.mxu0 0.0
  %794 = vmatprep.subr.mxu0 0.0
  %795 = vmatpush2.msra.mxu0 0.0
  %796 = vmatprep.subr.mxu0 0.0
  %797 = vmatpush2.msra.mxu0 0.0
  %798 = vmatprep.subr.mxu0 0.0
  %799 = vmatpush2.msra.mxu0 0.0
  %800 = vmatprep.subr.mxu0 0.0
  %801 = vmatpush2.msra.mxu0 0.0
  %802 = vmatprep.subr.mxu0 0.0
  %803 = vmatpush2.msra.mxu0 0.0
  %804 = vmatprep.mubr.f32.mxu0 0.0
  %805 = vmatmul.mubr.f32.gmra.mxu0 %v738
  %v806 = vpop.f32.mrf.mxu0
  %v807 = vadd.f32 %v732, %v806
  %v808 = vpop.f32.mrf.mxu0
  %809 = vdwg.mxu0
  %v810 = vadd.f32 %v807, %v63
  %v811 = vxor.u32 %v810, 2147483648
  %v812 = vmul.f32 %v811, 1.442695
  %v813 = vpow.pop %v812
  %v814 = vadd.f32 %v813, 1.0
  %v815 = vrcp.pop %v814
  %v816 = vmul.f32 1.0, %v815
  %v817 = vtanh.pop %v810
  %v818 = vmul.f32 %v816, %v412
  %820 = vrot.lane.b32.xlu0 %v817, 64
  %v821 = vpop.permute.xlu0 %820
  %v823 = vmul.f32 %v816, %v821
  %825 = vrot.lane.b32.xlu0 %v823, 32
  %v826 = vpop.permute.xlu0 %825
  %v828 = vadd.f32 %v818, %v826
  %v829 = vtanh.pop %v828
  %831 = vrot.lane.b32.xlu0 %v829, 64
  %v832 = vpop.permute.xlu0 %831
  %v834 = vmul.f32 %v816, %v832
  %836 = vrot.lane.b32.xlu0 %v834, 32
  %v837 = vpop.permute.xlu0 %836
  %v838 = vsel %vm77, %v837, 0
  %840 = vmatprep.subr.mxu0 0.0
  %841 = vmatpush1.msra.mxu0 0.0
  %842 = vmatprep.subr.mxu0 0.0
  %843 = vmatpush1.msra.mxu0 0.0
  %844 = vmatprep.subr.mxu0 0.0
  %845 = vmatpush1.msra.mxu0 0.0
  %846 = vmatprep.subr.mxu0 0.0
  %847 = vmatpush1.msra.mxu0 0.0
  %848 = vmatprep.subr.mxu0 0.0
  %849 = vmatpush1.msra.mxu0 0.0
  %850 = vmatprep.subr.mxu0 0.0
  %851 = vmatpush1.msra.mxu0 0.0
  %852 = vmatprep.subr.mxu0 0.0
  %853 = vmatpush1.msra.mxu0 0.0
  %854 = vmatprep.subr.mxu0 0.0
  %855 = vmatpush1.msra.mxu0 0.0
  %856 = vmatprep.subr.mxu0 0.0
  %857 = vmatpush1.msra.mxu0 0.0
  %858 = vmatprep.subr.mxu0 0.0
  %859 = vmatpush1.msra.mxu0 0.0
  %860 = vmatprep.subr.mxu0 0.0
  %861 = vmatpush1.msra.mxu0 0.0
  %862 = vmatprep.subr.mxu0 0.0
  %863 = vmatpush1.msra.mxu0 0.0
  %864 = vmatprep.subr.mxu0 0.0
  %865 = vmatpush1.msra.mxu0 %v68
  %866 = vmatprep.subr.mxu0 0.0
  %867 = vmatpush1.msra.mxu0 %v67
  %868 = vmatprep.subr.mxu0 0.0
  %869 = vmatpush1.msra.mxu0 %v66
  %870 = vmatprep.subr.mxu0 0.0
  %871 = vmatpush1.msra.mxu0 %v65
  %872 = vmatprep.subr.mxu0 0.0
  %873 = vmatpush2.msra.mxu0 0.0
  %874 = vmatprep.subr.mxu0 0.0
  %875 = vmatpush2.msra.mxu0 0.0
  %876 = vmatprep.subr.mxu0 0.0
  %877 = vmatpush2.msra.mxu0 0.0
  %878 = vmatprep.subr.mxu0 0.0
  %879 = vmatpush2.msra.mxu0 0.0
  %880 = vmatprep.subr.mxu0 0.0
  %881 = vmatpush2.msra.mxu0 0.0
  %882 = vmatprep.subr.mxu0 0.0
  %883 = vmatpush2.msra.mxu0 0.0
  %884 = vmatprep.subr.mxu0 0.0
  %885 = vmatpush2.msra.mxu0 0.0
  %886 = vmatprep.subr.mxu0 0.0
  %887 = vmatpush2.msra.mxu0 0.0
  %888 = vmatprep.subr.mxu0 0.0
  %889 = vmatpush2.msra.mxu0 0.0
  %890 = vmatprep.subr.mxu0 0.0
  %891 = vmatpush2.msra.mxu0 0.0
  %892 = vmatprep.subr.mxu0 0.0
  %893 = vmatpush2.msra.mxu0 0.0
  %894 = vmatprep.subr.mxu0 0.0
  %895 = vmatpush2.msra.mxu0 0.0
  %896 = vmatprep.subr.mxu0 0.0
  %897 = vmatpush2.msra.mxu0 0.0
  %898 = vmatprep.subr.mxu0 0.0
  %899 = vmatpush2.msra.mxu0 0.0
  %900 = vmatprep.subr.mxu0 0.0
  %901 = vmatpush2.msra.mxu0 0.0
  %902 = vmatprep.subr.mxu0 0.0
  %903 = vmatpush2.msra.mxu0 0.0
  %904 = vmatprep.mubr.f32.mxu0 0.0
  %905 = vmatmul.mubr.f32.gmra.mxu0 %v838
  %v906 = vpop.f32.mrf.mxu0
  %v907 = vadd.f32 %v74, %v906
  %v908 = vpop.f32.mrf.mxu0
  %909 = vdwg.mxu0
  %s910 = scalar_lea.vmem %s9, 8
  %911 = vst [vmem:[%s910] sm:$0xff] %v907
  %s912 = scalar_lea.vmem %s0, 16
  %v913 = vld [vmem:[%s912] sm:$0xff]
  %914 = vmatprep.subr.mxu0 0.0
  %915 = vmatpush1.msra.mxu0 0.0
  %916 = vmatprep.subr.mxu0 0.0
  %917 = vmatpush1.msra.mxu0 0.0
  %918 = vmatprep.subr.mxu0 0.0
  %919 = vmatpush1.msra.mxu0 0.0
  %920 = vmatprep.subr.mxu0 0.0
  %921 = vmatpush1.msra.mxu0 0.0
  %922 = vmatprep.subr.mxu0 0.0
  %923 = vmatpush1.msra.mxu0 0.0
  %924 = vmatprep.subr.mxu0 0.0
  %925 = vmatpush1.msra.mxu0 0.0
  %926 = vmatprep.subr.mxu0 0.0
  %927 = vmatpush1.msra.mxu0 0.0
  %928 = vmatprep.subr.mxu0 0.0
  %929 = vmatpush1.msra.mxu0 0.0
  %930 = vmatprep.subr.mxu0 0.0
  %931 = vmatpush1.msra.mxu0 0.0
  %932 = vmatprep.subr.mxu0 0.0
  %933 = vmatpush1.msra.mxu0 0.0
  %934 = vmatprep.subr.mxu0 0.0
  %935 = vmatpush1.msra.mxu0 0.0
  %936 = vmatprep.subr.mxu0 0.0
  %937 = vmatpush1.msra.mxu0 0.0
  %938 = vmatprep.subr.mxu0 0.0
  %939 = vmatpush1.msra.mxu0 %v42
  %940 = vmatprep.subr.mxu0 0.0
  %941 = vmatpush1.msra.mxu0 %v41
  %942 = vmatprep.subr.mxu0 0.0
  %943 = vmatpush1.msra.mxu0 %v40
  %944 = vmatprep.subr.mxu0 0.0
  %945 = vmatpush1.msra.mxu0 %v39
  %946 = vmatprep.subr.mxu0 0.0
  %947 = vmatpush2.msra.mxu0 0.0
  %948 = vmatprep.subr.mxu0 0.0
  %949 = vmatpush2.msra.mxu0 0.0
  %950 = vmatprep.subr.mxu0 0.0
  %951 = vmatpush2.msra.mxu0 0.0
  %952 = vmatprep.subr.mxu0 0.0
  %953 = vmatpush2.msra.mxu0 0.0
  %954 = vmatprep.subr.mxu0 0.0
  %955 = vmatpush2.msra.mxu0 0.0
  %956 = vmatprep.subr.mxu0 0.0
  %957 = vmatpush2.msra.mxu0 0.0
  %958 = vmatprep.subr.mxu0 0.0
  %959 = vmatpush2.msra.mxu0 0.0
  %960 = vmatprep.subr.mxu0 0.0
  %961 = vmatpush2.msra.mxu0 0.0
  %962 = vmatprep.subr.mxu0 0.0
  %963 = vmatpush2.msra.mxu0 0.0
  %964 = vmatprep.subr.mxu0 0.0
  %965 = vmatpush2.msra.mxu0 0.0
  %966 = vmatprep.subr.mxu0 0.0
  %967 = vmatpush2.msra.mxu0 0.0
  %968 = vmatprep.subr.mxu0 0.0
  %969 = vmatpush2.msra.mxu0 0.0
  %970 = vmatprep.subr.mxu0 0.0
  %971 = vmatpush2.msra.mxu0 0.0
  %972 = vmatprep.subr.mxu0 0.0
  %973 = vmatpush2.msra.mxu0 0.0
  %974 = vmatprep.subr.mxu0 0.0
  %975 = vmatpush2.msra.mxu0 0.0
  %976 = vmatprep.subr.mxu0 0.0
  %977 = vmatpush2.msra.mxu0 0.0
  %978 = vmatprep.mubr.f32.mxu0 0.0
  %979 = vmatmul.mubr.f32.gmra.mxu0 %v738
  %v980 = vpop.f32.mrf.mxu0
  %v981 = vadd.f32 0.0, %v980
  %v982 = vpop.f32.mrf.mxu0
  %983 = vdwg.mxu0
  %v985 = vsel %vm77, %v913, 0
  %987 = vmatprep.subr.mxu0 0.0
  %988 = vmatpush1.msra.mxu0 0.0
  %989 = vmatprep.subr.mxu0 0.0
  %990 = vmatpush1.msra.mxu0 0.0
  %991 = vmatprep.subr.mxu0 0.0
  %992 = vmatpush1.msra.mxu0 0.0
  %993 = vmatprep.subr.mxu0 0.0
  %994 = vmatpush1.msra.mxu0 0.0
  %995 = vmatprep.subr.mxu0 0.0
  %996 = vmatpush1.msra.mxu0 0.0
  %997 = vmatprep.subr.mxu0 0.0
  %998 = vmatpush1.msra.mxu0 0.0
  %999 = vmatprep.subr.mxu0 0.0
  %1000 = vmatpush1.msra.mxu0 0.0
  %1001 = vmatprep.subr.mxu0 0.0
  %1002 = vmatpush1.msra.mxu0 0.0
  %1003 = vmatprep.subr.mxu0 0.0
  %1004 = vmatpush1.msra.mxu0 0.0
  %1005 = vmatprep.subr.mxu0 0.0
  %1006 = vmatpush1.msra.mxu0 0.0
  %1007 = vmatprep.subr.mxu0 0.0
  %1008 = vmatpush1.msra.mxu0 0.0
  %1009 = vmatprep.subr.mxu0 0.0
  %1010 = vmatpush1.msra.mxu0 0.0
  %1011 = vmatprep.subr.mxu0 0.0
  %1012 = vmatpush1.msra.mxu0 %v38
  %1013 = vmatprep.subr.mxu0 0.0
  %1014 = vmatpush1.msra.mxu0 %v37
  %1015 = vmatprep.subr.mxu0 0.0
  %1016 = vmatpush1.msra.mxu0 %v36
  %1017 = vmatprep.subr.mxu0 0.0
  %1018 = vmatpush1.msra.mxu0 %v35
  %1019 = vmatprep.subr.mxu0 0.0
  %1020 = vmatpush2.msra.mxu0 0.0
  %1021 = vmatprep.subr.mxu0 0.0
  %1022 = vmatpush2.msra.mxu0 0.0
  %1023 = vmatprep.subr.mxu0 0.0
  %1024 = vmatpush2.msra.mxu0 0.0
  %1025 = vmatprep.subr.mxu0 0.0
  %1026 = vmatpush2.msra.mxu0 0.0
  %1027 = vmatprep.subr.mxu0 0.0
  %1028 = vmatpush2.msra.mxu0 0.0
  %1029 = vmatprep.subr.mxu0 0.0
  %1030 = vmatpush2.msra.mxu0 0.0
  %1031 = vmatprep.subr.mxu0 0.0
  %1032 = vmatpush2.msra.mxu0 0.0
  %1033 = vmatprep.subr.mxu0 0.0
  %1034 = vmatpush2.msra.mxu0 0.0
  %1035 = vmatprep.subr.mxu0 0.0
  %1036 = vmatpush2.msra.mxu0 0.0
  %1037 = vmatprep.subr.mxu0 0.0
  %1038 = vmatpush2.msra.mxu0 0.0
  %1039 = vmatprep.subr.mxu0 0.0
  %1040 = vmatpush2.msra.mxu0 0.0
  %1041 = vmatprep.subr.mxu0 0.0
  %1042 = vmatpush2.msra.mxu0 0.0
  %1043 = vmatprep.subr.mxu0 0.0
  %1044 = vmatpush2.msra.mxu0 0.0
  %1045 = vmatprep.subr.mxu0 0.0
  %1046 = vmatpush2.msra.mxu0 0.0
  %1047 = vmatprep.subr.mxu0 0.0
  %1048 = vmatpush2.msra.mxu0 0.0
  %1049 = vmatprep.subr.mxu0 0.0
  %1050 = vmatpush2.msra.mxu0 0.0
  %1051 = vmatprep.mubr.f32.mxu0 0.0
  %1052 = vmatmul.mubr.f32.gmra.mxu0 %v985
  %v1053 = vpop.f32.mrf.mxu0
  %v1054 = vadd.f32 %v981, %v1053
  %v1055 = vpop.f32.mrf.mxu0
  %1056 = vdwg.mxu0
  %v1057 = vadd.f32 %v1054, %v48
  %v1058 = vxor.u32 %v1057, 2147483648
  %v1059 = vmul.f32 %v1058, 1.442695
  %v1060 = vpow.pop %v1059
  %v1061 = vadd.f32 %v1060, 1.0
  %v1062 = vrcp.pop %v1061
  %v1063 = vmul.f32 1.0, %v1062
  %v1064 = vtanh.pop %v1057
  %v1065 = vmul.f32 %v1063, %v658
  %1067 = vrot.lane.b32.xlu0 %v1064, 64
  %v1068 = vpop.permute.xlu0 %1067
  %v1070 = vmul.f32 %v1063, %v1068
  %1072 = vrot.lane.b32.xlu0 %v1070, 32
  %v1073 = vpop.permute.xlu0 %1072
  %v1075 = vadd.f32 %v1065, %v1073
  %v1076 = vtanh.pop %v1075
  %1078 = vrot.lane.b32.xlu0 %v1076, 64
  %v1079 = vpop.permute.xlu0 %1078
  %v1081 = vmul.f32 %v1063, %v1079
  %1082 = vmatprep.subr.mxu0 0.0
  %1083 = vmatpush1.msra.mxu0 0.0
  %1084 = vmatprep.subr.mxu0 0.0
  %1085 = vmatpush1.msra.mxu0 0.0
  %1086 = vmatprep.subr.mxu0 0.0
  %1087 = vmatpush1.msra.mxu0 0.0
  %1088 = vmatprep.subr.mxu0 0.0
  %1089 = vmatpush1.msra.mxu0 0.0
  %1090 = vmatprep.subr.mxu0 0.0
  %1091 = vmatpush1.msra.mxu0 0.0
  %1092 = vmatprep.subr.mxu0 0.0
  %1093 = vmatpush1.msra.mxu0 0.0
  %1094 = vmatprep.subr.mxu0 0.0
  %1095 = vmatpush1.msra.mxu0 0.0
  %1096 = vmatprep.subr.mxu0 0.0
  %1097 = vmatpush1.msra.mxu0 0.0
  %1098 = vmatprep.subr.mxu0 0.0
  %1099 = vmatpush1.msra.mxu0 0.0
  %1100 = vmatprep.subr.mxu0 0.0
  %1101 = vmatpush1.msra.mxu0 0.0
  %1102 = vmatprep.subr.mxu0 0.0
  %1103 = vmatpush1.msra.mxu0 0.0
  %1104 = vmatprep.subr.mxu0 0.0
  %1105 = vmatpush1.msra.mxu0 0.0
  %1106 = vmatprep.subr.mxu0 0.0
  %1107 = vmatpush1.msra.mxu0 %v57
  %1108 = vmatprep.subr.mxu0 0.0
  %1109 = vmatpush1.msra.mxu0 %v56
  %1110 = vmatprep.subr.mxu0 0.0
  %1111 = vmatpush1.msra.mxu0 %v55
  %1112 = vmatprep.subr.mxu0 0.0
  %1113 = vmatpush1.msra.mxu0 %v54
  %1114 = vmatprep.subr.mxu0 0.0
  %1115 = vmatpush2.msra.mxu0 0.0
  %1116 = vmatprep.subr.mxu0 0.0
  %1117 = vmatpush2.msra.mxu0 0.0
  %1118 = vmatprep.subr.mxu0 0.0
  %1119 = vmatpush2.msra.mxu0 0.0
  %1120 = vmatprep.subr.mxu0 0.0
  %1121 = vmatpush2.msra.mxu0 0.0
  %1122 = vmatprep.subr.mxu0 0.0
  %1123 = vmatpush2.msra.mxu0 0.0
  %1124 = vmatprep.subr.mxu0 0.0
  %1125 = vmatpush2.msra.mxu0 0.0
  %1126 = vmatprep.subr.mxu0 0.0
  %1127 = vmatpush2.msra.mxu0 0.0
  %1128 = vmatprep.subr.mxu0 0.0
  %1129 = vmatpush2.msra.mxu0 0.0
  %1130 = vmatprep.subr.mxu0 0.0
  %1131 = vmatpush2.msra.mxu0 0.0
  %1132 = vmatprep.subr.mxu0 0.0
  %1133 = vmatpush2.msra.mxu0 0.0
  %1134 = vmatprep.subr.mxu0 0.0
  %1135 = vmatpush2.msra.mxu0 0.0
  %1136 = vmatprep.subr.mxu0 0.0
  %1137 = vmatpush2.msra.mxu0 0.0
  %1138 = vmatprep.subr.mxu0 0.0
  %1139 = vmatpush2.msra.mxu0 0.0
  %1140 = vmatprep.subr.mxu0 0.0
  %1141 = vmatpush2.msra.mxu0 0.0
  %1142 = vmatprep.subr.mxu0 0.0
  %1143 = vmatpush2.msra.mxu0 0.0
  %1144 = vmatprep.subr.mxu0 0.0
  %1145 = vmatpush2.msra.mxu0 0.0
  %1146 = vmatprep.mubr.f32.mxu0 0.0
  %1147 = vmatmul.mubr.f32.gmra.mxu0 %v838
  %v1148 = vpop.f32.mrf.mxu0
  %v1149 = vadd.f32 0.0, %v1148
  %v1150 = vpop.f32.mrf.mxu0
  %1151 = vdwg.mxu0
  %1153 = vrot.lane.b32.xlu0 %v1081, 32
  %v1154 = vpop.permute.xlu0 %1153
  %v1155 = vsel %vm77, %v1154, 0
  %1157 = vmatprep.subr.mxu0 0.0
  %1158 = vmatpush1.msra.mxu0 0.0
  %1159 = vmatprep.subr.mxu0 0.0
  %1160 = vmatpush1.msra.mxu0 0.0
  %1161 = vmatprep.subr.mxu0 0.0
  %1162 = vmatpush1.msra.mxu0 0.0
  %1163 = vmatprep.subr.mxu0 0.0
  %1164 = vmatpush1.msra.mxu0 0.0
  %1165 = vmatprep.subr.mxu0 0.0
  %1166 = vmatpush1.msra.mxu0 0.0
  %1167 = vmatprep.subr.mxu0 0.0
  %1168 = vmatpush1.msra.mxu0 0.0
  %1169 = vmatprep.subr.mxu0 0.0
  %1170 = vmatpush1.msra.mxu0 0.0
  %1171 = vmatprep.subr.mxu0 0.0
  %1172 = vmatpush1.msra.mxu0 0.0
  %1173 = vmatprep.subr.mxu0 0.0
  %1174 = vmatpush1.msra.mxu0 0.0
  %1175 = vmatprep.subr.mxu0 0.0
  %1176 = vmatpush1.msra.mxu0 0.0
  %1177 = vmatprep.subr.mxu0 0.0
  %1178 = vmatpush1.msra.mxu0 0.0
  %1179 = vmatprep.subr.mxu0 0.0
  %1180 = vmatpush1.msra.mxu0 0.0
  %1181 = vmatprep.subr.mxu0 0.0
  %1182 = vmatpush1.msra.mxu0 %v53
  %1183 = vmatprep.subr.mxu0 0.0
  %1184 = vmatpush1.msra.mxu0 %v52
  %1185 = vmatprep.subr.mxu0 0.0
  %1186 = vmatpush1.msra.mxu0 %v51
  %1187 = vmatprep.subr.mxu0 0.0
  %1188 = vmatpush1.msra.mxu0 %v50
  %1189 = vmatprep.subr.mxu0 0.0
  %1190 = vmatpush2.msra.mxu0 0.0
  %1191 = vmatprep.subr.mxu0 0.0
  %1192 = vmatpush2.msra.mxu0 0.0
  %1193 = vmatprep.subr.mxu0 0.0
  %1194 = vmatpush2.msra.mxu0 0.0
  %1195 = vmatprep.subr.mxu0 0.0
  %1196 = vmatpush2.msra.mxu0 0.0
  %1197 = vmatprep.subr.mxu0 0.0
  %1198 = vmatpush2.msra.mxu0 0.0
  %1199 = vmatprep.subr.mxu0 0.0
  %1200 = vmatpush2.msra.mxu0 0.0
  %1201 = vmatprep.subr.mxu0 0.0
  %1202 = vmatpush2.msra.mxu0 0.0
  %1203 = vmatprep.subr.mxu0 0.0
  %1204 = vmatpush2.msra.mxu0 0.0
  %1205 = vmatprep.subr.mxu0 0.0
  %1206 = vmatpush2.msra.mxu0 0.0
  %1207 = vmatprep.subr.mxu0 0.0
  %1208 = vmatpush2.msra.mxu0 0.0
  %1209 = vmatprep.subr.mxu0 0.0
  %1210 = vmatpush2.msra.mxu0 0.0
  %1211 = vmatprep.subr.mxu0 0.0
  %1212 = vmatpush2.msra.mxu0 0.0
  %1213 = vmatprep.subr.mxu0 0.0
  %1214 = vmatpush2.msra.mxu0 0.0
  %1215 = vmatprep.subr.mxu0 0.0
  %1216 = vmatpush2.msra.mxu0 0.0
  %1217 = vmatprep.subr.mxu0 0.0
  %1218 = vmatpush2.msra.mxu0 0.0
  %1219 = vmatprep.subr.mxu0 0.0
  %1220 = vmatpush2.msra.mxu0 0.0
  %1221 = vmatprep.mubr.f32.mxu0 0.0
  %1222 = vmatmul.mubr.f32.gmra.mxu0 %v1155
  %v1223 = vpop.f32.mrf.mxu0
  %v1224 = vadd.f32 %v1149, %v1223
  %v1225 = vpop.f32.mrf.mxu0
  %1226 = vdwg.mxu0
  %v1227 = vadd.f32 %v1224, %v63
  %v1228 = vxor.u32 %v1227, 2147483648
  %v1229 = vmul.f32 %v1228, 1.442695
  %v1230 = vpow.pop %v1229
  %v1231 = vadd.f32 %v1230, 1.0
  %v1232 = vrcp.pop %v1231
  %v1233 = vmul.f32 1.0, %v1232
  %v1234 = vtanh.pop %v1227
  %v1235 = vmul.f32 %v1233, %v828
  %1237 = vrot.lane.b32.xlu0 %v1234, 64
  %v1238 = vpop.permute.xlu0 %1237
  %v1240 = vmul.f32 %v1233, %v1238
  %1242 = vrot.lane.b32.xlu0 %v1240, 32
  %v1243 = vpop.permute.xlu0 %1242
  %v1245 = vadd.f32 %v1235, %v1243
  %v1246 = vtanh.pop %v1245
  %1248 = vrot.lane.b32.xlu0 %v1246, 64
  %v1249 = vpop.permute.xlu0 %1248
  %v1251 = vmul.f32 %v1233, %v1249
  %1253 = vrot.lane.b32.xlu0 %v1251, 32
  %v1254 = vpop.permute.xlu0 %1253
  %v1255 = vsel %vm77, %v1254, 0
  %1257 = vmatprep.subr.mxu0 0.0
  %1258 = vmatpush1.msra.mxu0 0.0
  %1259 = vmatprep.subr.mxu0 0.0
  %1260 = vmatpush1.msra.mxu0 0.0
  %1261 = vmatprep.subr.mxu0 0.0
  %1262 = vmatpush1.msra.mxu0 0.0
  %1263 = vmatprep.subr.mxu0 0.0
  %1264 = vmatpush1.msra.mxu0 0.0
  %1265 = vmatprep.subr.mxu0 0.0
  %1266 = vmatpush1.msra.mxu0 0.0
  %1267 = vmatprep.subr.mxu0 0.0
  %1268 = vmatpush1.msra.mxu0 0.0
  %1269 = vmatprep.subr.mxu0 0.0
  %1270 = vmatpush1.msra.mxu0 0.0
  %1271 = vmatprep.subr.mxu0 0.0
  %1272 = vmatpush1.msra.mxu0 0.0
  %1273 = vmatprep.subr.mxu0 0.0
  %1274 = vmatpush1.msra.mxu0 0.0
  %1275 = vmatprep.subr.mxu0 0.0
  %1276 = vmatpush1.msra.mxu0 0.0
  %1277 = vmatprep.subr.mxu0 0.0
  %1278 = vmatpush1.msra.mxu0 0.0
  %1279 = vmatprep.subr.mxu0 0.0
  %1280 = vmatpush1.msra.mxu0 0.0
  %1281 = vmatprep.subr.mxu0 0.0
  %1282 = vmatpush1.msra.mxu0 %v68
  %1283 = vmatprep.subr.mxu0 0.0
  %1284 = vmatpush1.msra.mxu0 %v67
  %1285 = vmatprep.subr.mxu0 0.0
  %1286 = vmatpush1.msra.mxu0 %v66
  %1287 = vmatprep.subr.mxu0 0.0
  %1288 = vmatpush1.msra.mxu0 %v65
  %1289 = vmatprep.subr.mxu0 0.0
  %1290 = vmatpush2.msra.mxu0 0.0
  %1291 = vmatprep.subr.mxu0 0.0
  %1292 = vmatpush2.msra.mxu0 0.0
  %1293 = vmatprep.subr.mxu0 0.0
  %1294 = vmatpush2.msra.mxu0 0.0
  %1295 = vmatprep.subr.mxu0 0.0
  %1296 = vmatpush2.msra.mxu0 0.0
  %1297 = vmatprep.subr.mxu0 0.0
  %1298 = vmatpush2.msra.mxu0 0.0
  %1299 = vmatprep.subr.mxu0 0.0
  %1300 = vmatpush2.msra.mxu0 0.0
  %1301 = vmatprep.subr.mxu0 0.0
  %1302 = vmatpush2.msra.mxu0 0.0
  %1303 = vmatprep.subr.mxu0 0.0
  %1304 = vmatpush2.msra.mxu0 0.0
  %1305 = vmatprep.subr.mxu0 0.0
  %1306 = vmatpush2.msra.mxu0 0.0
  %1307 = vmatprep.subr.mxu0 0.0
  %1308 = vmatpush2.msra.mxu0 0.0
  %1309 = vmatprep.subr.mxu0 0.0
  %1310 = vmatpush2.msra.mxu0 0.0
  %1311 = vmatprep.subr.mxu0 0.0
  %1312 = vmatpush2.msra.mxu0 0.0
  %1313 = vmatprep.subr.mxu0 0.0
  %1314 = vmatpush2.msra.mxu0 0.0
  %1315 = vmatprep.subr.mxu0 0.0
  %1316 = vmatpush2.msra.mxu0 0.0
  %1317 = vmatprep.subr.mxu0 0.0
  %1318 = vmatpush2.msra.mxu0 0.0
  %1319 = vmatprep.subr.mxu0 0.0
  %1320 = vmatpush2.msra.mxu0 0.0
  %1321 = vmatprep.mubr.f32.mxu0 0.0
  %1322 = vmatmul.mubr.f32.gmra.mxu0 %v1255
  %v1323 = vpop.f32.mrf.mxu0
  %v1324 = vadd.f32 %v74, %v1323
  %v1325 = vpop.f32.mrf.mxu0
  %1326 = vdwg.mxu0
  %s1327 = scalar_lea.vmem %s9, 16
  %1328 = vst [vmem:[%s1327] sm:$0xff] %v1324
  %s1329 = scalar_lea.vmem %s0, 24
  %v1330 = vld [vmem:[%s1329] sm:$0xff]
  %1331 = vmatprep.subr.mxu0 0.0
  %1332 = vmatpush1.msra.mxu0 0.0
  %1333 = vmatprep.subr.mxu0 0.0
  %1334 = vmatpush1.msra.mxu0 0.0
  %1335 = vmatprep.subr.mxu0 0.0
  %1336 = vmatpush1.msra.mxu0 0.0
  %1337 = vmatprep.subr.mxu0 0.0
  %1338 = vmatpush1.msra.mxu0 0.0
  %1339 = vmatprep.subr.mxu0 0.0
  %1340 = vmatpush1.msra.mxu0 0.0
  %1341 = vmatprep.subr.mxu0 0.0
  %1342 = vmatpush1.msra.mxu0 0.0
  %1343 = vmatprep.subr.mxu0 0.0
  %1344 = vmatpush1.msra.mxu0 0.0
  %1345 = vmatprep.subr.mxu0 0.0
  %1346 = vmatpush1.msra.mxu0 0.0
  %1347 = vmatprep.subr.mxu0 0.0
  %1348 = vmatpush1.msra.mxu0 0.0
  %1349 = vmatprep.subr.mxu0 0.0
  %1350 = vmatpush1.msra.mxu0 0.0
  %1351 = vmatprep.subr.mxu0 0.0
  %1352 = vmatpush1.msra.mxu0 0.0
  %1353 = vmatprep.subr.mxu0 0.0
  %1354 = vmatpush1.msra.mxu0 0.0
  %1355 = vmatprep.subr.mxu0 0.0
  %1356 = vmatpush1.msra.mxu0 %v42
  %1357 = vmatprep.subr.mxu0 0.0
  %1358 = vmatpush1.msra.mxu0 %v41
  %1359 = vmatprep.subr.mxu0 0.0
  %1360 = vmatpush1.msra.mxu0 %v40
  %1361 = vmatprep.subr.mxu0 0.0
  %1362 = vmatpush1.msra.mxu0 %v39
  %1363 = vmatprep.subr.mxu0 0.0
  %1364 = vmatpush2.msra.mxu0 0.0
  %1365 = vmatprep.subr.mxu0 0.0
  %1366 = vmatpush2.msra.mxu0 0.0
  %1367 = vmatprep.subr.mxu0 0.0
  %1368 = vmatpush2.msra.mxu0 0.0
  %1369 = vmatprep.subr.mxu0 0.0
  %1370 = vmatpush2.msra.mxu0 0.0
  %1371 = vmatprep.subr.mxu0 0.0
  %1372 = vmatpush2.msra.mxu0 0.0
  %1373 = vmatprep.subr.mxu0 0.0
  %1374 = vmatpush2.msra.mxu0 0.0
  %1375 = vmatprep.subr.mxu0 0.0
  %1376 = vmatpush2.msra.mxu0 0.0
  %1377 = vmatprep.subr.mxu0 0.0
  %1378 = vmatpush2.msra.mxu0 0.0
  %1379 = vmatprep.subr.mxu0 0.0
  %1380 = vmatpush2.msra.mxu0 0.0
  %1381 = vmatprep.subr.mxu0 0.0
  %1382 = vmatpush2.msra.mxu0 0.0
  %1383 = vmatprep.subr.mxu0 0.0
  %1384 = vmatpush2.msra.mxu0 0.0
  %1385 = vmatprep.subr.mxu0 0.0
  %1386 = vmatpush2.msra.mxu0 0.0
  %1387 = vmatprep.subr.mxu0 0.0
  %1388 = vmatpush2.msra.mxu0 0.0
  %1389 = vmatprep.subr.mxu0 0.0
  %1390 = vmatpush2.msra.mxu0 0.0
  %1391 = vmatprep.subr.mxu0 0.0
  %1392 = vmatpush2.msra.mxu0 0.0
  %1393 = vmatprep.subr.mxu0 0.0
  %1394 = vmatpush2.msra.mxu0 0.0
  %1395 = vmatprep.mubr.f32.mxu0 0.0
  %1396 = vmatmul.mubr.f32.gmra.mxu0 %v1155
  %v1397 = vpop.f32.mrf.mxu0
  %v1398 = vadd.f32 0.0, %v1397
  %v1399 = vpop.f32.mrf.mxu0
  %1400 = vdwg.mxu0
  %v1402 = vsel %vm77, %v1330, 0
  %1404 = vmatprep.subr.mxu0 0.0
  %1405 = vmatpush1.msra.mxu0 0.0
  %1406 = vmatprep.subr.mxu0 0.0
  %1407 = vmatpush1.msra.mxu0 0.0
  %1408 = vmatprep.subr.mxu0 0.0
  %1409 = vmatpush1.msra.mxu0 0.0
  %1410 = vmatprep.subr.mxu0 0.0
  %1411 = vmatpush1.msra.mxu0 0.0
  %1412 = vmatprep.subr.mxu0 0.0
  %1413 = vmatpush1.msra.mxu0 0.0
  %1414 = vmatprep.subr.mxu0 0.0
  %1415 = vmatpush1.msra.mxu0 0.0
  %1416 = vmatprep.subr.mxu0 0.0
  %1417 = vmatpush1.msra.mxu0 0.0
  %1418 = vmatprep.subr.mxu0 0.0
  %1419 = vmatpush1.msra.mxu0 0.0
  %1420 = vmatprep.subr.mxu0 0.0
  %1421 = vmatpush1.msra.mxu0 0.0
  %1422 = vmatprep.subr.mxu0 0.0
  %1423 = vmatpush1.msra.mxu0 0.0
  %1424 = vmatprep.subr.mxu0 0.0
  %1425 = vmatpush1.msra.mxu0 0.0
  %1426 = vmatprep.subr.mxu0 0.0
  %1427 = vmatpush1.msra.mxu0 0.0
  %1428 = vmatprep.subr.mxu0 0.0
  %1429 = vmatpush1.msra.mxu0 %v38
  %1430 = vmatprep.subr.mxu0 0.0
  %1431 = vmatpush1.msra.mxu0 %v37
  %1432 = vmatprep.subr.mxu0 0.0
  %1433 = vmatpush1.msra.mxu0 %v36
  %1434 = vmatprep.subr.mxu0 0.0
  %1435 = vmatpush1.msra.mxu0 %v35
  %1436 = vmatprep.subr.mxu0 0.0
  %1437 = vmatpush2.msra.mxu0 0.0
  %1438 = vmatprep.subr.mxu0 0.0
  %1439 = vmatpush2.msra.mxu0 0.0
  %1440 = vmatprep.subr.mxu0 0.0
  %1441 = vmatpush2.msra.mxu0 0.0
  %1442 = vmatprep.subr.mxu0 0.0
  %1443 = vmatpush2.msra.mxu0 0.0
  %1444 = vmatprep.subr.mxu0 0.0
  %1445 = vmatpush2.msra.mxu0 0.0
  %1446 = vmatprep.subr.mxu0 0.0
  %1447 = vmatpush2.msra.mxu0 0.0
  %1448 = vmatprep.subr.mxu0 0.0
  %1449 = vmatpush2.msra.mxu0 0.0
  %1450 = vmatprep.subr.mxu0 0.0
  %1451 = vmatpush2.msra.mxu0 0.0
  %1452 = vmatprep.subr.mxu0 0.0
  %1453 = vmatpush2.msra.mxu0 0.0
  %1454 = vmatprep.subr.mxu0 0.0
  %1455 = vmatpush2.msra.mxu0 0.0
  %1456 = vmatprep.subr.mxu0 0.0
  %1457 = vmatpush2.msra.mxu0 0.0
  %1458 = vmatprep.subr.mxu0 0.0
  %1459 = vmatpush2.msra.mxu0 0.0
  %1460 = vmatprep.subr.mxu0 0.0
  %1461 = vmatpush2.msra.mxu0 0.0
  %1462 = vmatprep.subr.mxu0 0.0
  %1463 = vmatpush2.msra.mxu0 0.0
  %1464 = vmatprep.subr.mxu0 0.0
  %1465 = vmatpush2.msra.mxu0 0.0
  %1466 = vmatprep.subr.mxu0 0.0
  %1467 = vmatpush2.msra.mxu0 0.0
  %1468 = vmatprep.mubr.f32.mxu0 0.0
  %1469 = vmatmul.mubr.f32.gmra.mxu0 %v1402
  %v1470 = vpop.f32.mrf.mxu0
  %v1471 = vadd.f32 %v1398, %v1470
  %v1472 = vpop.f32.mrf.mxu0
  %1473 = vdwg.mxu0
  %v1474 = vadd.f32 %v1471, %v48
  %v1475 = vxor.u32 %v1474, 2147483648
  %v1476 = vmul.f32 %v1475, 1.442695
  %v1477 = vpow.pop %v1476
  %v1478 = vadd.f32 %v1477, 1.0
  %v1479 = vrcp.pop %v1478
  %v1480 = vmul.f32 1.0, %v1479
  %v1481 = vtanh.pop %v1474
  %v1482 = vmul.f32 %v1480, %v1075
  %1484 = vrot.lane.b32.xlu0 %v1481, 64
  %v1485 = vpop.permute.xlu0 %1484
  %v1487 = vmul.f32 %v1480, %v1485
  %1489 = vrot.lane.b32.xlu0 %v1487, 32
  %v1490 = vpop.permute.xlu0 %1489
  %v1492 = vadd.f32 %v1482, %v1490
  %v1493 = vtanh.pop %v1492
  %1495 = vrot.lane.b32.xlu0 %v1493, 64
  %v1496 = vpop.permute.xlu0 %1495
  %v1498 = vmul.f32 %v1480, %v1496
  %1499 = vmatprep.subr.mxu0 0.0
  %1500 = vmatpush1.msra.mxu0 0.0
  %1501 = vmatprep.subr.mxu0 0.0
  %1502 = vmatpush1.msra.mxu0 0.0
  %1503 = vmatprep.subr.mxu0 0.0
  %1504 = vmatpush1.msra.mxu0 0.0
  %1505 = vmatprep.subr.mxu0 0.0
  %1506 = vmatpush1.msra.mxu0 0.0
  %1507 = vmatprep.subr.mxu0 0.0
  %1508 = vmatpush1.msra.mxu0 0.0
  %1509 = vmatprep.subr.mxu0 0.0
  %1510 = vmatpush1.msra.mxu0 0.0
  %1511 = vmatprep.subr.mxu0 0.0
  %1512 = vmatpush1.msra.mxu0 0.0
  %1513 = vmatprep.subr.mxu0 0.0
  %1514 = vmatpush1.msra.mxu0 0.0
  %1515 = vmatprep.subr.mxu0 0.0
  %1516 = vmatpush1.msra.mxu0 0.0
  %1517 = vmatprep.subr.mxu0 0.0
  %1518 = vmatpush1.msra.mxu0 0.0
  %1519 = vmatprep.subr.mxu0 0.0
  %1520 = vmatpush1.msra.mxu0 0.0
  %1521 = vmatprep.subr.mxu0 0.0
  %1522 = vmatpush1.msra.mxu0 0.0
  %1523 = vmatprep.subr.mxu0 0.0
  %1524 = vmatpush1.msra.mxu0 %v57
  %1525 = vmatprep.subr.mxu0 0.0
  %1526 = vmatpush1.msra.mxu0 %v56
  %1527 = vmatprep.subr.mxu0 0.0
  %1528 = vmatpush1.msra.mxu0 %v55
  %1529 = vmatprep.subr.mxu0 0.0
  %1530 = vmatpush1.msra.mxu0 %v54
  %1531 = vmatprep.subr.mxu0 0.0
  %1532 = vmatpush2.msra.mxu0 0.0
  %1533 = vmatprep.subr.mxu0 0.0
  %1534 = vmatpush2.msra.mxu0 0.0
  %1535 = vmatprep.subr.mxu0 0.0
  %1536 = vmatpush2.msra.mxu0 0.0
  %1537 = vmatprep.subr.mxu0 0.0
  %1538 = vmatpush2.msra.mxu0 0.0
  %1539 = vmatprep.subr.mxu0 0.0
  %1540 = vmatpush2.msra.mxu0 0.0
  %1541 = vmatprep.subr.mxu0 0.0
  %1542 = vmatpush2.msra.mxu0 0.0
  %1543 = vmatprep.subr.mxu0 0.0
  %1544 = vmatpush2.msra.mxu0 0.0
  %1545 = vmatprep.subr.mxu0 0.0
  %1546 = vmatpush2.msra.mxu0 0.0
  %1547 = vmatprep.subr.mxu0 0.0
  %1548 = vmatpush2.msra.mxu0 0.0
  %1549 = vmatprep.subr.mxu0 0.0
  %1550 = vmatpush2.msra.mxu0 0.0
  %1551 = vmatprep.subr.mxu0 0.0
  %1552 = vmatpush2.msra.mxu0 0.0
  %1553 = vmatprep.subr.mxu0 0.0
  %1554 = vmatpush2.msra.mxu0 0.0
  %1555 = vmatprep.subr.mxu0 0.0
  %1556 = vmatpush2.msra.mxu0 0.0
  %1557 = vmatprep.subr.mxu0 0.0
  %1558 = vmatpush2.msra.mxu0 0.0
  %1559 = vmatprep.subr.mxu0 0.0
  %1560 = vmatpush2.msra.mxu0 0.0
  %1561 = vmatprep.subr.mxu0 0.0
  %1562 = vmatpush2.msra.mxu0 0.0
  %1563 = vmatprep.mubr.f32.mxu0 0.0
  %1564 = vmatmul.mubr.f32.gmra.mxu0 %v1255
  %v1565 = vpop.f32.mrf.mxu0
  %v1566 = vadd.f32 0.0, %v1565
  %v1567 = vpop.f32.mrf.mxu0
  %1568 = vdwg.mxu0
  %1570 = vrot.lane.b32.xlu0 %v1498, 32
  %v1571 = vpop.permute.xlu0 %1570
  %v1572 = vsel %vm77, %v1571, 0
  %1574 = vmatprep.subr.mxu0 0.0
  %1575 = vmatpush1.msra.mxu0 0.0
  %1576 = vmatprep.subr.mxu0 0.0
  %1577 = vmatpush1.msra.mxu0 0.0
  %1578 = vmatprep.subr.mxu0 0.0
  %1579 = vmatpush1.msra.mxu0 0.0
  %1580 = vmatprep.subr.mxu0 0.0
  %1581 = vmatpush1.msra.mxu0 0.0
  %1582 = vmatprep.subr.mxu0 0.0
  %1583 = vmatpush1.msra.mxu0 0.0
  %1584 = vmatprep.subr.mxu0 0.0
  %1585 = vmatpush1.msra.mxu0 0.0
  %1586 = vmatprep.subr.mxu0 0.0
  %1587 = vmatpush1.msra.mxu0 0.0
  %1588 = vmatprep.subr.mxu0 0.0
  %1589 = vmatpush1.msra.mxu0 0.0
  %1590 = vmatprep.subr.mxu0 0.0
  %1591 = vmatpush1.msra.mxu0 0.0
  %1592 = vmatprep.subr.mxu0 0.0
  %1593 = vmatpush1.msra.mxu0 0.0
  %1594 = vmatprep.subr.mxu0 0.0
  %1595 = vmatpush1.msra.mxu0 0.0
  %1596 = vmatprep.subr.mxu0 0.0
  %1597 = vmatpush1.msra.mxu0 0.0
  %1598 = vmatprep.subr.mxu0 0.0
  %1599 = vmatpush1.msra.mxu0 %v53
  %1600 = vmatprep.subr.mxu0 0.0
  %1601 = vmatpush1.msra.mxu0 %v52
  %1602 = vmatprep.subr.mxu0 0.0
  %1603 = vmatpush1.msra.mxu0 %v51
  %1604 = vmatprep.subr.mxu0 0.0
  %1605 = vmatpush1.msra.mxu0 %v50
  %1606 = vmatprep.subr.mxu0 0.0
  %1607 = vmatpush2.msra.mxu0 0.0
  %1608 = vmatprep.subr.mxu0 0.0
  %1609 = vmatpush2.msra.mxu0 0.0
  %1610 = vmatprep.subr.mxu0 0.0
  %1611 = vmatpush2.msra.mxu0 0.0
  %1612 = vmatprep.subr.mxu0 0.0
  %1613 = vmatpush2.msra.mxu0 0.0
  %1614 = vmatprep.subr.mxu0 0.0
  %1615 = vmatpush2.msra.mxu0 0.0
  %1616 = vmatprep.subr.mxu0 0.0
  %1617 = vmatpush2.msra.mxu0 0.0
  %1618 = vmatprep.subr.mxu0 0.0
  %1619 = vmatpush2.msra.mxu0 0.0
  %1620 = vmatprep.subr.mxu0 0.0
  %1621 = vmatpush2.msra.mxu0 0.0
  %1622 = vmatprep.subr.mxu0 0.0
  %1623 = vmatpush2.msra.mxu0 0.0
  %1624 = vmatprep.subr.mxu0 0.0
  %1625 = vmatpush2.msra.mxu0 0.0
  %1626 = vmatprep.subr.mxu0 0.0
  %1627 = vmatpush2.msra.mxu0 0.0
  %1628 = vmatprep.subr.mxu0 0.0
  %1629 = vmatpush2.msra.mxu0 0.0
  %1630 = vmatprep.subr.mxu0 0.0
  %1631 = vmatpush2.msra.mxu0 0.0
  %1632 = vmatprep.subr.mxu0 0.0
  %1633 = vmatpush2.msra.mxu0 0.0
  %1634 = vmatprep.subr.mxu0 0.0
  %1635 = vmatpush2.msra.mxu0 0.0
  %1636 = vmatprep.subr.mxu0 0.0
  %1637 = vmatpush2.msra.mxu0 0.0
  %1638 = vmatprep.mubr.f32.mxu0 0.0
  %1639 = vmatmul.mubr.f32.gmra.mxu0 %v1572
  %v1640 = vpop.f32.mrf.mxu0
  %v1641 = vadd.f32 %v1566, %v1640
  %v1642 = vpop.f32.mrf.mxu0
  %1643 = vdwg.mxu0
  %v1644 = vadd.f32 %v1641, %v63
  %v1645 = vxor.u32 %v1644, 2147483648
  %v1646 = vmul.f32 %v1645, 1.442695
  %v1647 = vpow.pop %v1646
  %v1648 = vadd.f32 %v1647, 1.0
  %v1649 = vrcp.pop %v1648
  %v1650 = vmul.f32 1.0, %v1649
  %v1651 = vtanh.pop %v1644
  %v1652 = vmul.f32 %v1650, %v1245
  %1654 = vrot.lane.b32.xlu0 %v1651, 64
  %v1655 = vpop.permute.xlu0 %1654
  %v1657 = vmul.f32 %v1650, %v1655
  %1659 = vrot.lane.b32.xlu0 %v1657, 32
  %v1660 = vpop.permute.xlu0 %1659
  %v1662 = vadd.f32 %v1652, %v1660
  %v1663 = vtanh.pop %v1662
  %1665 = vrot.lane.b32.xlu0 %v1663, 64
  %v1666 = vpop.permute.xlu0 %1665
  %v1668 = vmul.f32 %v1650, %v1666
  %1670 = vrot.lane.b32.xlu0 %v1668, 32
  %v1671 = vpop.permute.xlu0 %1670
  %v1672 = vsel %vm77, %v1671, 0
  %1674 = vmatprep.subr.mxu0 0.0
  %1675 = vmatpush1.msra.mxu0 0.0
  %1676 = vmatprep.subr.mxu0 0.0
  %1677 = vmatpush1.msra.mxu0 0.0
  %1678 = vmatprep.subr.mxu0 0.0
  %1679 = vmatpush1.msra.mxu0 0.0
  %1680 = vmatprep.subr.mxu0 0.0
  %1681 = vmatpush1.msra.mxu0 0.0
  %1682 = vmatprep.subr.mxu0 0.0
  %1683 = vmatpush1.msra.mxu0 0.0
  %1684 = vmatprep.subr.mxu0 0.0
  %1685 = vmatpush1.msra.mxu0 0.0
  %1686 = vmatprep.subr.mxu0 0.0
  %1687 = vmatpush1.msra.mxu0 0.0
  %1688 = vmatprep.subr.mxu0 0.0
  %1689 = vmatpush1.msra.mxu0 0.0
  %1690 = vmatprep.subr.mxu0 0.0
  %1691 = vmatpush1.msra.mxu0 0.0
  %1692 = vmatprep.subr.mxu0 0.0
  %1693 = vmatpush1.msra.mxu0 0.0
  %1694 = vmatprep.subr.mxu0 0.0
  %1695 = vmatpush1.msra.mxu0 0.0
  %1696 = vmatprep.subr.mxu0 0.0
  %1697 = vmatpush1.msra.mxu0 0.0
  %1698 = vmatprep.subr.mxu0 0.0
  %1699 = vmatpush1.msra.mxu0 %v68
  %1700 = vmatprep.subr.mxu0 0.0
  %1701 = vmatpush1.msra.mxu0 %v67
  %1702 = vmatprep.subr.mxu0 0.0
  %1703 = vmatpush1.msra.mxu0 %v66
  %1704 = vmatprep.subr.mxu0 0.0
  %1705 = vmatpush1.msra.mxu0 %v65
  %1706 = vmatprep.subr.mxu0 0.0
  %1707 = vmatpush2.msra.mxu0 0.0
  %1708 = vmatprep.subr.mxu0 0.0
  %1709 = vmatpush2.msra.mxu0 0.0
  %1710 = vmatprep.subr.mxu0 0.0
  %1711 = vmatpush2.msra.mxu0 0.0
  %1712 = vmatprep.subr.mxu0 0.0
  %1713 = vmatpush2.msra.mxu0 0.0
  %1714 = vmatprep.subr.mxu0 0.0
  %1715 = vmatpush2.msra.mxu0 0.0
  %1716 = vmatprep.subr.mxu0 0.0
  %1717 = vmatpush2.msra.mxu0 0.0
  %1718 = vmatprep.subr.mxu0 0.0
  %1719 = vmatpush2.msra.mxu0 0.0
  %1720 = vmatprep.subr.mxu0 0.0
  %1721 = vmatpush2.msra.mxu0 0.0
  %1722 = vmatprep.subr.mxu0 0.0
  %1723 = vmatpush2.msra.mxu0 0.0
  %1724 = vmatprep.subr.mxu0 0.0
  %1725 = vmatpush2.msra.mxu0 0.0
  %1726 = vmatprep.subr.mxu0 0.0
  %1727 = vmatpush2.msra.mxu0 0.0
  %1728 = vmatprep.subr.mxu0 0.0
  %1729 = vmatpush2.msra.mxu0 0.0
  %1730 = vmatprep.subr.mxu0 0.0
  %1731 = vmatpush2.msra.mxu0 0.0
  %1732 = vmatprep.subr.mxu0 0.0
  %1733 = vmatpush2.msra.mxu0 0.0
  %1734 = vmatprep.subr.mxu0 0.0
  %1735 = vmatpush2.msra.mxu0 0.0
  %1736 = vmatprep.subr.mxu0 0.0
  %1737 = vmatpush2.msra.mxu0 0.0
  %1738 = vmatprep.mubr.f32.mxu0 0.0
  %1739 = vmatmul.mubr.f32.gmra.mxu0 %v1672
  %v1740 = vpop.f32.mrf.mxu0
  %v1741 = vadd.f32 %v74, %v1740
  %v1742 = vpop.f32.mrf.mxu0
  %1743 = vdwg.mxu0
  %s1744 = scalar_lea.vmem %s9, 24
  %1745 = vst [vmem:[%s1744] sm:$0xff] %v1741
  %s1746 = scalar_lea.vmem %s0, 32
  %v1747 = vld [vmem:[%s1746] sm:$0xff]
  %1748 = vmatprep.subr.mxu0 0.0
  %1749 = vmatpush1.msra.mxu0 0.0
  %1750 = vmatprep.subr.mxu0 0.0
  %1751 = vmatpush1.msra.mxu0 0.0
  %1752 = vmatprep.subr.mxu0 0.0
  %1753 = vmatpush1.msra.mxu0 0.0
  %1754 = vmatprep.subr.mxu0 0.0
  %1755 = vmatpush1.msra.mxu0 0.0
  %1756 = vmatprep.subr.mxu0 0.0
  %1757 = vmatpush1.msra.mxu0 0.0
  %1758 = vmatprep.subr.mxu0 0.0
  %1759 = vmatpush1.msra.mxu0 0.0
  %1760 = vmatprep.subr.mxu0 0.0
  %1761 = vmatpush1.msra.mxu0 0.0
  %1762 = vmatprep.subr.mxu0 0.0
  %1763 = vmatpush1.msra.mxu0 0.0
  %1764 = vmatprep.subr.mxu0 0.0
  %1765 = vmatpush1.msra.mxu0 0.0
  %1766 = vmatprep.subr.mxu0 0.0
  %1767 = vmatpush1.msra.mxu0 0.0
  %1768 = vmatprep.subr.mxu0 0.0
  %1769 = vmatpush1.msra.mxu0 0.0
  %1770 = vmatprep.subr.mxu0 0.0
  %1771 = vmatpush1.msra.mxu0 0.0
  %1772 = vmatprep.subr.mxu0 0.0
  %1773 = vmatpush1.msra.mxu0 %v42
  %1774 = vmatprep.subr.mxu0 0.0
  %1775 = vmatpush1.msra.mxu0 %v41
  %1776 = vmatprep.subr.mxu0 0.0
  %1777 = vmatpush1.msra.mxu0 %v40
  %1778 = vmatprep.subr.mxu0 0.0
  %1779 = vmatpush1.msra.mxu0 %v39
  %1780 = vmatprep.subr.mxu0 0.0
  %1781 = vmatpush2.msra.mxu0 0.0
  %1782 = vmatprep.subr.mxu0 0.0
  %1783 = vmatpush2.msra.mxu0 0.0
  %1784 = vmatprep.subr.mxu0 0.0
  %1785 = vmatpush2.msra.mxu0 0.0
  %1786 = vmatprep.subr.mxu0 0.0
  %1787 = vmatpush2.msra.mxu0 0.0
  %1788 = vmatprep.subr.mxu0 0.0
  %1789 = vmatpush2.msra.mxu0 0.0
  %1790 = vmatprep.subr.mxu0 0.0
  %1791 = vmatpush2.msra.mxu0 0.0
  %1792 = vmatprep.subr.mxu0 0.0
  %1793 = vmatpush2.msra.mxu0 0.0
  %1794 = vmatprep.subr.mxu0 0.0
  %1795 = vmatpush2.msra.mxu0 0.0
  %1796 = vmatprep.subr.mxu0 0.0
  %1797 = vmatpush2.msra.mxu0 0.0
  %1798 = vmatprep.subr.mxu0 0.0
  %1799 = vmatpush2.msra.mxu0 0.0
  %1800 = vmatprep.subr.mxu0 0.0
  %1801 = vmatpush2.msra.mxu0 0.0
  %1802 = vmatprep.subr.mxu0 0.0
  %1803 = vmatpush2.msra.mxu0 0.0
  %1804 = vmatprep.subr.mxu0 0.0
  %1805 = vmatpush2.msra.mxu0 0.0
  %1806 = vmatprep.subr.mxu0 0.0
  %1807 = vmatpush2.msra.mxu0 0.0
  %1808 = vmatprep.subr.mxu0 0.0
  %1809 = vmatpush2.msra.mxu0 0.0
  %1810 = vmatprep.subr.mxu0 0.0
  %1811 = vmatpush2.msra.mxu0 0.0
  %1812 = vmatprep.mubr.f32.mxu0 0.0
  %1813 = vmatmul.mubr.f32.gmra.mxu0 %v1572
  %v1814 = vpop.f32.mrf.mxu0
  %v1815 = vadd.f32 0.0, %v1814
  %v1816 = vpop.f32.mrf.mxu0
  %1817 = vdwg.mxu0
  %v1819 = vsel %vm77, %v1747, 0
  %1821 = vmatprep.subr.mxu0 0.0
  %1822 = vmatpush1.msra.mxu0 0.0
  %1823 = vmatprep.subr.mxu0 0.0
  %1824 = vmatpush1.msra.mxu0 0.0
  %1825 = vmatprep.subr.mxu0 0.0
  %1826 = vmatpush1.msra.mxu0 0.0
  %1827 = vmatprep.subr.mxu0 0.0
  %1828 = vmatpush1.msra.mxu0 0.0
  %1829 = vmatprep.subr.mxu0 0.0
  %1830 = vmatpush1.msra.mxu0 0.0
  %1831 = vmatprep.subr.mxu0 0.0
  %1832 = vmatpush1.msra.mxu0 0.0
  %1833 = vmatprep.subr.mxu0 0.0
  %1834 = vmatpush1.msra.mxu0 0.0
  %1835 = vmatprep.subr.mxu0 0.0
  %1836 = vmatpush1.msra.mxu0 0.0
  %1837 = vmatprep.subr.mxu0 0.0
  %1838 = vmatpush1.msra.mxu0 0.0
  %1839 = vmatprep.subr.mxu0 0.0
  %1840 = vmatpush1.msra.mxu0 0.0
  %1841 = vmatprep.subr.mxu0 0.0
  %1842 = vmatpush1.msra.mxu0 0.0
  %1843 = vmatprep.subr.mxu0 0.0
  %1844 = vmatpush1.msra.mxu0 0.0
  %1845 = vmatprep.subr.mxu0 0.0
  %1846 = vmatpush1.msra.mxu0 %v38
  %1847 = vmatprep.subr.mxu0 0.0
  %1848 = vmatpush1.msra.mxu0 %v37
  %1849 = vmatprep.subr.mxu0 0.0
  %1850 = vmatpush1.msra.mxu0 %v36
  %1851 = vmatprep.subr.mxu0 0.0
  %1852 = vmatpush1.msra.mxu0 %v35
  %1853 = vmatprep.subr.mxu0 0.0
  %1854 = vmatpush2.msra.mxu0 0.0
  %1855 = vmatprep.subr.mxu0 0.0
  %1856 = vmatpush2.msra.mxu0 0.0
  %1857 = vmatprep.subr.mxu0 0.0
  %1858 = vmatpush2.msra.mxu0 0.0
  %1859 = vmatprep.subr.mxu0 0.0
  %1860 = vmatpush2.msra.mxu0 0.0
  %1861 = vmatprep.subr.mxu0 0.0
  %1862 = vmatpush2.msra.mxu0 0.0
  %1863 = vmatprep.subr.mxu0 0.0
  %1864 = vmatpush2.msra.mxu0 0.0
  %1865 = vmatprep.subr.mxu0 0.0
  %1866 = vmatpush2.msra.mxu0 0.0
  %1867 = vmatprep.subr.mxu0 0.0
  %1868 = vmatpush2.msra.mxu0 0.0
  %1869 = vmatprep.subr.mxu0 0.0
  %1870 = vmatpush2.msra.mxu0 0.0
  %1871 = vmatprep.subr.mxu0 0.0
  %1872 = vmatpush2.msra.mxu0 0.0
  %1873 = vmatprep.subr.mxu0 0.0
  %1874 = vmatpush2.msra.mxu0 0.0
  %1875 = vmatprep.subr.mxu0 0.0
  %1876 = vmatpush2.msra.mxu0 0.0
  %1877 = vmatprep.subr.mxu0 0.0
  %1878 = vmatpush2.msra.mxu0 0.0
  %1879 = vmatprep.subr.mxu0 0.0
  %1880 = vmatpush2.msra.mxu0 0.0
  %1881 = vmatprep.subr.mxu0 0.0
  %1882 = vmatpush2.msra.mxu0 0.0
  %1883 = vmatprep.subr.mxu0 0.0
  %1884 = vmatpush2.msra.mxu0 0.0
  %1885 = vmatprep.mubr.f32.mxu0 0.0
  %1886 = vmatmul.mubr.f32.gmra.mxu0 %v1819
  %v1887 = vpop.f32.mrf.mxu0
  %v1888 = vadd.f32 %v1815, %v1887
  %v1889 = vpop.f32.mrf.mxu0
  %1890 = vdwg.mxu0
  %v1891 = vadd.f32 %v1888, %v48
  %v1892 = vxor.u32 %v1891, 2147483648
  %v1893 = vmul.f32 %v1892, 1.442695
  %v1894 = vpow.pop %v1893
  %v1895 = vadd.f32 %v1894, 1.0
  %v1896 = vrcp.pop %v1895
  %v1897 = vmul.f32 1.0, %v1896
  %v1898 = vtanh.pop %v1891
  %v1899 = vmul.f32 %v1897, %v1492
  %1901 = vrot.lane.b32.xlu0 %v1898, 64
  %v1902 = vpop.permute.xlu0 %1901
  %v1904 = vmul.f32 %v1897, %v1902
  %1906 = vrot.lane.b32.xlu0 %v1904, 32
  %v1907 = vpop.permute.xlu0 %1906
  %v1909 = vadd.f32 %v1899, %v1907
  %v1910 = vtanh.pop %v1909
  %1912 = vrot.lane.b32.xlu0 %v1910, 64
  %v1913 = vpop.permute.xlu0 %1912
  %v1915 = vmul.f32 %v1897, %v1913
  %1916 = vmatprep.subr.mxu0 0.0
  %1917 = vmatpush1.msra.mxu0 0.0
  %1918 = vmatprep.subr.mxu0 0.0
  %1919 = vmatpush1.msra.mxu0 0.0
  %1920 = vmatprep.subr.mxu0 0.0
  %1921 = vmatpush1.msra.mxu0 0.0
  %1922 = vmatprep.subr.mxu0 0.0
  %1923 = vmatpush1.msra.mxu0 0.0
  %1924 = vmatprep.subr.mxu0 0.0
  %1925 = vmatpush1.msra.mxu0 0.0
  %1926 = vmatprep.subr.mxu0 0.0
  %1927 = vmatpush1.msra.mxu0 0.0
  %1928 = vmatprep.subr.mxu0 0.0
  %1929 = vmatpush1.msra.mxu0 0.0
  %1930 = vmatprep.subr.mxu0 0.0
  %1931 = vmatpush1.msra.mxu0 0.0
  %1932 = vmatprep.subr.mxu0 0.0
  %1933 = vmatpush1.msra.mxu0 0.0
  %1934 = vmatprep.subr.mxu0 0.0
  %1935 = vmatpush1.msra.mxu0 0.0
  %1936 = vmatprep.subr.mxu0 0.0
  %1937 = vmatpush1.msra.mxu0 0.0
  %1938 = vmatprep.subr.mxu0 0.0
  %1939 = vmatpush1.msra.mxu0 0.0
  %1940 = vmatprep.subr.mxu0 0.0
  %1941 = vmatpush1.msra.mxu0 %v57
  %1942 = vmatprep.subr.mxu0 0.0
  %1943 = vmatpush1.msra.mxu0 %v56
  %1944 = vmatprep.subr.mxu0 0.0
  %1945 = vmatpush1.msra.mxu0 %v55
  %1946 = vmatprep.subr.mxu0 0.0
  %1947 = vmatpush1.msra.mxu0 %v54
  %1948 = vmatprep.subr.mxu0 0.0
  %1949 = vmatpush2.msra.mxu0 0.0
  %1950 = vmatprep.subr.mxu0 0.0
  %1951 = vmatpush2.msra.mxu0 0.0
  %1952 = vmatprep.subr.mxu0 0.0
  %1953 = vmatpush2.msra.mxu0 0.0
  %1954 = vmatprep.subr.mxu0 0.0
  %1955 = vmatpush2.msra.mxu0 0.0
  %1956 = vmatprep.subr.mxu0 0.0
  %1957 = vmatpush2.msra.mxu0 0.0
  %1958 = vmatprep.subr.mxu0 0.0
  %1959 = vmatpush2.msra.mxu0 0.0
  %1960 = vmatprep.subr.mxu0 0.0
  %1961 = vmatpush2.msra.mxu0 0.0
  %1962 = vmatprep.subr.mxu0 0.0
  %1963 = vmatpush2.msra.mxu0 0.0
  %1964 = vmatprep.subr.mxu0 0.0
  %1965 = vmatpush2.msra.mxu0 0.0
  %1966 = vmatprep.subr.mxu0 0.0
  %1967 = vmatpush2.msra.mxu0 0.0
  %1968 = vmatprep.subr.mxu0 0.0
  %1969 = vmatpush2.msra.mxu0 0.0
  %1970 = vmatprep.subr.mxu0 0.0
  %1971 = vmatpush2.msra.mxu0 0.0
  %1972 = vmatprep.subr.mxu0 0.0
  %1973 = vmatpush2.msra.mxu0 0.0
  %1974 = vmatprep.subr.mxu0 0.0
  %1975 = vmatpush2.msra.mxu0 0.0
  %1976 = vmatprep.subr.mxu0 0.0
  %1977 = vmatpush2.msra.mxu0 0.0
  %1978 = vmatprep.subr.mxu0 0.0
  %1979 = vmatpush2.msra.mxu0 0.0
  %1980 = vmatprep.mubr.f32.mxu0 0.0
  %1981 = vmatmul.mubr.f32.gmra.mxu0 %v1672
  %v1982 = vpop.f32.mrf.mxu0
  %v1983 = vadd.f32 0.0, %v1982
  %v1984 = vpop.f32.mrf.mxu0
  %1985 = vdwg.mxu0
  %1987 = vrot.lane.b32.xlu0 %v1915, 32
  %v1988 = vpop.permute.xlu0 %1987
  %v1989 = vsel %vm77, %v1988, 0
  %1991 = vmatprep.subr.mxu0 0.0
  %1992 = vmatpush1.msra.mxu0 0.0
  %1993 = vmatprep.subr.mxu0 0.0
  %1994 = vmatpush1.msra.mxu0 0.0
  %1995 = vmatprep.subr.mxu0 0.0
  %1996 = vmatpush1.msra.mxu0 0.0
  %1997 = vmatprep.subr.mxu0 0.0
  %1998 = vmatpush1.msra.mxu0 0.0
  %1999 = vmatprep.subr.mxu0 0.0
  %2000 = vmatpush1.msra.mxu0 0.0
  %2001 = vmatprep.subr.mxu0 0.0
  %2002 = vmatpush1.msra.mxu0 0.0
  %2003 = vmatprep.subr.mxu0 0.0
  %2004 = vmatpush1.msra.mxu0 0.0
  %2005 = vmatprep.subr.mxu0 0.0
  %2006 = vmatpush1.msra.mxu0 0.0
  %2007 = vmatprep.subr.mxu0 0.0
  %2008 = vmatpush1.msra.mxu0 0.0
  %2009 = vmatprep.subr.mxu0 0.0
  %2010 = vmatpush1.msra.mxu0 0.0
  %2011 = vmatprep.subr.mxu0 0.0
  %2012 = vmatpush1.msra.mxu0 0.0
  %2013 = vmatprep.subr.mxu0 0.0
  %2014 = vmatpush1.msra.mxu0 0.0
  %2015 = vmatprep.subr.mxu0 0.0
  %2016 = vmatpush1.msra.mxu0 %v53
  %2017 = vmatprep.subr.mxu0 0.0
  %2018 = vmatpush1.msra.mxu0 %v52
  %2019 = vmatprep.subr.mxu0 0.0
  %2020 = vmatpush1.msra.mxu0 %v51
  %2021 = vmatprep.subr.mxu0 0.0
  %2022 = vmatpush1.msra.mxu0 %v50
  %2023 = vmatprep.subr.mxu0 0.0
  %2024 = vmatpush2.msra.mxu0 0.0
  %2025 = vmatprep.subr.mxu0 0.0
  %2026 = vmatpush2.msra.mxu0 0.0
  %2027 = vmatprep.subr.mxu0 0.0
  %2028 = vmatpush2.msra.mxu0 0.0
  %2029 = vmatprep.subr.mxu0 0.0
  %2030 = vmatpush2.msra.mxu0 0.0
  %2031 = vmatprep.subr.mxu0 0.0
  %2032 = vmatpush2.msra.mxu0 0.0
  %2033 = vmatprep.subr.mxu0 0.0
  %2034 = vmatpush2.msra.mxu0 0.0
  %2035 = vmatprep.subr.mxu0 0.0
  %2036 = vmatpush2.msra.mxu0 0.0
  %2037 = vmatprep.subr.mxu0 0.0
  %2038 = vmatpush2.msra.mxu0 0.0
  %2039 = vmatprep.subr.mxu0 0.0
  %2040 = vmatpush2.msra.mxu0 0.0
  %2041 = vmatprep.subr.mxu0 0.0
  %2042 = vmatpush2.msra.mxu0 0.0
  %2043 = vmatprep.subr.mxu0 0.0
  %2044 = vmatpush2.msra.mxu0 0.0
  %2045 = vmatprep.subr.mxu0 0.0
  %2046 = vmatpush2.msra.mxu0 0.0
  %2047 = vmatprep.subr.mxu0 0.0
  %2048 = vmatpush2.msra.mxu0 0.0
  %2049 = vmatprep.subr.mxu0 0.0
  %2050 = vmatpush2.msra.mxu0 0.0
  %2051 = vmatprep.subr.mxu0 0.0
  %2052 = vmatpush2.msra.mxu0 0.0
  %2053 = vmatprep.subr.mxu0 0.0
  %2054 = vmatpush2.msra.mxu0 0.0
  %2055 = vmatprep.mubr.f32.mxu0 0.0
  %2056 = vmatmul.mubr.f32.gmra.mxu0 %v1989
  %v2057 = vpop.f32.mrf.mxu0
  %v2058 = vadd.f32 %v1983, %v2057
  %v2059 = vpop.f32.mrf.mxu0
  %2060 = vdwg.mxu0
  %v2061 = vadd.f32 %v2058, %v63
  %v2062 = vxor.u32 %v2061, 2147483648
  %v2063 = vmul.f32 %v2062, 1.442695
  %v2064 = vpow.pop %v2063
  %v2065 = vadd.f32 %v2064, 1.0
  %v2066 = vrcp.pop %v2065
  %v2067 = vmul.f32 1.0, %v2066
  %v2068 = vtanh.pop %v2061
  %v2069 = vmul.f32 %v2067, %v1662
  %2071 = vrot.lane.b32.xlu0 %v2068, 64
  %v2072 = vpop.permute.xlu0 %2071
  %v2074 = vmul.f32 %v2067, %v2072
  %2076 = vrot.lane.b32.xlu0 %v2074, 32
  %v2077 = vpop.permute.xlu0 %2076
  %v2079 = vadd.f32 %v2069, %v2077
  %v2080 = vtanh.pop %v2079
  %2082 = vrot.lane.b32.xlu0 %v2080, 64
  %v2083 = vpop.permute.xlu0 %2082
  %v2085 = vmul.f32 %v2067, %v2083
  %2087 = vrot.lane.b32.xlu0 %v2085, 32
  %v2088 = vpop.permute.xlu0 %2087
  %v2089 = vsel %vm77, %v2088, 0
  %2091 = vmatprep.subr.mxu0 0.0
  %2092 = vmatpush1.msra.mxu0 0.0
  %2093 = vmatprep.subr.mxu0 0.0
  %2094 = vmatpush1.msra.mxu0 0.0
  %2095 = vmatprep.subr.mxu0 0.0
  %2096 = vmatpush1.msra.mxu0 0.0
  %2097 = vmatprep.subr.mxu0 0.0
  %2098 = vmatpush1.msra.mxu0 0.0
  %2099 = vmatprep.subr.mxu0 0.0
  %2100 = vmatpush1.msra.mxu0 0.0
  %2101 = vmatprep.subr.mxu0 0.0
  %2102 = vmatpush1.msra.mxu0 0.0
  %2103 = vmatprep.subr.mxu0 0.0
  %2104 = vmatpush1.msra.mxu0 0.0
  %2105 = vmatprep.subr.mxu0 0.0
  %2106 = vmatpush1.msra.mxu0 0.0
  %2107 = vmatprep.subr.mxu0 0.0
  %2108 = vmatpush1.msra.mxu0 0.0
  %2109 = vmatprep.subr.mxu0 0.0
  %2110 = vmatpush1.msra.mxu0 0.0
  %2111 = vmatprep.subr.mxu0 0.0
  %2112 = vmatpush1.msra.mxu0 0.0
  %2113 = vmatprep.subr.mxu0 0.0
  %2114 = vmatpush1.msra.mxu0 0.0
  %2115 = vmatprep.subr.mxu0 0.0
  %2116 = vmatpush1.msra.mxu0 %v68
  %2117 = vmatprep.subr.mxu0 0.0
  %2118 = vmatpush1.msra.mxu0 %v67
  %2119 = vmatprep.subr.mxu0 0.0
  %2120 = vmatpush1.msra.mxu0 %v66
  %2121 = vmatprep.subr.mxu0 0.0
  %2122 = vmatpush1.msra.mxu0 %v65
  %2123 = vmatprep.subr.mxu0 0.0
  %2124 = vmatpush2.msra.mxu0 0.0
  %2125 = vmatprep.subr.mxu0 0.0
  %2126 = vmatpush2.msra.mxu0 0.0
  %2127 = vmatprep.subr.mxu0 0.0
  %2128 = vmatpush2.msra.mxu0 0.0
  %2129 = vmatprep.subr.mxu0 0.0
  %2130 = vmatpush2.msra.mxu0 0.0
  %2131 = vmatprep.subr.mxu0 0.0
  %2132 = vmatpush2.msra.mxu0 0.0
  %2133 = vmatprep.subr.mxu0 0.0
  %2134 = vmatpush2.msra.mxu0 0.0
  %2135 = vmatprep.subr.mxu0 0.0
  %2136 = vmatpush2.msra.mxu0 0.0
  %2137 = vmatprep.subr.mxu0 0.0
  %2138 = vmatpush2.msra.mxu0 0.0
  %2139 = vmatprep.subr.mxu0 0.0
  %2140 = vmatpush2.msra.mxu0 0.0
  %2141 = vmatprep.subr.mxu0 0.0
  %2142 = vmatpush2.msra.mxu0 0.0
  %2143 = vmatprep.subr.mxu0 0.0
  %2144 = vmatpush2.msra.mxu0 0.0
  %2145 = vmatprep.subr.mxu0 0.0
  %2146 = vmatpush2.msra.mxu0 0.0
  %2147 = vmatprep.subr.mxu0 0.0
  %2148 = vmatpush2.msra.mxu0 0.0
  %2149 = vmatprep.subr.mxu0 0.0
  %2150 = vmatpush2.msra.mxu0 0.0
  %2151 = vmatprep.subr.mxu0 0.0
  %2152 = vmatpush2.msra.mxu0 0.0
  %2153 = vmatprep.subr.mxu0 0.0
  %2154 = vmatpush2.msra.mxu0 0.0
  %2155 = vmatprep.mubr.f32.mxu0 0.0
  %2156 = vmatmul.mubr.f32.gmra.mxu0 %v2089
  %v2157 = vpop.f32.mrf.mxu0
  %v2158 = vadd.f32 %v74, %v2157
  %v2159 = vpop.f32.mrf.mxu0
  %2160 = vdwg.mxu0
  %s2161 = scalar_lea.vmem %s9, 32
  %2162 = vst [vmem:[%s2161] sm:$0xff] %v2158
  %s2163 = scalar_lea.vmem %s0, 40
  %v2164 = vld [vmem:[%s2163] sm:$0xff]
  %2165 = vmatprep.subr.mxu0 0.0
  %2166 = vmatpush1.msra.mxu0 0.0
  %2167 = vmatprep.subr.mxu0 0.0
  %2168 = vmatpush1.msra.mxu0 0.0
  %2169 = vmatprep.subr.mxu0 0.0
  %2170 = vmatpush1.msra.mxu0 0.0
  %2171 = vmatprep.subr.mxu0 0.0
  %2172 = vmatpush1.msra.mxu0 0.0
  %2173 = vmatprep.subr.mxu0 0.0
  %2174 = vmatpush1.msra.mxu0 0.0
  %2175 = vmatprep.subr.mxu0 0.0
  %2176 = vmatpush1.msra.mxu0 0.0
  %2177 = vmatprep.subr.mxu0 0.0
  %2178 = vmatpush1.msra.mxu0 0.0
  %2179 = vmatprep.subr.mxu0 0.0
  %2180 = vmatpush1.msra.mxu0 0.0
  %2181 = vmatprep.subr.mxu0 0.0
  %2182 = vmatpush1.msra.mxu0 0.0
  %2183 = vmatprep.subr.mxu0 0.0
  %2184 = vmatpush1.msra.mxu0 0.0
  %2185 = vmatprep.subr.mxu0 0.0
  %2186 = vmatpush1.msra.mxu0 0.0
  %2187 = vmatprep.subr.mxu0 0.0
  %2188 = vmatpush1.msra.mxu0 0.0
  %2189 = vmatprep.subr.mxu0 0.0
  %2190 = vmatpush1.msra.mxu0 %v42
  %2191 = vmatprep.subr.mxu0 0.0
  %2192 = vmatpush1.msra.mxu0 %v41
  %2193 = vmatprep.subr.mxu0 0.0
  %2194 = vmatpush1.msra.mxu0 %v40
  %2195 = vmatprep.subr.mxu0 0.0
  %2196 = vmatpush1.msra.mxu0 %v39
  %2197 = vmatprep.subr.mxu0 0.0
  %2198 = vmatpush2.msra.mxu0 0.0
  %2199 = vmatprep.subr.mxu0 0.0
  %2200 = vmatpush2.msra.mxu0 0.0
  %2201 = vmatprep.subr.mxu0 0.0
  %2202 = vmatpush2.msra.mxu0 0.0
  %2203 = vmatprep.subr.mxu0 0.0
  %2204 = vmatpush2.msra.mxu0 0.0
  %2205 = vmatprep.subr.mxu0 0.0
  %2206 = vmatpush2.msra.mxu0 0.0
  %2207 = vmatprep.subr.mxu0 0.0
  %2208 = vmatpush2.msra.mxu0 0.0
  %2209 = vmatprep.subr.mxu0 0.0
  %2210 = vmatpush2.msra.mxu0 0.0
  %2211 = vmatprep.subr.mxu0 0.0
  %2212 = vmatpush2.msra.mxu0 0.0
  %2213 = vmatprep.subr.mxu0 0.0
  %2214 = vmatpush2.msra.mxu0 0.0
  %2215 = vmatprep.subr.mxu0 0.0
  %2216 = vmatpush2.msra.mxu0 0.0
  %2217 = vmatprep.subr.mxu0 0.0
  %2218 = vmatpush2.msra.mxu0 0.0
  %2219 = vmatprep.subr.mxu0 0.0
  %2220 = vmatpush2.msra.mxu0 0.0
  %2221 = vmatprep.subr.mxu0 0.0
  %2222 = vmatpush2.msra.mxu0 0.0
  %2223 = vmatprep.subr.mxu0 0.0
  %2224 = vmatpush2.msra.mxu0 0.0
  %2225 = vmatprep.subr.mxu0 0.0
  %2226 = vmatpush2.msra.mxu0 0.0
  %2227 = vmatprep.subr.mxu0 0.0
  %2228 = vmatpush2.msra.mxu0 0.0
  %2229 = vmatprep.mubr.f32.mxu0 0.0
  %2230 = vmatmul.mubr.f32.gmra.mxu0 %v1989
  %v2231 = vpop.f32.mrf.mxu0
  %v2232 = vadd.f32 0.0, %v2231
  %v2233 = vpop.f32.mrf.mxu0
  %2234 = vdwg.mxu0
  %v2236 = vsel %vm77, %v2164, 0
  %2238 = vmatprep.subr.mxu0 0.0
  %2239 = vmatpush1.msra.mxu0 0.0
  %2240 = vmatprep.subr.mxu0 0.0
  %2241 = vmatpush1.msra.mxu0 0.0
  %2242 = vmatprep.subr.mxu0 0.0
  %2243 = vmatpush1.msra.mxu0 0.0
  %2244 = vmatprep.subr.mxu0 0.0
  %2245 = vmatpush1.msra.mxu0 0.0
  %2246 = vmatprep.subr.mxu0 0.0
  %2247 = vmatpush1.msra.mxu0 0.0
  %2248 = vmatprep.subr.mxu0 0.0
  %2249 = vmatpush1.msra.mxu0 0.0
  %2250 = vmatprep.subr.mxu0 0.0
  %2251 = vmatpush1.msra.mxu0 0.0
  %2252 = vmatprep.subr.mxu0 0.0
  %2253 = vmatpush1.msra.mxu0 0.0
  %2254 = vmatprep.subr.mxu0 0.0
  %2255 = vmatpush1.msra.mxu0 0.0
  %2256 = vmatprep.subr.mxu0 0.0
  %2257 = vmatpush1.msra.mxu0 0.0
  %2258 = vmatprep.subr.mxu0 0.0
  %2259 = vmatpush1.msra.mxu0 0.0
  %2260 = vmatprep.subr.mxu0 0.0
  %2261 = vmatpush1.msra.mxu0 0.0
  %2262 = vmatprep.subr.mxu0 0.0
  %2263 = vmatpush1.msra.mxu0 %v38
  %2264 = vmatprep.subr.mxu0 0.0
  %2265 = vmatpush1.msra.mxu0 %v37
  %2266 = vmatprep.subr.mxu0 0.0
  %2267 = vmatpush1.msra.mxu0 %v36
  %2268 = vmatprep.subr.mxu0 0.0
  %2269 = vmatpush1.msra.mxu0 %v35
  %2270 = vmatprep.subr.mxu0 0.0
  %2271 = vmatpush2.msra.mxu0 0.0
  %2272 = vmatprep.subr.mxu0 0.0
  %2273 = vmatpush2.msra.mxu0 0.0
  %2274 = vmatprep.subr.mxu0 0.0
  %2275 = vmatpush2.msra.mxu0 0.0
  %2276 = vmatprep.subr.mxu0 0.0
  %2277 = vmatpush2.msra.mxu0 0.0
  %2278 = vmatprep.subr.mxu0 0.0
  %2279 = vmatpush2.msra.mxu0 0.0
  %2280 = vmatprep.subr.mxu0 0.0
  %2281 = vmatpush2.msra.mxu0 0.0
  %2282 = vmatprep.subr.mxu0 0.0
  %2283 = vmatpush2.msra.mxu0 0.0
  %2284 = vmatprep.subr.mxu0 0.0
  %2285 = vmatpush2.msra.mxu0 0.0
  %2286 = vmatprep.subr.mxu0 0.0
  %2287 = vmatpush2.msra.mxu0 0.0
  %2288 = vmatprep.subr.mxu0 0.0
  %2289 = vmatpush2.msra.mxu0 0.0
  %2290 = vmatprep.subr.mxu0 0.0
  %2291 = vmatpush2.msra.mxu0 0.0
  %2292 = vmatprep.subr.mxu0 0.0
  %2293 = vmatpush2.msra.mxu0 0.0
  %2294 = vmatprep.subr.mxu0 0.0
  %2295 = vmatpush2.msra.mxu0 0.0
  %2296 = vmatprep.subr.mxu0 0.0
  %2297 = vmatpush2.msra.mxu0 0.0
  %2298 = vmatprep.subr.mxu0 0.0
  %2299 = vmatpush2.msra.mxu0 0.0
  %2300 = vmatprep.subr.mxu0 0.0
  %2301 = vmatpush2.msra.mxu0 0.0
  %2302 = vmatprep.mubr.f32.mxu0 0.0
  %2303 = vmatmul.mubr.f32.gmra.mxu0 %v2236
  %v2304 = vpop.f32.mrf.mxu0
  %v2305 = vadd.f32 %v2232, %v2304
  %v2306 = vpop.f32.mrf.mxu0
  %2307 = vdwg.mxu0
  %v2308 = vadd.f32 %v2305, %v48
  %v2309 = vxor.u32 %v2308, 2147483648
  %v2310 = vmul.f32 %v2309, 1.442695
  %v2311 = vpow.pop %v2310
  %v2312 = vadd.f32 %v2311, 1.0
  %v2313 = vrcp.pop %v2312
  %v2314 = vmul.f32 1.0, %v2313
  %v2315 = vtanh.pop %v2308
  %v2316 = vmul.f32 %v2314, %v1909
  %2318 = vrot.lane.b32.xlu0 %v2315, 64
  %v2319 = vpop.permute.xlu0 %2318
  %v2321 = vmul.f32 %v2314, %v2319
  %2323 = vrot.lane.b32.xlu0 %v2321, 32
  %v2324 = vpop.permute.xlu0 %2323
  %v2326 = vadd.f32 %v2316, %v2324
  %v2327 = vtanh.pop %v2326
  %2329 = vrot.lane.b32.xlu0 %v2327, 64
  %v2330 = vpop.permute.xlu0 %2329
  %v2332 = vmul.f32 %v2314, %v2330
  %2333 = vmatprep.subr.mxu0 0.0
  %2334 = vmatpush1.msra.mxu0 0.0
  %2335 = vmatprep.subr.mxu0 0.0
  %2336 = vmatpush1.msra.mxu0 0.0
  %2337 = vmatprep.subr.mxu0 0.0
  %2338 = vmatpush1.msra.mxu0 0.0
  %2339 = vmatprep.subr.mxu0 0.0
  %2340 = vmatpush1.msra.mxu0 0.0
  %2341 = vmatprep.subr.mxu0 0.0
  %2342 = vmatpush1.msra.mxu0 0.0
  %2343 = vmatprep.subr.mxu0 0.0
  %2344 = vmatpush1.msra.mxu0 0.0
  %2345 = vmatprep.subr.mxu0 0.0
  %2346 = vmatpush1.msra.mxu0 0.0
  %2347 = vmatprep.subr.mxu0 0.0
  %2348 = vmatpush1.msra.mxu0 0.0
  %2349 = vmatprep.subr.mxu0 0.0
  %2350 = vmatpush1.msra.mxu0 0.0
  %2351 = vmatprep.subr.mxu0 0.0
  %2352 = vmatpush1.msra.mxu0 0.0
  %2353 = vmatprep.subr.mxu0 0.0
  %2354 = vmatpush1.msra.mxu0 0.0
  %2355 = vmatprep.subr.mxu0 0.0
  %2356 = vmatpush1.msra.mxu0 0.0
  %2357 = vmatprep.subr.mxu0 0.0
  %2358 = vmatpush1.msra.mxu0 %v57
  %2359 = vmatprep.subr.mxu0 0.0
  %2360 = vmatpush1.msra.mxu0 %v56
  %2361 = vmatprep.subr.mxu0 0.0
  %2362 = vmatpush1.msra.mxu0 %v55
  %2363 = vmatprep.subr.mxu0 0.0
  %2364 = vmatpush1.msra.mxu0 %v54
  %2365 = vmatprep.subr.mxu0 0.0
  %2366 = vmatpush2.msra.mxu0 0.0
  %2367 = vmatprep.subr.mxu0 0.0
  %2368 = vmatpush2.msra.mxu0 0.0
  %2369 = vmatprep.subr.mxu0 0.0
  %2370 = vmatpush2.msra.mxu0 0.0
  %2371 = vmatprep.subr.mxu0 0.0
  %2372 = vmatpush2.msra.mxu0 0.0
  %2373 = vmatprep.subr.mxu0 0.0
  %2374 = vmatpush2.msra.mxu0 0.0
  %2375 = vmatprep.subr.mxu0 0.0
  %2376 = vmatpush2.msra.mxu0 0.0
  %2377 = vmatprep.subr.mxu0 0.0
  %2378 = vmatpush2.msra.mxu0 0.0
  %2379 = vmatprep.subr.mxu0 0.0
  %2380 = vmatpush2.msra.mxu0 0.0
  %2381 = vmatprep.subr.mxu0 0.0
  %2382 = vmatpush2.msra.mxu0 0.0
  %2383 = vmatprep.subr.mxu0 0.0
  %2384 = vmatpush2.msra.mxu0 0.0
  %2385 = vmatprep.subr.mxu0 0.0
  %2386 = vmatpush2.msra.mxu0 0.0
  %2387 = vmatprep.subr.mxu0 0.0
  %2388 = vmatpush2.msra.mxu0 0.0
  %2389 = vmatprep.subr.mxu0 0.0
  %2390 = vmatpush2.msra.mxu0 0.0
  %2391 = vmatprep.subr.mxu0 0.0
  %2392 = vmatpush2.msra.mxu0 0.0
  %2393 = vmatprep.subr.mxu0 0.0
  %2394 = vmatpush2.msra.mxu0 0.0
  %2395 = vmatprep.subr.mxu0 0.0
  %2396 = vmatpush2.msra.mxu0 0.0
  %2397 = vmatprep.mubr.f32.mxu0 0.0
  %2398 = vmatmul.mubr.f32.gmra.mxu0 %v2089
  %v2399 = vpop.f32.mrf.mxu0
  %v2400 = vadd.f32 0.0, %v2399
  %v2401 = vpop.f32.mrf.mxu0
  %2402 = vdwg.mxu0
  %2404 = vrot.lane.b32.xlu0 %v2332, 32
  %v2405 = vpop.permute.xlu0 %2404
  %v2406 = vsel %vm77, %v2405, 0
  %2408 = vmatprep.subr.mxu0 0.0
  %2409 = vmatpush1.msra.mxu0 0.0
  %2410 = vmatprep.subr.mxu0 0.0
  %2411 = vmatpush1.msra.mxu0 0.0
  %2412 = vmatprep.subr.mxu0 0.0
  %2413 = vmatpush1.msra.mxu0 0.0
  %2414 = vmatprep.subr.mxu0 0.0
  %2415 = vmatpush1.msra.mxu0 0.0
  %2416 = vmatprep.subr.mxu0 0.0
  %2417 = vmatpush1.msra.mxu0 0.0
  %2418 = vmatprep.subr.mxu0 0.0
  %2419 = vmatpush1.msra.mxu0 0.0
  %2420 = vmatprep.subr.mxu0 0.0
  %2421 = vmatpush1.msra.mxu0 0.0
  %2422 = vmatprep.subr.mxu0 0.0
  %2423 = vmatpush1.msra.mxu0 0.0
  %2424 = vmatprep.subr.mxu0 0.0
  %2425 = vmatpush1.msra.mxu0 0.0
  %2426 = vmatprep.subr.mxu0 0.0
  %2427 = vmatpush1.msra.mxu0 0.0
  %2428 = vmatprep.subr.mxu0 0.0
  %2429 = vmatpush1.msra.mxu0 0.0
  %2430 = vmatprep.subr.mxu0 0.0
  %2431 = vmatpush1.msra.mxu0 0.0
  %2432 = vmatprep.subr.mxu0 0.0
  %2433 = vmatpush1.msra.mxu0 %v53
  %2434 = vmatprep.subr.mxu0 0.0
  %2435 = vmatpush1.msra.mxu0 %v52
  %2436 = vmatprep.subr.mxu0 0.0
  %2437 = vmatpush1.msra.mxu0 %v51
  %2438 = vmatprep.subr.mxu0 0.0
  %2439 = vmatpush1.msra.mxu0 %v50
  %2440 = vmatprep.subr.mxu0 0.0
  %2441 = vmatpush2.msra.mxu0 0.0
  %2442 = vmatprep.subr.mxu0 0.0
  %2443 = vmatpush2.msra.mxu0 0.0
  %2444 = vmatprep.subr.mxu0 0.0
  %2445 = vmatpush2.msra.mxu0 0.0
  %2446 = vmatprep.subr.mxu0 0.0
  %2447 = vmatpush2.msra.mxu0 0.0
  %2448 = vmatprep.subr.mxu0 0.0
  %2449 = vmatpush2.msra.mxu0 0.0
  %2450 = vmatprep.subr.mxu0 0.0
  %2451 = vmatpush2.msra.mxu0 0.0
  %2452 = vmatprep.subr.mxu0 0.0
  %2453 = vmatpush2.msra.mxu0 0.0
  %2454 = vmatprep.subr.mxu0 0.0
  %2455 = vmatpush2.msra.mxu0 0.0
  %2456 = vmatprep.subr.mxu0 0.0
  %2457 = vmatpush2.msra.mxu0 0.0
  %2458 = vmatprep.subr.mxu0 0.0
  %2459 = vmatpush2.msra.mxu0 0.0
  %2460 = vmatprep.subr.mxu0 0.0
  %2461 = vmatpush2.msra.mxu0 0.0
  %2462 = vmatprep.subr.mxu0 0.0
  %2463 = vmatpush2.msra.mxu0 0.0
  %2464 = vmatprep.subr.mxu0 0.0
  %2465 = vmatpush2.msra.mxu0 0.0
  %2466 = vmatprep.subr.mxu0 0.0
  %2467 = vmatpush2.msra.mxu0 0.0
  %2468 = vmatprep.subr.mxu0 0.0
  %2469 = vmatpush2.msra.mxu0 0.0
  %2470 = vmatprep.subr.mxu0 0.0
  %2471 = vmatpush2.msra.mxu0 0.0
  %2472 = vmatprep.mubr.f32.mxu0 0.0
  %2473 = vmatmul.mubr.f32.gmra.mxu0 %v2406
  %v2474 = vpop.f32.mrf.mxu0
  %v2475 = vadd.f32 %v2400, %v2474
  %v2476 = vpop.f32.mrf.mxu0
  %2477 = vdwg.mxu0
  %v2478 = vadd.f32 %v2475, %v63
  %v2479 = vxor.u32 %v2478, 2147483648
  %v2480 = vmul.f32 %v2479, 1.442695
  %v2481 = vpow.pop %v2480
  %v2482 = vadd.f32 %v2481, 1.0
  %v2483 = vrcp.pop %v2482
  %v2484 = vmul.f32 1.0, %v2483
  %v2485 = vtanh.pop %v2478
  %v2486 = vmul.f32 %v2484, %v2079
  %2488 = vrot.lane.b32.xlu0 %v2485, 64
  %v2489 = vpop.permute.xlu0 %2488
  %v2491 = vmul.f32 %v2484, %v2489
  %2493 = vrot.lane.b32.xlu0 %v2491, 32
  %v2494 = vpop.permute.xlu0 %2493
  %v2496 = vadd.f32 %v2486, %v2494
  %v2497 = vtanh.pop %v2496
  %2499 = vrot.lane.b32.xlu0 %v2497, 64
  %v2500 = vpop.permute.xlu0 %2499
  %v2502 = vmul.f32 %v2484, %v2500
  %2504 = vrot.lane.b32.xlu0 %v2502, 32
  %v2505 = vpop.permute.xlu0 %2504
  %v2506 = vsel %vm77, %v2505, 0
  %2508 = vmatprep.subr.mxu0 0.0
  %2509 = vmatpush1.msra.mxu0 0.0
  %2510 = vmatprep.subr.mxu0 0.0
  %2511 = vmatpush1.msra.mxu0 0.0
  %2512 = vmatprep.subr.mxu0 0.0
  %2513 = vmatpush1.msra.mxu0 0.0
  %2514 = vmatprep.subr.mxu0 0.0
  %2515 = vmatpush1.msra.mxu0 0.0
  %2516 = vmatprep.subr.mxu0 0.0
  %2517 = vmatpush1.msra.mxu0 0.0
  %2518 = vmatprep.subr.mxu0 0.0
  %2519 = vmatpush1.msra.mxu0 0.0
  %2520 = vmatprep.subr.mxu0 0.0
  %2521 = vmatpush1.msra.mxu0 0.0
  %2522 = vmatprep.subr.mxu0 0.0
  %2523 = vmatpush1.msra.mxu0 0.0
  %2524 = vmatprep.subr.mxu0 0.0
  %2525 = vmatpush1.msra.mxu0 0.0
  %2526 = vmatprep.subr.mxu0 0.0
  %2527 = vmatpush1.msra.mxu0 0.0
  %2528 = vmatprep.subr.mxu0 0.0
  %2529 = vmatpush1.msra.mxu0 0.0
  %2530 = vmatprep.subr.mxu0 0.0
  %2531 = vmatpush1.msra.mxu0 0.0
  %2532 = vmatprep.subr.mxu0 0.0
  %2533 = vmatpush1.msra.mxu0 %v68
  %2534 = vmatprep.subr.mxu0 0.0
  %2535 = vmatpush1.msra.mxu0 %v67
  %2536 = vmatprep.subr.mxu0 0.0
  %2537 = vmatpush1.msra.mxu0 %v66
  %2538 = vmatprep.subr.mxu0 0.0
  %2539 = vmatpush1.msra.mxu0 %v65
  %2540 = vmatprep.subr.mxu0 0.0
  %2541 = vmatpush2.msra.mxu0 0.0
  %2542 = vmatprep.subr.mxu0 0.0
  %2543 = vmatpush2.msra.mxu0 0.0
  %2544 = vmatprep.subr.mxu0 0.0
  %2545 = vmatpush2.msra.mxu0 0.0
  %2546 = vmatprep.subr.mxu0 0.0
  %2547 = vmatpush2.msra.mxu0 0.0
  %2548 = vmatprep.subr.mxu0 0.0
  %2549 = vmatpush2.msra.mxu0 0.0
  %2550 = vmatprep.subr.mxu0 0.0
  %2551 = vmatpush2.msra.mxu0 0.0
  %2552 = vmatprep.subr.mxu0 0.0
  %2553 = vmatpush2.msra.mxu0 0.0
  %2554 = vmatprep.subr.mxu0 0.0
  %2555 = vmatpush2.msra.mxu0 0.0
  %2556 = vmatprep.subr.mxu0 0.0
  %2557 = vmatpush2.msra.mxu0 0.0
  %2558 = vmatprep.subr.mxu0 0.0
  %2559 = vmatpush2.msra.mxu0 0.0
  %2560 = vmatprep.subr.mxu0 0.0
  %2561 = vmatpush2.msra.mxu0 0.0
  %2562 = vmatprep.subr.mxu0 0.0
  %2563 = vmatpush2.msra.mxu0 0.0
  %2564 = vmatprep.subr.mxu0 0.0
  %2565 = vmatpush2.msra.mxu0 0.0
  %2566 = vmatprep.subr.mxu0 0.0
  %2567 = vmatpush2.msra.mxu0 0.0
  %2568 = vmatprep.subr.mxu0 0.0
  %2569 = vmatpush2.msra.mxu0 0.0
  %2570 = vmatprep.subr.mxu0 0.0
  %2571 = vmatpush2.msra.mxu0 0.0
  %2572 = vmatprep.mubr.f32.mxu0 0.0
  %2573 = vmatmul.mubr.f32.gmra.mxu0 %v2506
  %v2574 = vpop.f32.mrf.mxu0
  %v2575 = vadd.f32 %v74, %v2574
  %v2576 = vpop.f32.mrf.mxu0
  %2577 = vdwg.mxu0
  %s2578 = scalar_lea.vmem %s9, 40
  %2579 = vst [vmem:[%s2578] sm:$0xff] %v2575
  %s2580 = scalar_lea.vmem %s0, 48
  %v2581 = vld [vmem:[%s2580] sm:$0xff]
  %2582 = vmatprep.subr.mxu0 0.0
  %2583 = vmatpush1.msra.mxu0 0.0
  %2584 = vmatprep.subr.mxu0 0.0
  %2585 = vmatpush1.msra.mxu0 0.0
  %2586 = vmatprep.subr.mxu0 0.0
  %2587 = vmatpush1.msra.mxu0 0.0
  %2588 = vmatprep.subr.mxu0 0.0
  %2589 = vmatpush1.msra.mxu0 0.0
  %2590 = vmatprep.subr.mxu0 0.0
  %2591 = vmatpush1.msra.mxu0 0.0
  %2592 = vmatprep.subr.mxu0 0.0
  %2593 = vmatpush1.msra.mxu0 0.0
  %2594 = vmatprep.subr.mxu0 0.0
  %2595 = vmatpush1.msra.mxu0 0.0
  %2596 = vmatprep.subr.mxu0 0.0
  %2597 = vmatpush1.msra.mxu0 0.0
  %2598 = vmatprep.subr.mxu0 0.0
  %2599 = vmatpush1.msra.mxu0 0.0
  %2600 = vmatprep.subr.mxu0 0.0
  %2601 = vmatpush1.msra.mxu0 0.0
  %2602 = vmatprep.subr.mxu0 0.0
  %2603 = vmatpush1.msra.mxu0 0.0
  %2604 = vmatprep.subr.mxu0 0.0
  %2605 = vmatpush1.msra.mxu0 0.0
  %2606 = vmatprep.subr.mxu0 0.0
  %2607 = vmatpush1.msra.mxu0 %v42
  %2608 = vmatprep.subr.mxu0 0.0
  %2609 = vmatpush1.msra.mxu0 %v41
  %2610 = vmatprep.subr.mxu0 0.0
  %2611 = vmatpush1.msra.mxu0 %v40
  %2612 = vmatprep.subr.mxu0 0.0
  %2613 = vmatpush1.msra.mxu0 %v39
  %2614 = vmatprep.subr.mxu0 0.0
  %2615 = vmatpush2.msra.mxu0 0.0
  %2616 = vmatprep.subr.mxu0 0.0
  %2617 = vmatpush2.msra.mxu0 0.0
  %2618 = vmatprep.subr.mxu0 0.0
  %2619 = vmatpush2.msra.mxu0 0.0
  %2620 = vmatprep.subr.mxu0 0.0
  %2621 = vmatpush2.msra.mxu0 0.0
  %2622 = vmatprep.subr.mxu0 0.0
  %2623 = vmatpush2.msra.mxu0 0.0
  %2624 = vmatprep.subr.mxu0 0.0
  %2625 = vmatpush2.msra.mxu0 0.0
  %2626 = vmatprep.subr.mxu0 0.0
  %2627 = vmatpush2.msra.mxu0 0.0
  %2628 = vmatprep.subr.mxu0 0.0
  %2629 = vmatpush2.msra.mxu0 0.0
  %2630 = vmatprep.subr.mxu0 0.0
  %2631 = vmatpush2.msra.mxu0 0.0
  %2632 = vmatprep.subr.mxu0 0.0
  %2633 = vmatpush2.msra.mxu0 0.0
  %2634 = vmatprep.subr.mxu0 0.0
  %2635 = vmatpush2.msra.mxu0 0.0
  %2636 = vmatprep.subr.mxu0 0.0
  %2637 = vmatpush2.msra.mxu0 0.0
  %2638 = vmatprep.subr.mxu0 0.0
  %2639 = vmatpush2.msra.mxu0 0.0
  %2640 = vmatprep.subr.mxu0 0.0
  %2641 = vmatpush2.msra.mxu0 0.0
  %2642 = vmatprep.subr.mxu0 0.0
  %2643 = vmatpush2.msra.mxu0 0.0
  %2644 = vmatprep.subr.mxu0 0.0
  %2645 = vmatpush2.msra.mxu0 0.0
  %2646 = vmatprep.mubr.f32.mxu0 0.0
  %2647 = vmatmul.mubr.f32.gmra.mxu0 %v2406
  %v2648 = vpop.f32.mrf.mxu0
  %v2649 = vadd.f32 0.0, %v2648
  %v2650 = vpop.f32.mrf.mxu0
  %2651 = vdwg.mxu0
  %v2653 = vsel %vm77, %v2581, 0
  %2655 = vmatprep.subr.mxu0 0.0
  %2656 = vmatpush1.msra.mxu0 0.0
  %2657 = vmatprep.subr.mxu0 0.0
  %2658 = vmatpush1.msra.mxu0 0.0
  %2659 = vmatprep.subr.mxu0 0.0
  %2660 = vmatpush1.msra.mxu0 0.0
  %2661 = vmatprep.subr.mxu0 0.0
  %2662 = vmatpush1.msra.mxu0 0.0
  %2663 = vmatprep.subr.mxu0 0.0
  %2664 = vmatpush1.msra.mxu0 0.0
  %2665 = vmatprep.subr.mxu0 0.0
  %2666 = vmatpush1.msra.mxu0 0.0
  %2667 = vmatprep.subr.mxu0 0.0
  %2668 = vmatpush1.msra.mxu0 0.0
  %2669 = vmatprep.subr.mxu0 0.0
  %2670 = vmatpush1.msra.mxu0 0.0
  %2671 = vmatprep.subr.mxu0 0.0
  %2672 = vmatpush1.msra.mxu0 0.0
  %2673 = vmatprep.subr.mxu0 0.0
  %2674 = vmatpush1.msra.mxu0 0.0
  %2675 = vmatprep.subr.mxu0 0.0
  %2676 = vmatpush1.msra.mxu0 0.0
  %2677 = vmatprep.subr.mxu0 0.0
  %2678 = vmatpush1.msra.mxu0 0.0
  %2679 = vmatprep.subr.mxu0 0.0
  %2680 = vmatpush1.msra.mxu0 %v38
  %2681 = vmatprep.subr.mxu0 0.0
  %2682 = vmatpush1.msra.mxu0 %v37
  %2683 = vmatprep.subr.mxu0 0.0
  %2684 = vmatpush1.msra.mxu0 %v36
  %2685 = vmatprep.subr.mxu0 0.0
  %2686 = vmatpush1.msra.mxu0 %v35
  %2687 = vmatprep.subr.mxu0 0.0
  %2688 = vmatpush2.msra.mxu0 0.0
  %2689 = vmatprep.subr.mxu0 0.0
  %2690 = vmatpush2.msra.mxu0 0.0
  %2691 = vmatprep.subr.mxu0 0.0
  %2692 = vmatpush2.msra.mxu0 0.0
  %2693 = vmatprep.subr.mxu0 0.0
  %2694 = vmatpush2.msra.mxu0 0.0
  %2695 = vmatprep.subr.mxu0 0.0
  %2696 = vmatpush2.msra.mxu0 0.0
  %2697 = vmatprep.subr.mxu0 0.0
  %2698 = vmatpush2.msra.mxu0 0.0
  %2699 = vmatprep.subr.mxu0 0.0
  %2700 = vmatpush2.msra.mxu0 0.0
  %2701 = vmatprep.subr.mxu0 0.0
  %2702 = vmatpush2.msra.mxu0 0.0
  %2703 = vmatprep.subr.mxu0 0.0
  %2704 = vmatpush2.msra.mxu0 0.0
  %2705 = vmatprep.subr.mxu0 0.0
  %2706 = vmatpush2.msra.mxu0 0.0
  %2707 = vmatprep.subr.mxu0 0.0
  %2708 = vmatpush2.msra.mxu0 0.0
  %2709 = vmatprep.subr.mxu0 0.0
  %2710 = vmatpush2.msra.mxu0 0.0
  %2711 = vmatprep.subr.mxu0 0.0
  %2712 = vmatpush2.msra.mxu0 0.0
  %2713 = vmatprep.subr.mxu0 0.0
  %2714 = vmatpush2.msra.mxu0 0.0
  %2715 = vmatprep.subr.mxu0 0.0
  %2716 = vmatpush2.msra.mxu0 0.0
  %2717 = vmatprep.subr.mxu0 0.0
  %2718 = vmatpush2.msra.mxu0 0.0
  %2719 = vmatprep.mubr.f32.mxu0 0.0
  %2720 = vmatmul.mubr.f32.gmra.mxu0 %v2653
  %v2721 = vpop.f32.mrf.mxu0
  %v2722 = vadd.f32 %v2649, %v2721
  %v2723 = vpop.f32.mrf.mxu0
  %2724 = vdwg.mxu0
  %v2725 = vadd.f32 %v2722, %v48
  %v2726 = vxor.u32 %v2725, 2147483648
  %v2727 = vmul.f32 %v2726, 1.442695
  %v2728 = vpow.pop %v2727
  %v2729 = vadd.f32 %v2728, 1.0
  %v2730 = vrcp.pop %v2729
  %v2731 = vmul.f32 1.0, %v2730
  %v2732 = vtanh.pop %v2725
  %v2733 = vmul.f32 %v2731, %v2326
  %2735 = vrot.lane.b32.xlu0 %v2732, 64
  %v2736 = vpop.permute.xlu0 %2735
  %v2738 = vmul.f32 %v2731, %v2736
  %2740 = vrot.lane.b32.xlu0 %v2738, 32
  %v2741 = vpop.permute.xlu0 %2740
  %v2743 = vadd.f32 %v2733, %v2741
  %v2744 = vtanh.pop %v2743
  %2746 = vrot.lane.b32.xlu0 %v2744, 64
  %v2747 = vpop.permute.xlu0 %2746
  %v2749 = vmul.f32 %v2731, %v2747
  %2750 = vmatprep.subr.mxu0 0.0
  %2751 = vmatpush1.msra.mxu0 0.0
  %2752 = vmatprep.subr.mxu0 0.0
  %2753 = vmatpush1.msra.mxu0 0.0
  %2754 = vmatprep.subr.mxu0 0.0
  %2755 = vmatpush1.msra.mxu0 0.0
  %2756 = vmatprep.subr.mxu0 0.0
  %2757 = vmatpush1.msra.mxu0 0.0
  %2758 = vmatprep.subr.mxu0 0.0
  %2759 = vmatpush1.msra.mxu0 0.0
  %2760 = vmatprep.subr.mxu0 0.0
  %2761 = vmatpush1.msra.mxu0 0.0
  %2762 = vmatprep.subr.mxu0 0.0
  %2763 = vmatpush1.msra.mxu0 0.0
  %2764 = vmatprep.subr.mxu0 0.0
  %2765 = vmatpush1.msra.mxu0 0.0
  %2766 = vmatprep.subr.mxu0 0.0
  %2767 = vmatpush1.msra.mxu0 0.0
  %2768 = vmatprep.subr.mxu0 0.0
  %2769 = vmatpush1.msra.mxu0 0.0
  %2770 = vmatprep.subr.mxu0 0.0
  %2771 = vmatpush1.msra.mxu0 0.0
  %2772 = vmatprep.subr.mxu0 0.0
  %2773 = vmatpush1.msra.mxu0 0.0
  %2774 = vmatprep.subr.mxu0 0.0
  %2775 = vmatpush1.msra.mxu0 %v57
  %2776 = vmatprep.subr.mxu0 0.0
  %2777 = vmatpush1.msra.mxu0 %v56
  %2778 = vmatprep.subr.mxu0 0.0
  %2779 = vmatpush1.msra.mxu0 %v55
  %2780 = vmatprep.subr.mxu0 0.0
  %2781 = vmatpush1.msra.mxu0 %v54
  %2782 = vmatprep.subr.mxu0 0.0
  %2783 = vmatpush2.msra.mxu0 0.0
  %2784 = vmatprep.subr.mxu0 0.0
  %2785 = vmatpush2.msra.mxu0 0.0
  %2786 = vmatprep.subr.mxu0 0.0
  %2787 = vmatpush2.msra.mxu0 0.0
  %2788 = vmatprep.subr.mxu0 0.0
  %2789 = vmatpush2.msra.mxu0 0.0
  %2790 = vmatprep.subr.mxu0 0.0
  %2791 = vmatpush2.msra.mxu0 0.0
  %2792 = vmatprep.subr.mxu0 0.0
  %2793 = vmatpush2.msra.mxu0 0.0
  %2794 = vmatprep.subr.mxu0 0.0
  %2795 = vmatpush2.msra.mxu0 0.0
  %2796 = vmatprep.subr.mxu0 0.0
  %2797 = vmatpush2.msra.mxu0 0.0
  %2798 = vmatprep.subr.mxu0 0.0
  %2799 = vmatpush2.msra.mxu0 0.0
  %2800 = vmatprep.subr.mxu0 0.0
  %2801 = vmatpush2.msra.mxu0 0.0
  %2802 = vmatprep.subr.mxu0 0.0
  %2803 = vmatpush2.msra.mxu0 0.0
  %2804 = vmatprep.subr.mxu0 0.0
  %2805 = vmatpush2.msra.mxu0 0.0
  %2806 = vmatprep.subr.mxu0 0.0
  %2807 = vmatpush2.msra.mxu0 0.0
  %2808 = vmatprep.subr.mxu0 0.0
  %2809 = vmatpush2.msra.mxu0 0.0
  %2810 = vmatprep.subr.mxu0 0.0
  %2811 = vmatpush2.msra.mxu0 0.0
  %2812 = vmatprep.subr.mxu0 0.0
  %2813 = vmatpush2.msra.mxu0 0.0
  %2814 = vmatprep.mubr.f32.mxu0 0.0
  %2815 = vmatmul.mubr.f32.gmra.mxu0 %v2506
  %v2816 = vpop.f32.mrf.mxu0
  %v2817 = vadd.f32 0.0, %v2816
  %v2818 = vpop.f32.mrf.mxu0
  %2819 = vdwg.mxu0
  %2821 = vrot.lane.b32.xlu0 %v2749, 32
  %v2822 = vpop.permute.xlu0 %2821
  %v2823 = vsel %vm77, %v2822, 0
  %2825 = vmatprep.subr.mxu0 0.0
  %2826 = vmatpush1.msra.mxu0 0.0
  %2827 = vmatprep.subr.mxu0 0.0
  %2828 = vmatpush1.msra.mxu0 0.0
  %2829 = vmatprep.subr.mxu0 0.0
  %2830 = vmatpush1.msra.mxu0 0.0
  %2831 = vmatprep.subr.mxu0 0.0
  %2832 = vmatpush1.msra.mxu0 0.0
  %2833 = vmatprep.subr.mxu0 0.0
  %2834 = vmatpush1.msra.mxu0 0.0
  %2835 = vmatprep.subr.mxu0 0.0
  %2836 = vmatpush1.msra.mxu0 0.0
  %2837 = vmatprep.subr.mxu0 0.0
  %2838 = vmatpush1.msra.mxu0 0.0
  %2839 = vmatprep.subr.mxu0 0.0
  %2840 = vmatpush1.msra.mxu0 0.0
  %2841 = vmatprep.subr.mxu0 0.0
  %2842 = vmatpush1.msra.mxu0 0.0
  %2843 = vmatprep.subr.mxu0 0.0
  %2844 = vmatpush1.msra.mxu0 0.0
  %2845 = vmatprep.subr.mxu0 0.0
  %2846 = vmatpush1.msra.mxu0 0.0
  %2847 = vmatprep.subr.mxu0 0.0
  %2848 = vmatpush1.msra.mxu0 0.0
  %2849 = vmatprep.subr.mxu0 0.0
  %2850 = vmatpush1.msra.mxu0 %v53
  %2851 = vmatprep.subr.mxu0 0.0
  %2852 = vmatpush1.msra.mxu0 %v52
  %2853 = vmatprep.subr.mxu0 0.0
  %2854 = vmatpush1.msra.mxu0 %v51
  %2855 = vmatprep.subr.mxu0 0.0
  %2856 = vmatpush1.msra.mxu0 %v50
  %2857 = vmatprep.subr.mxu0 0.0
  %2858 = vmatpush2.msra.mxu0 0.0
  %2859 = vmatprep.subr.mxu0 0.0
  %2860 = vmatpush2.msra.mxu0 0.0
  %2861 = vmatprep.subr.mxu0 0.0
  %2862 = vmatpush2.msra.mxu0 0.0
  %2863 = vmatprep.subr.mxu0 0.0
  %2864 = vmatpush2.msra.mxu0 0.0
  %2865 = vmatprep.subr.mxu0 0.0
  %2866 = vmatpush2.msra.mxu0 0.0
  %2867 = vmatprep.subr.mxu0 0.0
  %2868 = vmatpush2.msra.mxu0 0.0
  %2869 = vmatprep.subr.mxu0 0.0
  %2870 = vmatpush2.msra.mxu0 0.0
  %2871 = vmatprep.subr.mxu0 0.0
  %2872 = vmatpush2.msra.mxu0 0.0
  %2873 = vmatprep.subr.mxu0 0.0
  %2874 = vmatpush2.msra.mxu0 0.0
  %2875 = vmatprep.subr.mxu0 0.0
  %2876 = vmatpush2.msra.mxu0 0.0
  %2877 = vmatprep.subr.mxu0 0.0
  %2878 = vmatpush2.msra.mxu0 0.0
  %2879 = vmatprep.subr.mxu0 0.0
  %2880 = vmatpush2.msra.mxu0 0.0
  %2881 = vmatprep.subr.mxu0 0.0
  %2882 = vmatpush2.msra.mxu0 0.0
  %2883 = vmatprep.subr.mxu0 0.0
  %2884 = vmatpush2.msra.mxu0 0.0
  %2885 = vmatprep.subr.mxu0 0.0
  %2886 = vmatpush2.msra.mxu0 0.0
  %2887 = vmatprep.subr.mxu0 0.0
  %2888 = vmatpush2.msra.mxu0 0.0
  %2889 = vmatprep.mubr.f32.mxu0 0.0
  %2890 = vmatmul.mubr.f32.gmra.mxu0 %v2823
  %v2891 = vpop.f32.mrf.mxu0
  %v2892 = vadd.f32 %v2817, %v2891
  %v2893 = vpop.f32.mrf.mxu0
  %2894 = vdwg.mxu0
  %v2895 = vadd.f32 %v2892, %v63
  %v2896 = vxor.u32 %v2895, 2147483648
  %v2897 = vmul.f32 %v2896, 1.442695
  %v2898 = vpow.pop %v2897
  %v2899 = vadd.f32 %v2898, 1.0
  %v2900 = vrcp.pop %v2899
  %v2901 = vmul.f32 1.0, %v2900
  %v2902 = vtanh.pop %v2895
  %v2903 = vmul.f32 %v2901, %v2496
  %2905 = vrot.lane.b32.xlu0 %v2902, 64
  %v2906 = vpop.permute.xlu0 %2905
  %v2908 = vmul.f32 %v2901, %v2906
  %2910 = vrot.lane.b32.xlu0 %v2908, 32
  %v2911 = vpop.permute.xlu0 %2910
  %v2913 = vadd.f32 %v2903, %v2911
  %v2914 = vtanh.pop %v2913
  %2916 = vrot.lane.b32.xlu0 %v2914, 64
  %v2917 = vpop.permute.xlu0 %2916
  %v2919 = vmul.f32 %v2901, %v2917
  %2921 = vrot.lane.b32.xlu0 %v2919, 32
  %v2922 = vpop.permute.xlu0 %2921
  %v2923 = vsel %vm77, %v2922, 0
  %2925 = vmatprep.subr.mxu0 0.0
  %2926 = vmatpush1.msra.mxu0 0.0
  %2927 = vmatprep.subr.mxu0 0.0
  %2928 = vmatpush1.msra.mxu0 0.0
  %2929 = vmatprep.subr.mxu0 0.0
  %2930 = vmatpush1.msra.mxu0 0.0
  %2931 = vmatprep.subr.mxu0 0.0
  %2932 = vmatpush1.msra.mxu0 0.0
  %2933 = vmatprep.subr.mxu0 0.0
  %2934 = vmatpush1.msra.mxu0 0.0
  %2935 = vmatprep.subr.mxu0 0.0
  %2936 = vmatpush1.msra.mxu0 0.0
  %2937 = vmatprep.subr.mxu0 0.0
  %2938 = vmatpush1.msra.mxu0 0.0
  %2939 = vmatprep.subr.mxu0 0.0
  %2940 = vmatpush1.msra.mxu0 0.0
  %2941 = vmatprep.subr.mxu0 0.0
  %2942 = vmatpush1.msra.mxu0 0.0
  %2943 = vmatprep.subr.mxu0 0.0
  %2944 = vmatpush1.msra.mxu0 0.0
  %2945 = vmatprep.subr.mxu0 0.0
  %2946 = vmatpush1.msra.mxu0 0.0
  %2947 = vmatprep.subr.mxu0 0.0
  %2948 = vmatpush1.msra.mxu0 0.0
  %2949 = vmatprep.subr.mxu0 0.0
  %2950 = vmatpush1.msra.mxu0 %v68
  %2951 = vmatprep.subr.mxu0 0.0
  %2952 = vmatpush1.msra.mxu0 %v67
  %2953 = vmatprep.subr.mxu0 0.0
  %2954 = vmatpush1.msra.mxu0 %v66
  %2955 = vmatprep.subr.mxu0 0.0
  %2956 = vmatpush1.msra.mxu0 %v65
  %2957 = vmatprep.subr.mxu0 0.0
  %2958 = vmatpush2.msra.mxu0 0.0
  %2959 = vmatprep.subr.mxu0 0.0
  %2960 = vmatpush2.msra.mxu0 0.0
  %2961 = vmatprep.subr.mxu0 0.0
  %2962 = vmatpush2.msra.mxu0 0.0
  %2963 = vmatprep.subr.mxu0 0.0
  %2964 = vmatpush2.msra.mxu0 0.0
  %2965 = vmatprep.subr.mxu0 0.0
  %2966 = vmatpush2.msra.mxu0 0.0
  %2967 = vmatprep.subr.mxu0 0.0
  %2968 = vmatpush2.msra.mxu0 0.0
  %2969 = vmatprep.subr.mxu0 0.0
  %2970 = vmatpush2.msra.mxu0 0.0
  %2971 = vmatprep.subr.mxu0 0.0
  %2972 = vmatpush2.msra.mxu0 0.0
  %2973 = vmatprep.subr.mxu0 0.0
  %2974 = vmatpush2.msra.mxu0 0.0
  %2975 = vmatprep.subr.mxu0 0.0
  %2976 = vmatpush2.msra.mxu0 0.0
  %2977 = vmatprep.subr.mxu0 0.0
  %2978 = vmatpush2.msra.mxu0 0.0
  %2979 = vmatprep.subr.mxu0 0.0
  %2980 = vmatpush2.msra.mxu0 0.0
  %2981 = vmatprep.subr.mxu0 0.0
  %2982 = vmatpush2.msra.mxu0 0.0
  %2983 = vmatprep.subr.mxu0 0.0
  %2984 = vmatpush2.msra.mxu0 0.0
  %2985 = vmatprep.subr.mxu0 0.0
  %2986 = vmatpush2.msra.mxu0 0.0
  %2987 = vmatprep.subr.mxu0 0.0
  %2988 = vmatpush2.msra.mxu0 0.0
  %2989 = vmatprep.mubr.f32.mxu0 0.0
  %2990 = vmatmul.mubr.f32.gmra.mxu0 %v2923
  %v2991 = vpop.f32.mrf.mxu0
  %v2992 = vadd.f32 %v74, %v2991
  %v2993 = vpop.f32.mrf.mxu0
  %2994 = vdwg.mxu0
  %s2995 = scalar_lea.vmem %s9, 48
  %2996 = vst [vmem:[%s2995] sm:$0xff] %v2992
  %s2997 = scalar_lea.vmem %s0, 56
  %v2998 = vld [vmem:[%s2997] sm:$0xff]
  %2999 = vmatprep.subr.mxu0 0.0
  %3000 = vmatpush1.msra.mxu0 0.0
  %3001 = vmatprep.subr.mxu0 0.0
  %3002 = vmatpush1.msra.mxu0 0.0
  %3003 = vmatprep.subr.mxu0 0.0
  %3004 = vmatpush1.msra.mxu0 0.0
  %3005 = vmatprep.subr.mxu0 0.0
  %3006 = vmatpush1.msra.mxu0 0.0
  %3007 = vmatprep.subr.mxu0 0.0
  %3008 = vmatpush1.msra.mxu0 0.0
  %3009 = vmatprep.subr.mxu0 0.0
  %3010 = vmatpush1.msra.mxu0 0.0
  %3011 = vmatprep.subr.mxu0 0.0
  %3012 = vmatpush1.msra.mxu0 0.0
  %3013 = vmatprep.subr.mxu0 0.0
  %3014 = vmatpush1.msra.mxu0 0.0
  %3015 = vmatprep.subr.mxu0 0.0
  %3016 = vmatpush1.msra.mxu0 0.0
  %3017 = vmatprep.subr.mxu0 0.0
  %3018 = vmatpush1.msra.mxu0 0.0
  %3019 = vmatprep.subr.mxu0 0.0
  %3020 = vmatpush1.msra.mxu0 0.0
  %3021 = vmatprep.subr.mxu0 0.0
  %3022 = vmatpush1.msra.mxu0 0.0
  %3023 = vmatprep.subr.mxu0 0.0
  %3024 = vmatpush1.msra.mxu0 %v42
  %3025 = vmatprep.subr.mxu0 0.0
  %3026 = vmatpush1.msra.mxu0 %v41
  %3027 = vmatprep.subr.mxu0 0.0
  %3028 = vmatpush1.msra.mxu0 %v40
  %3029 = vmatprep.subr.mxu0 0.0
  %3030 = vmatpush1.msra.mxu0 %v39
  %3031 = vmatprep.subr.mxu0 0.0
  %3032 = vmatpush2.msra.mxu0 0.0
  %3033 = vmatprep.subr.mxu0 0.0
  %3034 = vmatpush2.msra.mxu0 0.0
  %3035 = vmatprep.subr.mxu0 0.0
  %3036 = vmatpush2.msra.mxu0 0.0
  %3037 = vmatprep.subr.mxu0 0.0
  %3038 = vmatpush2.msra.mxu0 0.0
  %3039 = vmatprep.subr.mxu0 0.0
  %3040 = vmatpush2.msra.mxu0 0.0
  %3041 = vmatprep.subr.mxu0 0.0
  %3042 = vmatpush2.msra.mxu0 0.0
  %3043 = vmatprep.subr.mxu0 0.0
  %3044 = vmatpush2.msra.mxu0 0.0
  %3045 = vmatprep.subr.mxu0 0.0
  %3046 = vmatpush2.msra.mxu0 0.0
  %3047 = vmatprep.subr.mxu0 0.0
  %3048 = vmatpush2.msra.mxu0 0.0
  %3049 = vmatprep.subr.mxu0 0.0
  %3050 = vmatpush2.msra.mxu0 0.0
  %3051 = vmatprep.subr.mxu0 0.0
  %3052 = vmatpush2.msra.mxu0 0.0
  %3053 = vmatprep.subr.mxu0 0.0
  %3054 = vmatpush2.msra.mxu0 0.0
  %3055 = vmatprep.subr.mxu0 0.0
  %3056 = vmatpush2.msra.mxu0 0.0
  %3057 = vmatprep.subr.mxu0 0.0
  %3058 = vmatpush2.msra.mxu0 0.0
  %3059 = vmatprep.subr.mxu0 0.0
  %3060 = vmatpush2.msra.mxu0 0.0
  %3061 = vmatprep.subr.mxu0 0.0
  %3062 = vmatpush2.msra.mxu0 0.0
  %3063 = vmatprep.mubr.f32.mxu0 0.0
  %3064 = vmatmul.mubr.f32.gmra.mxu0 %v2823
  %v3065 = vpop.f32.mrf.mxu0
  %v3066 = vadd.f32 0.0, %v3065
  %v3067 = vpop.f32.mrf.mxu0
  %3068 = vdwg.mxu0
  %v3070 = vsel %vm77, %v2998, 0
  %3072 = vmatprep.subr.mxu0 0.0
  %3073 = vmatpush1.msra.mxu0 0.0
  %3074 = vmatprep.subr.mxu0 0.0
  %3075 = vmatpush1.msra.mxu0 0.0
  %3076 = vmatprep.subr.mxu0 0.0
  %3077 = vmatpush1.msra.mxu0 0.0
  %3078 = vmatprep.subr.mxu0 0.0
  %3079 = vmatpush1.msra.mxu0 0.0
  %3080 = vmatprep.subr.mxu0 0.0
  %3081 = vmatpush1.msra.mxu0 0.0
  %3082 = vmatprep.subr.mxu0 0.0
  %3083 = vmatpush1.msra.mxu0 0.0
  %3084 = vmatprep.subr.mxu0 0.0
  %3085 = vmatpush1.msra.mxu0 0.0
  %3086 = vmatprep.subr.mxu0 0.0
  %3087 = vmatpush1.msra.mxu0 0.0
  %3088 = vmatprep.subr.mxu0 0.0
  %3089 = vmatpush1.msra.mxu0 0.0
  %3090 = vmatprep.subr.mxu0 0.0
  %3091 = vmatpush1.msra.mxu0 0.0
  %3092 = vmatprep.subr.mxu0 0.0
  %3093 = vmatpush1.msra.mxu0 0.0
  %3094 = vmatprep.subr.mxu0 0.0
  %3095 = vmatpush1.msra.mxu0 0.0
  %3096 = vmatprep.subr.mxu0 0.0
  %3097 = vmatpush1.msra.mxu0 %v38
  %3098 = vmatprep.subr.mxu0 0.0
  %3099 = vmatpush1.msra.mxu0 %v37
  %3100 = vmatprep.subr.mxu0 0.0
  %3101 = vmatpush1.msra.mxu0 %v36
  %3102 = vmatprep.subr.mxu0 0.0
  %3103 = vmatpush1.msra.mxu0 %v35
  %3104 = vmatprep.subr.mxu0 0.0
  %3105 = vmatpush2.msra.mxu0 0.0
  %3106 = vmatprep.subr.mxu0 0.0
  %3107 = vmatpush2.msra.mxu0 0.0
  %3108 = vmatprep.subr.mxu0 0.0
  %3109 = vmatpush2.msra.mxu0 0.0
  %3110 = vmatprep.subr.mxu0 0.0
  %3111 = vmatpush2.msra.mxu0 0.0
  %3112 = vmatprep.subr.mxu0 0.0
  %3113 = vmatpush2.msra.mxu0 0.0
  %3114 = vmatprep.subr.mxu0 0.0
  %3115 = vmatpush2.msra.mxu0 0.0
  %3116 = vmatprep.subr.mxu0 0.0
  %3117 = vmatpush2.msra.mxu0 0.0
  %3118 = vmatprep.subr.mxu0 0.0
  %3119 = vmatpush2.msra.mxu0 0.0
  %3120 = vmatprep.subr.mxu0 0.0
  %3121 = vmatpush2.msra.mxu0 0.0
  %3122 = vmatprep.subr.mxu0 0.0
  %3123 = vmatpush2.msra.mxu0 0.0
  %3124 = vmatprep.subr.mxu0 0.0
  %3125 = vmatpush2.msra.mxu0 0.0
  %3126 = vmatprep.subr.mxu0 0.0
  %3127 = vmatpush2.msra.mxu0 0.0
  %3128 = vmatprep.subr.mxu0 0.0
  %3129 = vmatpush2.msra.mxu0 0.0
  %3130 = vmatprep.subr.mxu0 0.0
  %3131 = vmatpush2.msra.mxu0 0.0
  %3132 = vmatprep.subr.mxu0 0.0
  %3133 = vmatpush2.msra.mxu0 0.0
  %3134 = vmatprep.subr.mxu0 0.0
  %3135 = vmatpush2.msra.mxu0 0.0
  %3136 = vmatprep.mubr.f32.mxu0 0.0
  %3137 = vmatmul.mubr.f32.gmra.mxu0 %v3070
  %v3138 = vpop.f32.mrf.mxu0
  %v3139 = vadd.f32 %v3066, %v3138
  %v3140 = vpop.f32.mrf.mxu0
  %3141 = vdwg.mxu0
  %v3142 = vadd.f32 %v3139, %v48
  %v3143 = vxor.u32 %v3142, 2147483648
  %v3144 = vmul.f32 %v3143, 1.442695
  %v3145 = vpow.pop %v3144
  %v3146 = vadd.f32 %v3145, 1.0
  %v3147 = vrcp.pop %v3146
  %v3148 = vmul.f32 1.0, %v3147
  %v3149 = vtanh.pop %v3142
  %v3150 = vmul.f32 %v3148, %v2743
  %3152 = vrot.lane.b32.xlu0 %v3149, 64
  %v3153 = vpop.permute.xlu0 %3152
  %v3155 = vmul.f32 %v3148, %v3153
  %3157 = vrot.lane.b32.xlu0 %v3155, 32
  %v3158 = vpop.permute.xlu0 %3157
  %v3160 = vadd.f32 %v3150, %v3158
  %v3161 = vtanh.pop %v3160
  %3163 = vrot.lane.b32.xlu0 %v3161, 64
  %v3164 = vpop.permute.xlu0 %3163
  %v3166 = vmul.f32 %v3148, %v3164
  %3167 = vmatprep.subr.mxu0 0.0
  %3168 = vmatpush1.msra.mxu0 0.0
  %3169 = vmatprep.subr.mxu0 0.0
  %3170 = vmatpush1.msra.mxu0 0.0
  %3171 = vmatprep.subr.mxu0 0.0
  %3172 = vmatpush1.msra.mxu0 0.0
  %3173 = vmatprep.subr.mxu0 0.0
  %3174 = vmatpush1.msra.mxu0 0.0
  %3175 = vmatprep.subr.mxu0 0.0
  %3176 = vmatpush1.msra.mxu0 0.0
  %3177 = vmatprep.subr.mxu0 0.0
  %3178 = vmatpush1.msra.mxu0 0.0
  %3179 = vmatprep.subr.mxu0 0.0
  %3180 = vmatpush1.msra.mxu0 0.0
  %3181 = vmatprep.subr.mxu0 0.0
  %3182 = vmatpush1.msra.mxu0 0.0
  %3183 = vmatprep.subr.mxu0 0.0
  %3184 = vmatpush1.msra.mxu0 0.0
  %3185 = vmatprep.subr.mxu0 0.0
  %3186 = vmatpush1.msra.mxu0 0.0
  %3187 = vmatprep.subr.mxu0 0.0
  %3188 = vmatpush1.msra.mxu0 0.0
  %3189 = vmatprep.subr.mxu0 0.0
  %3190 = vmatpush1.msra.mxu0 0.0
  %3191 = vmatprep.subr.mxu0 0.0
  %3192 = vmatpush1.msra.mxu0 %v57
  %3193 = vmatprep.subr.mxu0 0.0
  %3194 = vmatpush1.msra.mxu0 %v56
  %3195 = vmatprep.subr.mxu0 0.0
  %3196 = vmatpush1.msra.mxu0 %v55
  %3197 = vmatprep.subr.mxu0 0.0
  %3198 = vmatpush1.msra.mxu0 %v54
  %3199 = vmatprep.subr.mxu0 0.0
  %3200 = vmatpush2.msra.mxu0 0.0
  %3201 = vmatprep.subr.mxu0 0.0
  %3202 = vmatpush2.msra.mxu0 0.0
  %3203 = vmatprep.subr.mxu0 0.0
  %3204 = vmatpush2.msra.mxu0 0.0
  %3205 = vmatprep.subr.mxu0 0.0
  %3206 = vmatpush2.msra.mxu0 0.0
  %3207 = vmatprep.subr.mxu0 0.0
  %3208 = vmatpush2.msra.mxu0 0.0
  %3209 = vmatprep.subr.mxu0 0.0
  %3210 = vmatpush2.msra.mxu0 0.0
  %3211 = vmatprep.subr.mxu0 0.0
  %3212 = vmatpush2.msra.mxu0 0.0
  %3213 = vmatprep.subr.mxu0 0.0
  %3214 = vmatpush2.msra.mxu0 0.0
  %3215 = vmatprep.subr.mxu0 0.0
  %3216 = vmatpush2.msra.mxu0 0.0
  %3217 = vmatprep.subr.mxu0 0.0
  %3218 = vmatpush2.msra.mxu0 0.0
  %3219 = vmatprep.subr.mxu0 0.0
  %3220 = vmatpush2.msra.mxu0 0.0
  %3221 = vmatprep.subr.mxu0 0.0
  %3222 = vmatpush2.msra.mxu0 0.0
  %3223 = vmatprep.subr.mxu0 0.0
  %3224 = vmatpush2.msra.mxu0 0.0
  %3225 = vmatprep.subr.mxu0 0.0
  %3226 = vmatpush2.msra.mxu0 0.0
  %3227 = vmatprep.subr.mxu0 0.0
  %3228 = vmatpush2.msra.mxu0 0.0
  %3229 = vmatprep.subr.mxu0 0.0
  %3230 = vmatpush2.msra.mxu0 0.0
  %3231 = vmatprep.mubr.f32.mxu0 0.0
  %3232 = vmatmul.mubr.f32.gmra.mxu0 %v2923
  %v3233 = vpop.f32.mrf.mxu0
  %v3234 = vadd.f32 0.0, %v3233
  %v3235 = vpop.f32.mrf.mxu0
  %3236 = vdwg.mxu0
  %3238 = vrot.lane.b32.xlu0 %v3166, 32
  %v3239 = vpop.permute.xlu0 %3238
  %v3240 = vsel %vm77, %v3239, 0
  %3242 = vmatprep.subr.mxu0 0.0
  %3243 = vmatpush1.msra.mxu0 0.0
  %3244 = vmatprep.subr.mxu0 0.0
  %3245 = vmatpush1.msra.mxu0 0.0
  %3246 = vmatprep.subr.mxu0 0.0
  %3247 = vmatpush1.msra.mxu0 0.0
  %3248 = vmatprep.subr.mxu0 0.0
  %3249 = vmatpush1.msra.mxu0 0.0
  %3250 = vmatprep.subr.mxu0 0.0
  %3251 = vmatpush1.msra.mxu0 0.0
  %3252 = vmatprep.subr.mxu0 0.0
  %3253 = vmatpush1.msra.mxu0 0.0
  %3254 = vmatprep.subr.mxu0 0.0
  %3255 = vmatpush1.msra.mxu0 0.0
  %3256 = vmatprep.subr.mxu0 0.0
  %3257 = vmatpush1.msra.mxu0 0.0
  %3258 = vmatprep.subr.mxu0 0.0
  %3259 = vmatpush1.msra.mxu0 0.0
  %3260 = vmatprep.subr.mxu0 0.0
  %3261 = vmatpush1.msra.mxu0 0.0
  %3262 = vmatprep.subr.mxu0 0.0
  %3263 = vmatpush1.msra.mxu0 0.0
  %3264 = vmatprep.subr.mxu0 0.0
  %3265 = vmatpush1.msra.mxu0 0.0
  %3266 = vmatprep.subr.mxu0 0.0
  %3267 = vmatpush1.msra.mxu0 %v53
  %3268 = vmatprep.subr.mxu0 0.0
  %3269 = vmatpush1.msra.mxu0 %v52
  %3270 = vmatprep.subr.mxu0 0.0
  %3271 = vmatpush1.msra.mxu0 %v51
  %3272 = vmatprep.subr.mxu0 0.0
  %3273 = vmatpush1.msra.mxu0 %v50
  %3274 = vmatprep.subr.mxu0 0.0
  %3275 = vmatpush2.msra.mxu0 0.0
  %3276 = vmatprep.subr.mxu0 0.0
  %3277 = vmatpush2.msra.mxu0 0.0
  %3278 = vmatprep.subr.mxu0 0.0
  %3279 = vmatpush2.msra.mxu0 0.0
  %3280 = vmatprep.subr.mxu0 0.0
  %3281 = vmatpush2.msra.mxu0 0.0
  %3282 = vmatprep.subr.mxu0 0.0
  %3283 = vmatpush2.msra.mxu0 0.0
  %3284 = vmatprep.subr.mxu0 0.0
  %3285 = vmatpush2.msra.mxu0 0.0
  %3286 = vmatprep.subr.mxu0 0.0
  %3287 = vmatpush2.msra.mxu0 0.0
  %3288 = vmatprep.subr.mxu0 0.0
  %3289 = vmatpush2.msra.mxu0 0.0
  %3290 = vmatprep.subr.mxu0 0.0
  %3291 = vmatpush2.msra.mxu0 0.0
  %3292 = vmatprep.subr.mxu0 0.0
  %3293 = vmatpush2.msra.mxu0 0.0
  %3294 = vmatprep.subr.mxu0 0.0
  %3295 = vmatpush2.msra.mxu0 0.0
  %3296 = vmatprep.subr.mxu0 0.0
  %3297 = vmatpush2.msra.mxu0 0.0
  %3298 = vmatprep.subr.mxu0 0.0
  %3299 = vmatpush2.msra.mxu0 0.0
  %3300 = vmatprep.subr.mxu0 0.0
  %3301 = vmatpush2.msra.mxu0 0.0
  %3302 = vmatprep.subr.mxu0 0.0
  %3303 = vmatpush2.msra.mxu0 0.0
  %3304 = vmatprep.subr.mxu0 0.0
  %3305 = vmatpush2.msra.mxu0 0.0
  %3306 = vmatprep.mubr.f32.mxu0 0.0
  %3307 = vmatmul.mubr.f32.gmra.mxu0 %v3240
  %v3308 = vpop.f32.mrf.mxu0
  %v3309 = vadd.f32 %v3234, %v3308
  %v3310 = vpop.f32.mrf.mxu0
  %3311 = vdwg.mxu0
  %v3312 = vadd.f32 %v3309, %v63
  %v3313 = vxor.u32 %v3312, 2147483648
  %v3314 = vmul.f32 %v3313, 1.442695
  %v3315 = vpow.pop %v3314
  %v3316 = vadd.f32 %v3315, 1.0
  %v3317 = vrcp.pop %v3316
  %v3318 = vmul.f32 1.0, %v3317
  %v3319 = vtanh.pop %v3312
  %v3320 = vmul.f32 %v3318, %v2913
  %3322 = vrot.lane.b32.xlu0 %v3319, 64
  %v3323 = vpop.permute.xlu0 %3322
  %v3325 = vmul.f32 %v3318, %v3323
  %3327 = vrot.lane.b32.xlu0 %v3325, 32
  %v3328 = vpop.permute.xlu0 %3327
  %v3330 = vadd.f32 %v3320, %v3328
  %v3331 = vtanh.pop %v3330
  %3333 = vrot.lane.b32.xlu0 %v3331, 64
  %v3334 = vpop.permute.xlu0 %3333
  %v3336 = vmul.f32 %v3318, %v3334
  %3338 = vrot.lane.b32.xlu0 %v3336, 32
  %v3339 = vpop.permute.xlu0 %3338
  %v3340 = vsel %vm77, %v3339, 0
  %3342 = vmatprep.subr.mxu0 0.0
  %3343 = vmatpush1.msra.mxu0 0.0
  %3344 = vmatprep.subr.mxu0 0.0
  %3345 = vmatpush1.msra.mxu0 0.0
  %3346 = vmatprep.subr.mxu0 0.0
  %3347 = vmatpush1.msra.mxu0 0.0
  %3348 = vmatprep.subr.mxu0 0.0
  %3349 = vmatpush1.msra.mxu0 0.0
  %3350 = vmatprep.subr.mxu0 0.0
  %3351 = vmatpush1.msra.mxu0 0.0
  %3352 = vmatprep.subr.mxu0 0.0
  %3353 = vmatpush1.msra.mxu0 0.0
  %3354 = vmatprep.subr.mxu0 0.0
  %3355 = vmatpush1.msra.mxu0 0.0
  %3356 = vmatprep.subr.mxu0 0.0
  %3357 = vmatpush1.msra.mxu0 0.0
  %3358 = vmatprep.subr.mxu0 0.0
  %3359 = vmatpush1.msra.mxu0 0.0
  %3360 = vmatprep.subr.mxu0 0.0
  %3361 = vmatpush1.msra.mxu0 0.0
  %3362 = vmatprep.subr.mxu0 0.0
  %3363 = vmatpush1.msra.mxu0 0.0
  %3364 = vmatprep.subr.mxu0 0.0
  %3365 = vmatpush1.msra.mxu0 0.0
  %3366 = vmatprep.subr.mxu0 0.0
  %3367 = vmatpush1.msra.mxu0 %v68
  %3368 = vmatprep.subr.mxu0 0.0
  %3369 = vmatpush1.msra.mxu0 %v67
  %3370 = vmatprep.subr.mxu0 0.0
  %3371 = vmatpush1.msra.mxu0 %v66
  %3372 = vmatprep.subr.mxu0 0.0
  %3373 = vmatpush1.msra.mxu0 %v65
  %3374 = vmatprep.subr.mxu0 0.0
  %3375 = vmatpush2.msra.mxu0 0.0
  %3376 = vmatprep.subr.mxu0 0.0
  %3377 = vmatpush2.msra.mxu0 0.0
  %3378 = vmatprep.subr.mxu0 0.0
  %3379 = vmatpush2.msra.mxu0 0.0
  %3380 = vmatprep.subr.mxu0 0.0
  %3381 = vmatpush2.msra.mxu0 0.0
  %3382 = vmatprep.subr.mxu0 0.0
  %3383 = vmatpush2.msra.mxu0 0.0
  %3384 = vmatprep.subr.mxu0 0.0
  %3385 = vmatpush2.msra.mxu0 0.0
  %3386 = vmatprep.subr.mxu0 0.0
  %3387 = vmatpush2.msra.mxu0 0.0
  %3388 = vmatprep.subr.mxu0 0.0
  %3389 = vmatpush2.msra.mxu0 0.0
  %3390 = vmatprep.subr.mxu0 0.0
  %3391 = vmatpush2.msra.mxu0 0.0
  %3392 = vmatprep.subr.mxu0 0.0
  %3393 = vmatpush2.msra.mxu0 0.0
  %3394 = vmatprep.subr.mxu0 0.0
  %3395 = vmatpush2.msra.mxu0 0.0
  %3396 = vmatprep.subr.mxu0 0.0
  %3397 = vmatpush2.msra.mxu0 0.0
  %3398 = vmatprep.subr.mxu0 0.0
  %3399 = vmatpush2.msra.mxu0 0.0
  %3400 = vmatprep.subr.mxu0 0.0
  %3401 = vmatpush2.msra.mxu0 0.0
  %3402 = vmatprep.subr.mxu0 0.0
  %3403 = vmatpush2.msra.mxu0 0.0
  %3404 = vmatprep.subr.mxu0 0.0
  %3405 = vmatpush2.msra.mxu0 0.0
  %3406 = vmatprep.mubr.f32.mxu0 0.0
  %3407 = vmatmul.mubr.f32.gmra.mxu0 %v3340
  %v3408 = vpop.f32.mrf.mxu0
  %v3409 = vadd.f32 %v74, %v3408
  %v3410 = vpop.f32.mrf.mxu0
  %3411 = vdwg.mxu0
  %s3412 = scalar_lea.vmem %s9, 56
  %3413 = vst [vmem:[%s3412] sm:$0xff] %v3409
  %3415 = vst.msk [vmem:[%s10] sm:$0xff] %vm77, %v3239
  %3417 = vrot.lane.b32.xlu0 %v3160, 96
  %v3418 = vpop.permute.xlu0 %3417
  %3420 = vst.msk [vmem:[%s11] sm:$0xff] %vm77, %v3418
  %s3422 = scalar_lea.vmem %s10, 8
  %3423 = vst.msk [vmem:[%s3422] sm:$0xff] %vm77, %v3339
  %3425 = vrot.lane.b32.xlu0 %v3330, 96
  %v3426 = vpop.permute.xlu0 %3425
  %s3428 = scalar_lea.vmem %s11, 8
  %3429 = vst.msk [vmem:[%s3428] sm:$0xff] %vm77, %v3426
  // Predicated region
  $region38: #{lstm_drag_predictor.1} parent=0 // pred_check
    _
  $region39: #{lstm_drag_predictor.1} parent=0 // pred_check_branch
    %3431 = sbr.rel (0) target = $region41
  $region40: #{lstm_drag_predictor.1} parent=0 // pred_region
    _
  $region41: #{lstm_drag_predictor.1} parent=0 // pred_fallthru
    _
  // Predicated region
  $region42: #{lstm_drag_predictor.1} parent=0 // pred_check
    _
  $region43: #{lstm_drag_predictor.1} parent=0 // pred_check_branch
    %3433 = sbr.rel (0) target = $region45
  $region44: #{lstm_drag_predictor.1} parent=0 // pred_region
    _
  $region45: #{lstm_drag_predictor.1} parent=0 // pred_fallthru
    _
  // Predicated region
  $region46: #{lstm_drag_predictor.1} parent=0 // pred_check
    _
  $region47: #{lstm_drag_predictor.1} parent=0 // pred_check_branch
    %3435 = sbr.rel (0) target = $region49
  $region48: #{lstm_drag_predictor.1} parent=0 // pred_region
    _
  $region49: #{lstm_drag_predictor.1} parent=0 // pred_fallthru
    _
  // Predicated region
  $region50: #{lstm_drag_predictor.1} parent=0 // pred_check
    _
  $region51: #{lstm_drag_predictor.1} parent=0 // pred_check_branch
    %3437 = sbr.rel (0) target = $region53
  $region52: #{lstm_drag_predictor.1} parent=0 // pred_region
    _
  $region53: #{lstm_drag_predictor.1} parent=0 // pred_fallthru
    _
  // Predicated region
  $region54: #{lstm_drag_predictor.1} parent=0 // pred_check
    _
  $region55: #{lstm_drag_predictor.1} parent=0 // pred_check_branch
    %3439 = sbr.rel (0) target = $region57
  $region56: #{lstm_drag_predictor.1} parent=0 // pred_region
    _
  $region57: #{lstm_drag_predictor.1} parent=0 // pred_fallthru
    _
  // Predicated region
  $region58: #{lstm_drag_predictor.1} parent=0 // pred_check
    _
  $region59: #{lstm_drag_predictor.1} parent=0 // pred_check_branch
    %3441 = sbr.rel (0) target = $region61
  $region60: #{lstm_drag_predictor.1} parent=0 // pred_region
    _
  $region61: #{lstm_drag_predictor.1} parent=0 // pred_fallthru
    _

</llo_original>
